<compile_context>
chip_gen: v7x
topology: tpu7x:2x2x1
jax: 0.10.0
libtpu: 0.0.40
codegen_flags: <defaults>
</compile_context>

<pallas_src>
import math

import jax
import jax.numpy as jnp
from jax import lax
from jax.experimental import pallas as pl
from jax.experimental.pallas import tpu as pltpu

_LANE = 128        # lane width of a vreg
_BATCH_TILE = 16   # bf16 packed-sublane tile (2 * 8 sublanes)
_MAX_UNROLL = 8    # decode steps fused per grid iteration


def _round_up(x: int, m: int) -> int:
    return (x + m - 1) // m * m


def _lstm_seq_kernel(xw_ref, h0_ref, c0_ref, whh_hbm,        # inputs
                     hs_ref, h_fin_ref, c_fin_ref,           # outputs
                     whh_vmem, h_scr, c_scr, dma_sem):       # scratch
    """One grid step = U decoder tokens.

    xw_ref:    (U, Bp, 4*Hp) f32   precomputed x_t @ W_ih + b (streamed)
    h0_ref:    (Bp, Hp)      f32   initial hidden state (read at blk==0 only)
    c0_ref:    (Bp, Hp)      f32   initial cell state   (read at blk==0 only)
    whh_hbm:   (Hp, 4*Hp)          W_hh^T in HBM (memory_space=ANY)
    hs_ref:    (U, Bp, Hp)   bf16  per-step hidden states (lane-dense output)
    h_fin_ref: (Bp, Hp)      f32   final hidden state (aliased with h0)
    c_fin_ref: (Bp, Hp)      f32   final cell state   (aliased with c0)
    whh_vmem:  (Hp, 4*Hp)          single-buffered resident copy of W_hh
    h_scr:     (Bp, Hp)      bf16  recurrent h carry (matmul dtype)
    c_scr:     (Bp, Hp)      f32   recurrent c carry
    """
    blk = pl.program_id(0)
    nblk = pl.num_programs(0)
    U = xw_ref.shape[0]
    Hp = h_scr.shape[1]

    @pl.when(blk == 0)
    def _init():
        # Fetch W_hh from HBM exactly once; it stays resident (1 buffer) for
        # the whole decode loop.
        cp = pltpu.make_async_copy(whh_hbm, whh_vmem, dma_sem)
        cp.start()
        cp.wait()
        h_scr[...] = h0_ref[...].astype(h_scr.dtype)
        c_scr[...] = c0_ref[...]

    def _sig(z):
        # sigmoid(z) = 0.5 * (1 + tanh(z/2)): one EUP op instead of exp + recip.
        return 0.5 * (1.0 + jnp.tanh(0.5 * z))

    def _step(u, carry):
        h_bf = h_scr[...]          # bf16 (exactly what the MXU consumes)
        c = c_scr[...]             # f32

        # Recurrent half only: (Bp, Hp) @ (Hp, 4Hp); the x-half + bias was
        # precomputed densely outside the kernel and arrives via xw_ref.
        gates = xw_ref[u] + jnp.dot(h_bf, whh_vmem[...],
                                    preferred_element_type=jnp.float32)

        # Gate slabs are Hp-wide (Hp multiple of 128) -> lane-tile aligned.
        # PyTorch LSTMCell gate order: i, f, g, o.
        i_g = _sig(gates[:, 0 * Hp:1 * Hp])
        f_g = _sig(gates[:, 1 * Hp:2 * Hp])
        g_g = jnp.tanh(gates[:, 2 * Hp:3 * Hp])
        o_g = _sig(gates[:, 3 * Hp:4 * Hp])

        c_new = f_g * c + i_g * g_g
        h_new = o_g * jnp.tanh(c_new)
        h_bf_new = h_new.astype(h_scr.dtype)

        h_scr[...] = h_bf_new
        c_scr[...] = c_new
        hs_ref[u] = h_bf_new.astype(hs_ref.dtype)   # lane-dense bf16 store

        # Final carried state written once, in full f32, at the globally last
        # decode step (the aliased h0/c0 buffers are never read after blk 0).
        @pl.when(jnp.logical_and(blk == nblk - 1, u == U - 1))
        def _finalize():
            h_fin_ref[...] = h_new
            c_fin_ref[...] = c_new

        return carry

    lax.fori_loop(0, U, _step, 0, unroll=True)


@jax.jit
def _decode_fused(x_pad, h0, c0, w_ih_cat, w_hh_cat, bias):
    """Precompute x@W_ih densely, then run T decode steps in ONE pallas_call."""
    T, Bp, Ip = x_pad.shape
    Hp = h0.shape[1]
    G4 = w_ih_cat.shape[1]
    out_dtype = w_hh_cat.dtype

    # Non-recurrent half for ALL steps at once: M = T*Bp (near-peak MXU),
    # f32 accumulation, bias folded in.
    xw = (jnp.dot(x_pad.reshape(T * Bp, Ip), w_ih_cat,
                  preferred_element_type=jnp.float32) + bias).reshape(T, Bp, G4)

    U = math.gcd(T, _MAX_UNROLL)          # decode steps per grid iteration
    nblk = T // U

    # Explicit VMEM budget (bytes): resident weight (1 buffer) + double-buffered
    # streamed blocks + state blocks + scratch, with 2x headroom, clamped so the
    # limit is valid on v7x (64 MiB physical VMEM per TensorCore).
    w_itm = jnp.dtype(w_hh_cat.dtype).itemsize
    o_itm = jnp.dtype(out_dtype).itemsize
    needed = (Hp * G4 * w_itm                    # resident W_hh (single copy)
              + U * Bp * G4 * 4 * 2              # xw input blocks (f32, x2)
              + U * Bp * Hp * o_itm * 2          # hs output blocks (x2)
              + Bp * Hp * 4 * 2 * 2              # h0 / c0 input blocks (x2 each)
              + Bp * Hp * 4 * 2                  # h_fin / c_fin output blocks
              + Bp * Hp * (w_itm + 4))           # h / c carry scratch
    vmem_limit = int(min(max(2 * needed, 8 << 20), 64 << 20))

    out_shape = (
        jax.ShapeDtypeStruct((T, Bp, Hp), out_dtype),     # h_t for every step
        jax.ShapeDtypeStruct((Bp, Hp), jnp.float32),      # final h (f32)
        jax.ShapeDtypeStruct((Bp, Hp), jnp.float32),      # final c (f32)
    )
    grid_spec = pltpu.PrefetchScalarGridSpec(
        num_scalar_prefetch=0,
        grid=(nblk,),
        in_specs=[
            pl.BlockSpec((U, Bp, G4), lambda b: (b, 0, 0)),    # xw: streamed
            pl.BlockSpec((Bp, Hp), lambda b: (0, 0)),          # h0: fetched once
            pl.BlockSpec((Bp, Hp), lambda b: (0, 0)),          # c0: fetched once
            pl.BlockSpec(memory_space=pl.ANY),                 # W_hh stays in HBM
        ],
        out_specs=(
            pl.BlockSpec((U, Bp, Hp), lambda b: (b, 0, 0)),    # per-step h
            pl.BlockSpec((Bp, Hp), lambda b: (0, 0)),          # final h
            pl.BlockSpec((Bp, Hp), lambda b: (0, 0)),          # final c
        ),
        scratch_shapes=[
            pltpu.VMEM((Hp, G4), w_hh_cat.dtype),              # resident W_hh
            pltpu.VMEM((Bp, Hp), w_hh_cat.dtype),              # h carry (bf16)
            pltpu.VMEM((Bp, Hp), jnp.float32),                 # c carry (f32)
            pltpu.SemaphoreType.DMA(()),                       # weight-copy sem
        ],
    )
    return pl.pallas_call(
        _lstm_seq_kernel,
        out_shape=out_shape,
        grid_spec=grid_spec,
        compiler_params=pltpu.CompilerParams(
            dimension_semantics=("arbitrary",),                # sequential recurrence
            vmem_limit_bytes=vmem_limit),
        input_output_aliases={1: 1, 2: 2},                     # h0->h_fin, c0->c_fin
    )(xw, h0, c0, w_hh_cat)


class DecoderCellPallas:
    """Concrete LSTM-based DecoderCell; the decode loop runs inside one kernel."""

    def __init__(self, input_dim: int, hidden_dim: int, key,
                 param_dtype=jnp.bfloat16) -> None:
        self.input_dim = input_dim
        self.hidden_dim = hidden_dim
        self.param_dtype = param_dtype
        self.Ip = _round_up(input_dim, _LANE)
        self.Hp = _round_up(hidden_dim, _LANE)

        k1, k2, k3, k4 = jax.random.split(key, 4)
        bound = 1.0 / (hidden_dim ** 0.5)
        # PyTorch LSTMCell parameters (gate order i, f, g, o), kept in f32 for
        # the reference; packed/padded/transposed copies feed the kernel.
        self.w_ih = jax.random.uniform(k1, (4 * hidden_dim, input_dim),
                                       jnp.float32, -bound, bound)
        self.w_hh = jax.random.uniform(k2, (4 * hidden_dim, hidden_dim),
                                       jnp.float32, -bound, bound)
        self.b_ih = jax.random.uniform(k3, (4 * hidden_dim,), jnp.float32, -bound, bound)
        self.b_hh = jax.random.uniform(k4, (4 * hidden_dim,), jnp.float32, -bound, bound)

        I, H, Ip, Hp = input_dim, hidden_dim, self.Ip, self.Hp
        # W_ih^T padded to (Ip, 4*Hp), W_hh^T padded to (Hp, 4*Hp); each gate
        # occupies its own 128-aligned lane slab of width Hp.  Combined bias in
        # f32 (added after the f32-accumulated matmul).
        w_ih_cat = jnp.zeros((Ip, 4 * Hp), jnp.float32)
        w_hh_cat = jnp.zeros((Hp, 4 * Hp), jnp.float32)
        b = jnp.zeros((1, 4 * Hp), jnp.float32)
        for g in range(4):
            w_ih_cat = w_ih_cat.at[0:I, g * Hp:g * Hp + H].set(
                self.w_ih[g * H:(g + 1) * H, :].T)
            w_hh_cat = w_hh_cat.at[0:H, g * Hp:g * Hp + H].set(
                self.w_hh[g * H:(g + 1) * H, :].T)
            b = b.at[0, g * Hp:g * Hp + H].set(
                self.b_ih[g * H:(g + 1) * H] + self.b_hh[g * H:(g + 1) * H])
        self.w_ih_cat = w_ih_cat.astype(param_dtype)   # bf16 MXU input
        self.w_hh_cat = w_hh_cat.astype(param_dtype)   # bf16 MXU input
        self.bias = b                                  # f32

        self.h = None    # padded (Bp, Hp) f32
        self.c = None
        self._batch = None

    # --- DecoderCell API ----------------------------------------------------
    def get_input_dim(self) -> int:
        return self.input_dim

    def get_output_dim(self) -> int:
        return self.hidden_dim

    def reset_cell(self, batch_size: int, device=None) -> None:
        self._batch = batch_size
        bp = _round_up(batch_size, _BATCH_TILE)
        self.h = jnp.zeros((bp, self.Hp), jnp.float32)
        self.c = jnp.zeros((bp, self.Hp), jnp.float32)

    def set_hidden_state(self, hidden_state) -> None:
        b = hidden_state.shape[0]
        self._batch = b
        bp = _round_up(b, _BATCH_TILE)
        h = jnp.zeros((bp, self.Hp), jnp.float32)
        self.h = h.at[:b, :self.hidden_dim].set(hidden_state.astype(jnp.float32))
        if self.c is None or self.c.shape[0] != bp:
            self.c = jnp.zeros((bp, self.Hp), jnp.float32)

    def get_hidden_state(self):
        return self.h[:self._batch, :self.hidden_dim]

    def get_full_states(self):
        H = self.hidden_dim
        return [(self.h[i, :H], self.c[i, :H]) for i in range(self._batch)]

    def set_with_full_states(self, states) -> None:
        b = len(states)
        self._batch = b
        bp = _round_up(b, _BATCH_TILE)
        hs = jnp.stack([s[0] for s in states], axis=0).astype(jnp.float32)
        cs = jnp.stack([s[1] for s in states], axis=0).astype(jnp.float32)
        self.h = jnp.zeros((bp, self.Hp), jnp.float32).at[:b, :self.hidden_dim].set(hs)
        self.c = jnp.zeros((bp, self.Hp), jnp.float32).at[:b, :self.hidden_dim].set(cs)

    # --- stepping -------------------------------------------------------------
    def _pad_inputs(self, x_seq):
        T, b, I = x_seq.shape
        bp = self.h.shape[0]
        xp = jnp.zeros((T, bp, self.Ip), self.param_dtype)
        return xp.at[:, :b, :I].set(x_seq.astype(self.param_dtype))

    def step(self, x) -> None:
        """One decoder step (same semantics as the PyTorch subclass .step())."""
        xp = self._pad_inputs(x[None])                         # (1, Bp, Ip)
        _, self.h, self.c = _decode_fused(xp, self.h, self.c,
                                          self.w_ih_cat, self.w_hh_cat, self.bias)

    def run_steps(self, x_seq):
        """Fused multi-token decode: ONE pallas_call over the whole loop.

        x_seq: (T, B, input_dim) -> returns (T, B, hidden_dim) hidden states.
        """
        xp = self._pad_inputs(x_seq)
        hs, self.h, self.c = _decode_fused(xp, self.h, self.c,
                                           self.w_ih_cat, self.w_hh_cat, self.bias)
        return hs[:, :self._batch, :self.hidden_dim].astype(jnp.float32)


def _reference_step(x, h, c, w_ih, w_hh, b_ih, b_hh, mm_dtype):
    """Plain-JAX PyTorch-LSTMCell reference (same matmul precision as kernel)."""
    gates = (jnp.dot(x.astype(mm_dtype), w_ih.T.astype(mm_dtype),
                     preferred_element_type=jnp.float32)
             + jnp.dot(h.astype(mm_dtype), w_hh.T.astype(mm_dtype),
                       preferred_element_type=jnp.float32)
             + b_ih + b_hh)
    H = h.shape[1]
    i_g = jax.nn.sigmoid(gates[:, 0 * H:1 * H])
    f_g = jax.nn.sigmoid(gates[:, 1 * H:2 * H])
    g_g = jnp.tanh(gates[:, 2 * H:3 * H])
    o_g = jax.nn.sigmoid(gates[:, 3 * H:4 * H])
    c_new = f_g * c + i_g * g_g
    h_new = o_g * jnp.tanh(c_new)
    return h_new, c_new


if __name__ == "__main__":
    key = jax.random.PRNGKey(0)
    k_param, k_x, k_h, k_c, k_tok = jax.random.split(key, 5)

    batch, input_dim, hidden_dim, seq_len = 2, 32, 32, 8
    cell = DecoderCellPallas(input_dim, hidden_dim, k_param, param_dtype=jnp.bfloat16)
    cell.reset_cell(batch)

    # Non-zero initial state so the recurrent matmul and f*c paths are exercised.
    h0 = 0.5 * jax.random.normal(k_h, (batch, hidden_dim), jnp.float32)
    c0 = 0.5 * jax.random.normal(k_c, (batch, hidden_dim), jnp.float32)
    cell.set_with_full_states([(h0[i], c0[i]) for i in range(batch)])

    x_seq = jax.random.normal(k_x, (seq_len, batch, input_dim), jnp.float32)

    # --- fused multi-step decode: one pallas_call for the whole loop ----------
    hs = jax.block_until_ready(cell.run_steps(x_seq))
    h_fin = jax.block_until_ready(cell.get_hidden_state())
    c_fin = cell.c[:batch, :hidden_dim]

    # --- step-by-step plain-JAX reference --------------------------------------
    h_r, c_r = h0, c0
    hs_ref = []
    for t in range(seq_len):
        h_r, c_r = _reference_step(x_seq[t], h_r, c_r, cell.w_ih, cell.w_hh,
                                   cell.b_ih, cell.b_hh, cell.param_dtype)
        hs_ref.append(h_r)
    hs_ref = jnp.stack(hs_ref, axis=0)

    # Per-step stream is emitted in bf16 (slightly looser tolerance); the final
    # carried state stays f32.
    assert jnp.allclose(hs, hs_ref, atol=4e-3, rtol=4e-3)
    assert jnp.allclose(h_fin, h_r, atol=2e-3, rtol=2e-3)
    assert jnp.allclose(c_fin, c_r, atol=2e-3, rtol=2e-3)

    # --- single-token step() API (same kernel, T=1) ----------------------------
    x_tok = jax.random.normal(k_tok, (batch, input_dim), jnp.float32)
    cell.step(x_tok)
    h_s = jax.block_until_ready(cell.get_hidden_state())
    c_s = cell.c[:batch, :hidden_dim]
    h_r2, c_r2 = _reference_step(x_tok, h_r, c_r, cell.w_ih, cell.w_hh,
                                 cell.b_ih, cell.b_hh, cell.param_dtype)
    assert jnp.allclose(h_s, h_r2, atol=2e-3, rtol=2e-3)
    assert jnp.allclose(c_s, c_r2, atol=2e-3, rtol=2e-3)

    print("KERNEL_OK")
</pallas_src>

<mosaic_0001>
module attributes {stable_mosaic.version = 11 : i64} {
  func.func @_lstm_seq_kernel(%arg0: i32, %arg1: memref<8x16x512xf32, #tpu.memory_space<vmem>>, %arg2: memref<16x128xf32, #tpu.memory_space<vmem>>, %arg3: memref<16x128xf32, #tpu.memory_space<vmem>>, %arg4: memref<128x512xbf16, #tpu.memory_space<any>>, %arg5: memref<8x16x128xbf16, #tpu.memory_space<vmem>>, %arg6: memref<16x128xf32, #tpu.memory_space<vmem>>, %arg7: memref<16x128xf32, #tpu.memory_space<vmem>>, %arg8: memref<128x512xbf16, #tpu.memory_space<vmem>>, %arg9: memref<16x128xbf16, #tpu.memory_space<vmem>>, %arg10: memref<16x128xf32, #tpu.memory_space<vmem>>, %arg11: memref<!tpu.dma_semaphore, #tpu.memory_space<semaphore_mem>>) attributes {dimension_semantics = [#tpu.dimension_semantics<arbitrary>], iteration_bounds = array<i64: 1>, scalar_prefetch = 0 : i64, scratch_operands = 4 : i64, tpu.core_type = #tpu.core_type<tc>, window_params = [{transform_indices = @transform_0, window_bounds = array<i64: 8, 16, 512>}, {pipeline_mode = #tpu.pipeline_mode<synchronous>, transform_indices = @transform_1, window_bounds = array<i64: 16, 128>}, {pipeline_mode = #tpu.pipeline_mode<synchronous>, transform_indices = @transform_2, window_bounds = array<i64: 16, 128>}, {}, {transform_indices = @transform_4, window_bounds = array<i64: 8, 16, 128>}, {pipeline_mode = #tpu.pipeline_mode<synchronous>, transform_indices = @transform_5, window_bounds = array<i64: 16, 128>}, {pipeline_mode = #tpu.pipeline_mode<synchronous>, transform_indices = @transform_6, window_bounds = array<i64: 16, 128>}]} {
    %c0_i32 = arith.constant 0 : i32
    %0 = arith.cmpi eq, %arg0, %c0_i32 : i32
    %1 = arith.extui %0 : i1 to i32
    %c0_i32_0 = arith.constant 0 : i32
    %2 = arith.cmpi ne, %1, %c0_i32_0 : i32
    scf.if %2 {
      tpu.enqueue_dma source(%arg4 : memref<128x512xbf16, #tpu.memory_space<any>>) target(%arg8 : memref<128x512xbf16, #tpu.memory_space<vmem>>) target_semaphore(%arg11 : memref<!tpu.dma_semaphore, #tpu.memory_space<semaphore_mem>>)
      tpu.wait_dma2 semaphore(%arg11 : memref<!tpu.dma_semaphore, #tpu.memory_space<semaphore_mem>>) src(%arg4 : memref<128x512xbf16, #tpu.memory_space<any>>) dst(%arg8 : memref<128x512xbf16, #tpu.memory_space<vmem>>)
      %c0_216 = arith.constant 0 : index
      %c0_217 = arith.constant 0 : index
      %411 = vector.load %arg2[%c0_216, %c0_217] : memref<16x128xf32, #tpu.memory_space<vmem>>, vector<16x128xf32>
      %412 = arith.truncf %411 : vector<16x128xf32> to vector<16x128xbf16>
      %c0_218 = arith.constant 0 : index
      %c0_219 = arith.constant 0 : index
      %413 = vector.load %arg9[%c0_218, %c0_219] : memref<16x128xbf16, #tpu.memory_space<vmem>>, vector<16x128xbf16>
      tpu.vector_store %arg9[%c0_218, %c0_219], %412 {strides = array<i32>} : memref<16x128xbf16, #tpu.memory_space<vmem>>, vector<16x128xbf16>,
      %c0_220 = arith.constant 0 : index
      %c0_221 = arith.constant 0 : index
      %414 = vector.load %arg3[%c0_220, %c0_221] : memref<16x128xf32, #tpu.memory_space<vmem>>, vector<16x128xf32>
      %c0_222 = arith.constant 0 : index
      %c0_223 = arith.constant 0 : index
      %415 = vector.load %arg10[%c0_222, %c0_223] : memref<16x128xf32, #tpu.memory_space<vmem>>, vector<16x128xf32>
      tpu.vector_store %arg10[%c0_222, %c0_223], %414 {strides = array<i32>} : memref<16x128xf32, #tpu.memory_space<vmem>>, vector<16x128xf32>,
    } else {
    }
    %c0_i32_1 = arith.constant 0 : i32
    %c0 = arith.constant 0 : index
    %c0_2 = arith.constant 0 : index
    %3 = vector.load %arg9[%c0, %c0_2] : memref<16x128xbf16, #tpu.memory_space<vmem>>, vector<16x128xbf16>
    %c0_3 = arith.constant 0 : index
    %c0_4 = arith.constant 0 : index
    %4 = vector.load %arg10[%c0_3, %c0_4] : memref<16x128xf32, #tpu.memory_space<vmem>>, vector<16x128xf32>
    %5 = arith.index_cast %c0_i32_1 : i32 to index
    %c0_5 = arith.constant 0 : index
    %c0_6 = arith.constant 0 : index
    %6 = vector.load %arg1[%5, %c0_5, %c0_6] : memref<8x16x512xf32, #tpu.memory_space<vmem>>, vector<1x16x512xf32>
    %7 = vector.shape_cast %6 : vector<1x16x512xf32> to vector<16x512xf32>
    %c0_7 = arith.constant 0 : index
    %c0_8 = arith.constant 0 : index
    %8 = vector.load %arg8[%c0_7, %c0_8] : memref<128x512xbf16, #tpu.memory_space<vmem>>, vector<128x512xbf16>
    %cst = arith.constant dense<0.000000e+00> : vector<16x512xf32>
    %9 = tpu.matmul %3, %8, %cst {dimension_numbers = #tpu.dot_dimension_numbers<[1], [0], [0], [1], [0, 0, 1, 1], [], []>} : vector<16x128xbf16>, vector<128x512xbf16>, vector<16x512xf32> -> vector<16x512xf32>
    %10 = arith.addf %7, %9 : vector<16x512xf32>
    %11 = vector.extract_strided_slice %10 {offsets = [0, 0], sizes = [16, 128], strides = [1, 1]} : vector<16x512xf32> to vector<16x128xf32>
    %cst_9 = arith.constant 5.000000e-01 : f32
    %12 = vector.broadcast %cst_9 : f32 to vector<16x128xf32>
    %13 = arith.mulf %12, %11 : vector<16x128xf32>
    %14 = math.tanh %13 : vector<16x128xf32>
    %cst_10 = arith.constant 1.000000e+00 : f32
    %15 = vector.broadcast %cst_10 : f32 to vector<16x128xf32>
    %16 = arith.addf %15, %14 : vector<16x128xf32>
    %cst_11 = arith.constant 5.000000e-01 : f32
    %17 = vector.broadcast %cst_11 : f32 to vector<16x128xf32>
    %18 = arith.mulf %17, %16 : vector<16x128xf32>
    %19 = vector.extract_strided_slice %10 {offsets = [0, 128], sizes = [16, 128], strides = [1, 1]} : vector<16x512xf32> to vector<16x128xf32>
    %cst_12 = arith.constant 5.000000e-01 : f32
    %20 = vector.broadcast %cst_12 : f32 to vector<16x128xf32>
    %21 = arith.mulf %20, %19 : vector<16x128xf32>
    %22 = math.tanh %21 : vector<16x128xf32>
    %cst_13 = arith.constant 1.000000e+00 : f32
    %23 = vector.broadcast %cst_13 : f32 to vector<16x128xf32>
    %24 = arith.addf %23, %22 : vector<16x128xf32>
    %cst_14 = arith.constant 5.000000e-01 : f32
    %25 = vector.broadcast %cst_14 : f32 to vector<16x128xf32>
    %26 = arith.mulf %25, %24 : vector<16x128xf32>
    %27 = vector.extract_strided_slice %10 {offsets = [0, 256], sizes = [16, 128], strides = [1, 1]} : vector<16x512xf32> to vector<16x128xf32>
    %28 = math.tanh %27 : vector<16x128xf32>
    %29 = vector.extract_strided_slice %10 {offsets = [0, 384], sizes = [16, 128], strides = [1, 1]} : vector<16x512xf32> to vector<16x128xf32>
    %cst_15 = arith.constant 5.000000e-01 : f32
    %30 = vector.broadcast %cst_15 : f32 to vector<16x128xf32>
    %31 = arith.mulf %30, %29 : vector<16x128xf32>
    %32 = math.tanh %31 : vector<16x128xf32>
    %cst_16 = arith.constant 1.000000e+00 : f32
    %33 = vector.broadcast %cst_16 : f32 to vector<16x128xf32>
    %34 = arith.addf %33, %32 : vector<16x128xf32>
    %cst_17 = arith.constant 5.000000e-01 : f32
    %35 = vector.broadcast %cst_17 : f32 to vector<16x128xf32>
    %36 = arith.mulf %35, %34 : vector<16x128xf32>
    %37 = arith.mulf %26, %4 : vector<16x128xf32>
    %38 = arith.mulf %18, %28 : vector<16x128xf32>
    %39 = arith.addf %37, %38 : vector<16x128xf32>
    %40 = math.tanh %39 : vector<16x128xf32>
    %41 = arith.mulf %36, %40 : vector<16x128xf32>
    %42 = arith.truncf %41 : vector<16x128xf32> to vector<16x128xbf16>
    %c0_18 = arith.constant 0 : index
    %c0_19 = arith.constant 0 : index
    %43 = vector.load %arg9[%c0_18, %c0_19] : memref<16x128xbf16, #tpu.memory_space<vmem>>, vector<16x128xbf16>
    tpu.vector_store %arg9[%c0_18, %c0_19], %42 {strides = array<i32>} : memref<16x128xbf16, #tpu.memory_space<vmem>>, vector<16x128xbf16>,
    %c0_20 = arith.constant 0 : index
    %c0_21 = arith.constant 0 : index
    %44 = vector.load %arg10[%c0_20, %c0_21] : memref<16x128xf32, #tpu.memory_space<vmem>>, vector<16x128xf32>
    tpu.vector_store %arg10[%c0_20, %c0_21], %39 {strides = array<i32>} : memref<16x128xf32, #tpu.memory_space<vmem>>, vector<16x128xf32>,
    %45 = arith.index_cast %c0_i32_1 : i32 to index
    %c0_22 = arith.constant 0 : index
    %c0_23 = arith.constant 0 : index
    %46 = vector.load %arg5[%45, %c0_22, %c0_23] : memref<8x16x128xbf16, #tpu.memory_space<vmem>>, vector<1x16x128xbf16>
    %47 = vector.shape_cast %46 : vector<1x16x128xbf16> to vector<16x128xbf16>
    %48 = vector.shape_cast %42 : vector<16x128xbf16> to vector<1x16x128xbf16>
    tpu.vector_store %arg5[%45, %c0_22, %c0_23], %48 {strides = array<i32>} : memref<8x16x128xbf16, #tpu.memory_space<vmem>>, vector<1x16x128xbf16>,
    %c0_i32_24 = arith.constant 0 : i32
    %49 = arith.cmpi eq, %arg0, %c0_i32_24 : i32
    %c7_i32 = arith.constant 7 : i32
    %50 = arith.cmpi eq, %c0_i32_1, %c7_i32 : i32
    %51 = arith.andi %49, %50 : i1
    %52 = arith.extui %51 : i1 to i32
    %c0_i32_25 = arith.constant 0 : i32
    %53 = arith.cmpi ne, %52, %c0_i32_25 : i32
    scf.if %53 {
      %c0_216 = arith.constant 0 : index
      %c0_217 = arith.constant 0 : index
      %411 = vector.load %arg6[%c0_216, %c0_217] : memref<16x128xf32, #tpu.memory_space<vmem>>, vector<16x128xf32>
      tpu.vector_store %arg6[%c0_216, %c0_217], %41 {strides = array<i32>} : memref<16x128xf32, #tpu.memory_space<vmem>>, vector<16x128xf32>,
      %c0_218 = arith.constant 0 : index
      %c0_219 = arith.constant 0 : index
      %412 = vector.load %arg7[%c0_218, %c0_219] : memref<16x128xf32, #tpu.memory_space<vmem>>, vector<16x128xf32>
      tpu.vector_store %arg7[%c0_218, %c0_219], %39 {strides = array<i32>} : memref<16x128xf32, #tpu.memory_space<vmem>>, vector<16x128xf32>,
    } else {
    }
    %c1_i32 = arith.constant 1 : i32
    %c0_26 = arith.constant 0 : index
    %c0_27 = arith.constant 0 : index
    %54 = vector.load %arg9[%c0_26, %c0_27] : memref<16x128xbf16, #tpu.memory_space<vmem>>, vector<16x128xbf16>
    %c0_28 = arith.constant 0 : index
    %c0_29 = arith.constant 0 : index
    %55 = vector.load %arg10[%c0_28, %c0_29] : memref<16x128xf32, #tpu.memory_space<vmem>>, vector<16x128xf32>
    %56 = arith.index_cast %c1_i32 : i32 to index
    %c0_30 = arith.constant 0 : index
    %c0_31 = arith.constant 0 : index
    %57 = vector.load %arg1[%56, %c0_30, %c0_31] : memref<8x16x512xf32, #tpu.memory_space<vmem>>, vector<1x16x512xf32>
    %58 = vector.shape_cast %57 : vector<1x16x512xf32> to vector<16x512xf32>
    %c0_32 = arith.constant 0 : index
    %c0_33 = arith.constant 0 : index
    %59 = vector.load %arg8[%c0_32, %c0_33] : memref<128x512xbf16, #tpu.memory_space<vmem>>, vector<128x512xbf16>
    %cst_34 = arith.constant dense<0.000000e+00> : vector<16x512xf32>
    %60 = tpu.matmul %54, %59, %cst_34 {dimension_numbers = #tpu.dot_dimension_numbers<[1], [0], [0], [1], [0, 0, 1, 1], [], []>} : vector<16x128xbf16>, vector<128x512xbf16>, vector<16x512xf32> -> vector<16x512xf32>
    %61 = arith.addf %58, %60 : vector<16x512xf32>
    %62 = vector.extract_strided_slice %61 {offsets = [0, 0], sizes = [16, 128], strides = [1, 1]} : vector<16x512xf32> to vector<16x128xf32>
    %cst_35 = arith.constant 5.000000e-01 : f32
    %63 = vector.broadcast %cst_35 : f32 to vector<16x128xf32>
    %64 = arith.mulf %63, %62 : vector<16x128xf32>
    %65 = math.tanh %64 : vector<16x128xf32>
    %cst_36 = arith.constant 1.000000e+00 : f32
    %66 = vector.broadcast %cst_36 : f32 to vector<16x128xf32>
    %67 = arith.addf %66, %65 : vector<16x128xf32>
    %cst_37 = arith.constant 5.000000e-01 : f32
    %68 = vector.broadcast %cst_37 : f32 to vector<16x128xf32>
    %69 = arith.mulf %68, %67 : vector<16x128xf32>
    %70 = vector.extract_strided_slice %61 {offsets = [0, 128], sizes = [16, 128], strides = [1, 1]} : vector<16x512xf32> to vector<16x128xf32>
    %cst_38 = arith.constant 5.000000e-01 : f32
    %71 = vector.broadcast %cst_38 : f32 to vector<16x128xf32>
    %72 = arith.mulf %71, %70 : vector<16x128xf32>
    %73 = math.tanh %72 : vector<16x128xf32>
    %cst_39 = arith.constant 1.000000e+00 : f32
    %74 = vector.broadcast %cst_39 : f32 to vector<16x128xf32>
    %75 = arith.addf %74, %73 : vector<16x128xf32>
    %cst_40 = arith.constant 5.000000e-01 : f32
    %76 = vector.broadcast %cst_40 : f32 to vector<16x128xf32>
    %77 = arith.mulf %76, %75 : vector<16x128xf32>
    %78 = vector.extract_strided_slice %61 {offsets = [0, 256], sizes = [16, 128], strides = [1, 1]} : vector<16x512xf32> to vector<16x128xf32>
    %79 = math.tanh %78 : vector<16x128xf32>
    %80 = vector.extract_strided_slice %61 {offsets = [0, 384], sizes = [16, 128], strides = [1, 1]} : vector<16x512xf32> to vector<16x128xf32>
    %cst_41 = arith.constant 5.000000e-01 : f32
    %81 = vector.broadcast %cst_41 : f32 to vector<16x128xf32>
    %82 = arith.mulf %81, %80 : vector<16x128xf32>
    %83 = math.tanh %82 : vector<16x128xf32>
    %cst_42 = arith.constant 1.000000e+00 : f32
    %84 = vector.broadcast %cst_42 : f32 to vector<16x128xf32>
    %85 = arith.addf %84, %83 : vector<16x128xf32>
    %cst_43 = arith.constant 5.000000e-01 : f32
    %86 = vector.broadcast %cst_43 : f32 to vector<16x128xf32>
    %87 = arith.mulf %86, %85 : vector<16x128xf32>
    %88 = arith.mulf %77, %55 : vector<16x128xf32>
    %89 = arith.mulf %69, %79 : vector<16x128xf32>
    %90 = arith.addf %88, %89 : vector<16x128xf32>
    %91 = math.tanh %90 : vector<16x128xf32>
    %92 = arith.mulf %87, %91 : vector<16x128xf32>
    %93 = arith.truncf %92 : vector<16x128xf32> to vector<16x128xbf16>
    %c0_44 = arith.constant 0 : index
    %c0_45 = arith.constant 0 : index
    %94 = vector.load %arg9[%c0_44, %c0_45] : memref<16x128xbf16, #tpu.memory_space<vmem>>, vector<16x128xbf16>
    tpu.vector_store %arg9[%c0_44, %c0_45], %93 {strides = array<i32>} : memref<16x128xbf16, #tpu.memory_space<vmem>>, vector<16x128xbf16>,
    %c0_46 = arith.constant 0 : index
    %c0_47 = arith.constant 0 : index
    %95 = vector.load %arg10[%c0_46, %c0_47] : memref<16x128xf32, #tpu.memory_space<vmem>>, vector<16x128xf32>
    tpu.vector_store %arg10[%c0_46, %c0_47], %90 {strides = array<i32>} : memref<16x128xf32, #tpu.memory_space<vmem>>, vector<16x128xf32>,
    %96 = arith.index_cast %c1_i32 : i32 to index
    %c0_48 = arith.constant 0 : index
    %c0_49 = arith.constant 0 : index
    %97 = vector.load %arg5[%96, %c0_48, %c0_49] : memref<8x16x128xbf16, #tpu.memory_space<vmem>>, vector<1x16x128xbf16>
    %98 = vector.shape_cast %97 : vector<1x16x128xbf16> to vector<16x128xbf16>
    %99 = vector.shape_cast %93 : vector<16x128xbf16> to vector<1x16x128xbf16>
    tpu.vector_store %arg5[%96, %c0_48, %c0_49], %99 {strides = array<i32>} : memref<8x16x128xbf16, #tpu.memory_space<vmem>>, vector<1x16x128xbf16>,
    %c0_i32_50 = arith.constant 0 : i32
    %100 = arith.cmpi eq, %arg0, %c0_i32_50 : i32
    %c7_i32_51 = arith.constant 7 : i32
    %101 = arith.cmpi eq, %c1_i32, %c7_i32_51 : i32
    %102 = arith.andi %100, %101 : i1
    %103 = arith.extui %102 : i1 to i32
    %c0_i32_52 = arith.constant 0 : i32
    %104 = arith.cmpi ne, %103, %c0_i32_52 : i32
    scf.if %104 {
      %c0_216 = arith.constant 0 : index
      %c0_217 = arith.constant 0 : index
      %411 = vector.load %arg6[%c0_216, %c0_217] : memref<16x128xf32, #tpu.memory_space<vmem>>, vector<16x128xf32>
      tpu.vector_store %arg6[%c0_216, %c0_217], %92 {strides = array<i32>} : memref<16x128xf32, #tpu.memory_space<vmem>>, vector<16x128xf32>,
      %c0_218 = arith.constant 0 : index
      %c0_219 = arith.constant 0 : index
      %412 = vector.load %arg7[%c0_218, %c0_219] : memref<16x128xf32, #tpu.memory_space<vmem>>, vector<16x128xf32>
      tpu.vector_store %arg7[%c0_218, %c0_219], %90 {strides = array<i32>} : memref<16x128xf32, #tpu.memory_space<vmem>>, vector<16x128xf32>,
    } else {
    }
    %c2_i32 = arith.constant 2 : i32
    %c0_53 = arith.constant 0 : index
    %c0_54 = arith.constant 0 : index
    %105 = vector.load %arg9[%c0_53, %c0_54] : memref<16x128xbf16, #tpu.memory_space<vmem>>, vector<16x128xbf16>
    %c0_55 = arith.constant 0 : index
    %c0_56 = arith.constant 0 : index
    %106 = vector.load %arg10[%c0_55, %c0_56] : memref<16x128xf32, #tpu.memory_space<vmem>>, vector<16x128xf32>
    %107 = arith.index_cast %c2_i32 : i32 to index
    %c0_57 = arith.constant 0 : index
    %c0_58 = arith.constant 0 : index
    %108 = vector.load %arg1[%107, %c0_57, %c0_58] : memref<8x16x512xf32, #tpu.memory_space<vmem>>, vector<1x16x512xf32>
    %109 = vector.shape_cast %108 : vector<1x16x512xf32> to vector<16x512xf32>
    %c0_59 = arith.constant 0 : index
    %c0_60 = arith.constant 0 : index
    %110 = vector.load %arg8[%c0_59, %c0_60] : memref<128x512xbf16, #tpu.memory_space<vmem>>, vector<128x512xbf16>
    %cst_61 = arith.constant dense<0.000000e+00> : vector<16x512xf32>
    %111 = tpu.matmul %105, %110, %cst_61 {dimension_numbers = #tpu.dot_dimension_numbers<[1], [0], [0], [1], [0, 0, 1, 1], [], []>} : vector<16x128xbf16>, vector<128x512xbf16>, vector<16x512xf32> -> vector<16x512xf32>
    %112 = arith.addf %109, %111 : vector<16x512xf32>
    %113 = vector.extract_strided_slice %112 {offsets = [0, 0], sizes = [16, 128], strides = [1, 1]} : vector<16x512xf32> to vector<16x128xf32>
    %cst_62 = arith.constant 5.000000e-01 : f32
    %114 = vector.broadcast %cst_62 : f32 to vector<16x128xf32>
    %115 = arith.mulf %114, %113 : vector<16x128xf32>
    %116 = math.tanh %115 : vector<16x128xf32>
    %cst_63 = arith.constant 1.000000e+00 : f32
    %117 = vector.broadcast %cst_63 : f32 to vector<16x128xf32>
    %118 = arith.addf %117, %116 : vector<16x128xf32>
    %cst_64 = arith.constant 5.000000e-01 : f32
    %119 = vector.broadcast %cst_64 : f32 to vector<16x128xf32>
    %120 = arith.mulf %119, %118 : vector<16x128xf32>
    %121 = vector.extract_strided_slice %112 {offsets = [0, 128], sizes = [16, 128], strides = [1, 1]} : vector<16x512xf32> to vector<16x128xf32>
    %cst_65 = arith.constant 5.000000e-01 : f32
    %122 = vector.broadcast %cst_65 : f32 to vector<16x128xf32>
    %123 = arith.mulf %122, %121 : vector<16x128xf32>
    %124 = math.tanh %123 : vector<16x128xf32>
    %cst_66 = arith.constant 1.000000e+00 : f32
    %125 = vector.broadcast %cst_66 : f32 to vector<16x128xf32>
    %126 = arith.addf %125, %124 : vector<16x128xf32>
    %cst_67 = arith.constant 5.000000e-01 : f32
    %127 = vector.broadcast %cst_67 : f32 to vector<16x128xf32>
    %128 = arith.mulf %127, %126 : vector<16x128xf32>
    %129 = vector.extract_strided_slice %112 {offsets = [0, 256], sizes = [16, 128], strides = [1, 1]} : vector<16x512xf32> to vector<16x128xf32>
    %130 = math.tanh %129 : vector<16x128xf32>
    %131 = vector.extract_strided_slice %112 {offsets = [0, 384], sizes = [16, 128], strides = [1, 1]} : vector<16x512xf32> to vector<16x128xf32>
    %cst_68 = arith.constant 5.000000e-01 : f32
    %132 = vector.broadcast %cst_68 : f32 to vector<16x128xf32>
    %133 = arith.mulf %132, %131 : vector<16x128xf32>
    %134 = math.tanh %133 : vector<16x128xf32>
    %cst_69 = arith.constant 1.000000e+00 : f32
    %135 = vector.broadcast %cst_69 : f32 to vector<16x128xf32>
    %136 = arith.addf %135, %134 : vector<16x128xf32>
    %cst_70 = arith.constant 5.000000e-01 : f32
    %137 = vector.broadcast %cst_70 : f32 to vector<16x128xf32>
    %138 = arith.mulf %137, %136 : vector<16x128xf32>
    %139 = arith.mulf %128, %106 : vector<16x128xf32>
    %140 = arith.mulf %120, %130 : vector<16x128xf32>
    %141 = arith.addf %139, %140 : vector<16x128xf32>
    %142 = math.tanh %141 : vector<16x128xf32>
    %143 = arith.mulf %138, %142 : vector<16x128xf32>
    %144 = arith.truncf %143 : vector<16x128xf32> to vector<16x128xbf16>
    %c0_71 = arith.constant 0 : index
    %c0_72 = arith.constant 0 : index
    %145 = vector.load %arg9[%c0_71, %c0_72] : memref<16x128xbf16, #tpu.memory_space<vmem>>, vector<16x128xbf16>
    tpu.vector_store %arg9[%c0_71, %c0_72], %144 {strides = array<i32>} : memref<16x128xbf16, #tpu.memory_space<vmem>>, vector<16x128xbf16>,
    %c0_73 = arith.constant 0 : index
    %c0_74 = arith.constant 0 : index
    %146 = vector.load %arg10[%c0_73, %c0_74] : memref<16x128xf32, #tpu.memory_space<vmem>>, vector<16x128xf32>
    tpu.vector_store %arg10[%c0_73, %c0_74], %141 {strides = array<i32>} : memref<16x128xf32, #tpu.memory_space<vmem>>, vector<16x128xf32>,
    %147 = arith.index_cast %c2_i32 : i32 to index
    %c0_75 = arith.constant 0 : index
    %c0_76 = arith.constant 0 : index
    %148 = vector.load %arg5[%147, %c0_75, %c0_76] : memref<8x16x128xbf16, #tpu.memory_space<vmem>>, vector<1x16x128xbf16>
    %149 = vector.shape_cast %148 : vector<1x16x128xbf16> to vector<16x128xbf16>
    %150 = vector.shape_cast %144 : vector<16x128xbf16> to vector<1x16x128xbf16>
    tpu.vector_store %arg5[%147, %c0_75, %c0_76], %150 {strides = array<i32>} : memref<8x16x128xbf16, #tpu.memory_space<vmem>>, vector<1x16x128xbf16>,
    %c0_i32_77 = arith.constant 0 : i32
    %151 = arith.cmpi eq, %arg0, %c0_i32_77 : i32
    %c7_i32_78 = arith.constant 7 : i32
    %152 = arith.cmpi eq, %c2_i32, %c7_i32_78 : i32
    %153 = arith.andi %151, %152 : i1
    %154 = arith.extui %153 : i1 to i32
    %c0_i32_79 = arith.constant 0 : i32
    %155 = arith.cmpi ne, %154, %c0_i32_79 : i32
    scf.if %155 {
      %c0_216 = arith.constant 0 : index
      %c0_217 = arith.constant 0 : index
      %411 = vector.load %arg6[%c0_216, %c0_217] : memref<16x128xf32, #tpu.memory_space<vmem>>, vector<16x128xf32>
      tpu.vector_store %arg6[%c0_216, %c0_217], %143 {strides = array<i32>} : memref<16x128xf32, #tpu.memory_space<vmem>>, vector<16x128xf32>,
      %c0_218 = arith.constant 0 : index
      %c0_219 = arith.constant 0 : index
      %412 = vector.load %arg7[%c0_218, %c0_219] : memref<16x128xf32, #tpu.memory_space<vmem>>, vector<16x128xf32>
      tpu.vector_store %arg7[%c0_218, %c0_219], %141 {strides = array<i32>} : memref<16x128xf32, #tpu.memory_space<vmem>>, vector<16x128xf32>,
    } else {
    }
    %c3_i32 = arith.constant 3 : i32
    %c0_80 = arith.constant 0 : index
    %c0_81 = arith.constant 0 : index
    %156 = vector.load %arg9[%c0_80, %c0_81] : memref<16x128xbf16, #tpu.memory_space<vmem>>, vector<16x128xbf16>
    %c0_82 = arith.constant 0 : index
    %c0_83 = arith.constant 0 : index
    %157 = vector.load %arg10[%c0_82, %c0_83] : memref<16x128xf32, #tpu.memory_space<vmem>>, vector<16x128xf32>
    %158 = arith.index_cast %c3_i32 : i32 to index
    %c0_84 = arith.constant 0 : index
    %c0_85 = arith.constant 0 : index
    %159 = vector.load %arg1[%158, %c0_84, %c0_85] : memref<8x16x512xf32, #tpu.memory_space<vmem>>, vector<1x16x512xf32>
    %160 = vector.shape_cast %159 : vector<1x16x512xf32> to vector<16x512xf32>
    %c0_86 = arith.constant 0 : index
    %c0_87 = arith.constant 0 : index
    %161 = vector.load %arg8[%c0_86, %c0_87] : memref<128x512xbf16, #tpu.memory_space<vmem>>, vector<128x512xbf16>
    %cst_88 = arith.constant dense<0.000000e+00> : vector<16x512xf32>
    %162 = tpu.matmul %156, %161, %cst_88 {dimension_numbers = #tpu.dot_dimension_numbers<[1], [0], [0], [1], [0, 0, 1, 1], [], []>} : vector<16x128xbf16>, vector<128x512xbf16>, vector<16x512xf32> -> vector<16x512xf32>
    %163 = arith.addf %160, %162 : vector<16x512xf32>
    %164 = vector.extract_strided_slice %163 {offsets = [0, 0], sizes = [16, 128], strides = [1, 1]} : vector<16x512xf32> to vector<16x128xf32>
    %cst_89 = arith.constant 5.000000e-01 : f32
    %165 = vector.broadcast %cst_89 : f32 to vector<16x128xf32>
    %166 = arith.mulf %165, %164 : vector<16x128xf32>
    %167 = math.tanh %166 : vector<16x128xf32>
    %cst_90 = arith.constant 1.000000e+00 : f32
    %168 = vector.broadcast %cst_90 : f32 to vector<16x128xf32>
    %169 = arith.addf %168, %167 : vector<16x128xf32>
    %cst_91 = arith.constant 5.000000e-01 : f32
    %170 = vector.broadcast %cst_91 : f32 to vector<16x128xf32>
    %171 = arith.mulf %170, %169 : vector<16x128xf32>
    %172 = vector.extract_strided_slice %163 {offsets = [0, 128], sizes = [16, 128], strides = [1, 1]} : vector<16x512xf32> to vector<16x128xf32>
    %cst_92 = arith.constant 5.000000e-01 : f32
    %173 = vector.broadcast %cst_92 : f32 to vector<16x128xf32>
    %174 = arith.mulf %173, %172 : vector<16x128xf32>
    %175 = math.tanh %174 : vector<16x128xf32>
    %cst_93 = arith.constant 1.000000e+00 : f32
    %176 = vector.broadcast %cst_93 : f32 to vector<16x128xf32>
    %177 = arith.addf %176, %175 : vector<16x128xf32>
    %cst_94 = arith.constant 5.000000e-01 : f32
    %178 = vector.broadcast %cst_94 : f32 to vector<16x128xf32>
    %179 = arith.mulf %178, %177 : vector<16x128xf32>
    %180 = vector.extract_strided_slice %163 {offsets = [0, 256], sizes = [16, 128], strides = [1, 1]} : vector<16x512xf32> to vector<16x128xf32>
    %181 = math.tanh %180 : vector<16x128xf32>
    %182 = vector.extract_strided_slice %163 {offsets = [0, 384], sizes = [16, 128], strides = [1, 1]} : vector<16x512xf32> to vector<16x128xf32>
    %cst_95 = arith.constant 5.000000e-01 : f32
    %183 = vector.broadcast %cst_95 : f32 to vector<16x128xf32>
    %184 = arith.mulf %183, %182 : vector<16x128xf32>
    %185 = math.tanh %184 : vector<16x128xf32>
    %cst_96 = arith.constant 1.000000e+00 : f32
    %186 = vector.broadcast %cst_96 : f32 to vector<16x128xf32>
    %187 = arith.addf %186, %185 : vector<16x128xf32>
    %cst_97 = arith.constant 5.000000e-01 : f32
    %188 = vector.broadcast %cst_97 : f32 to vector<16x128xf32>
    %189 = arith.mulf %188, %187 : vector<16x128xf32>
    %190 = arith.mulf %179, %157 : vector<16x128xf32>
    %191 = arith.mulf %171, %181 : vector<16x128xf32>
    %192 = arith.addf %190, %191 : vector<16x128xf32>
    %193 = math.tanh %192 : vector<16x128xf32>
    %194 = arith.mulf %189, %193 : vector<16x128xf32>
    %195 = arith.truncf %194 : vector<16x128xf32> to vector<16x128xbf16>
    %c0_98 = arith.constant 0 : index
    %c0_99 = arith.constant 0 : index
    %196 = vector.load %arg9[%c0_98, %c0_99] : memref<16x128xbf16, #tpu.memory_space<vmem>>, vector<16x128xbf16>
    tpu.vector_store %arg9[%c0_98, %c0_99], %195 {strides = array<i32>} : memref<16x128xbf16, #tpu.memory_space<vmem>>, vector<16x128xbf16>,
    %c0_100 = arith.constant 0 : index
    %c0_101 = arith.constant 0 : index
    %197 = vector.load %arg10[%c0_100, %c0_101] : memref<16x128xf32, #tpu.memory_space<vmem>>, vector<16x128xf32>
    tpu.vector_store %arg10[%c0_100, %c0_101], %192 {strides = array<i32>} : memref<16x128xf32, #tpu.memory_space<vmem>>, vector<16x128xf32>,
    %198 = arith.index_cast %c3_i32 : i32 to index
    %c0_102 = arith.constant 0 : index
    %c0_103 = arith.constant 0 : index
    %199 = vector.load %arg5[%198, %c0_102, %c0_103] : memref<8x16x128xbf16, #tpu.memory_space<vmem>>, vector<1x16x128xbf16>
    %200 = vector.shape_cast %199 : vector<1x16x128xbf16> to vector<16x128xbf16>
    %201 = vector.shape_cast %195 : vector<16x128xbf16> to vector<1x16x128xbf16>
    tpu.vector_store %arg5[%198, %c0_102, %c0_103], %201 {strides = array<i32>} : memref<8x16x128xbf16, #tpu.memory_space<vmem>>, vector<1x16x128xbf16>,
    %c0_i32_104 = arith.constant 0 : i32
    %202 = arith.cmpi eq, %arg0, %c0_i32_104 : i32
    %c7_i32_105 = arith.constant 7 : i32
    %203 = arith.cmpi eq, %c3_i32, %c7_i32_105 : i32
    %204 = arith.andi %202, %203 : i1
    %205 = arith.extui %204 : i1 to i32
    %c0_i32_106 = arith.constant 0 : i32
    %206 = arith.cmpi ne, %205, %c0_i32_106 : i32
    scf.if %206 {
      %c0_216 = arith.constant 0 : index
      %c0_217 = arith.constant 0 : index
      %411 = vector.load %arg6[%c0_216, %c0_217] : memref<16x128xf32, #tpu.memory_space<vmem>>, vector<16x128xf32>
      tpu.vector_store %arg6[%c0_216, %c0_217], %194 {strides = array<i32>} : memref<16x128xf32, #tpu.memory_space<vmem>>, vector<16x128xf32>,
      %c0_218 = arith.constant 0 : index
      %c0_219 = arith.constant 0 : index
      %412 = vector.load %arg7[%c0_218, %c0_219] : memref<16x128xf32, #tpu.memory_space<vmem>>, vector<16x128xf32>
      tpu.vector_store %arg7[%c0_218, %c0_219], %192 {strides = array<i32>} : memref<16x128xf32, #tpu.memory_space<vmem>>, vector<16x128xf32>,
    } else {
    }
    %c4_i32 = arith.constant 4 : i32
    %c0_107 = arith.constant 0 : index
    %c0_108 = arith.constant 0 : index
    %207 = vector.load %arg9[%c0_107, %c0_108] : memref<16x128xbf16, #tpu.memory_space<vmem>>, vector<16x128xbf16>
    %c0_109 = arith.constant 0 : index
    %c0_110 = arith.constant 0 : index
    %208 = vector.load %arg10[%c0_109, %c0_110] : memref<16x128xf32, #tpu.memory_space<vmem>>, vector<16x128xf32>
    %209 = arith.index_cast %c4_i32 : i32 to index
    %c0_111 = arith.constant 0 : index
    %c0_112 = arith.constant 0 : index
    %210 = vector.load %arg1[%209, %c0_111, %c0_112] : memref<8x16x512xf32, #tpu.memory_space<vmem>>, vector<1x16x512xf32>
    %211 = vector.shape_cast %210 : vector<1x16x512xf32> to vector<16x512xf32>
    %c0_113 = arith.constant 0 : index
    %c0_114 = arith.constant 0 : index
    %212 = vector.load %arg8[%c0_113, %c0_114] : memref<128x512xbf16, #tpu.memory_space<vmem>>, vector<128x512xbf16>
    %cst_115 = arith.constant dense<0.000000e+00> : vector<16x512xf32>
    %213 = tpu.matmul %207, %212, %cst_115 {dimension_numbers = #tpu.dot_dimension_numbers<[1], [0], [0], [1], [0, 0, 1, 1], [], []>} : vector<16x128xbf16>, vector<128x512xbf16>, vector<16x512xf32> -> vector<16x512xf32>
    %214 = arith.addf %211, %213 : vector<16x512xf32>
    %215 = vector.extract_strided_slice %214 {offsets = [0, 0], sizes = [16, 128], strides = [1, 1]} : vector<16x512xf32> to vector<16x128xf32>
    %cst_116 = arith.constant 5.000000e-01 : f32
    %216 = vector.broadcast %cst_116 : f32 to vector<16x128xf32>
    %217 = arith.mulf %216, %215 : vector<16x128xf32>
    %218 = math.tanh %217 : vector<16x128xf32>
    %cst_117 = arith.constant 1.000000e+00 : f32
    %219 = vector.broadcast %cst_117 : f32 to vector<16x128xf32>
    %220 = arith.addf %219, %218 : vector<16x128xf32>
    %cst_118 = arith.constant 5.000000e-01 : f32
    %221 = vector.broadcast %cst_118 : f32 to vector<16x128xf32>
    %222 = arith.mulf %221, %220 : vector<16x128xf32>
    %223 = vector.extract_strided_slice %214 {offsets = [0, 128], sizes = [16, 128], strides = [1, 1]} : vector<16x512xf32> to vector<16x128xf32>
    %cst_119 = arith.constant 5.000000e-01 : f32
    %224 = vector.broadcast %cst_119 : f32 to vector<16x128xf32>
    %225 = arith.mulf %224, %223 : vector<16x128xf32>
    %226 = math.tanh %225 : vector<16x128xf32>
    %cst_120 = arith.constant 1.000000e+00 : f32
    %227 = vector.broadcast %cst_120 : f32 to vector<16x128xf32>
    %228 = arith.addf %227, %226 : vector<16x128xf32>
    %cst_121 = arith.constant 5.000000e-01 : f32
    %229 = vector.broadcast %cst_121 : f32 to vector<16x128xf32>
    %230 = arith.mulf %229, %228 : vector<16x128xf32>
    %231 = vector.extract_strided_slice %214 {offsets = [0, 256], sizes = [16, 128], strides = [1, 1]} : vector<16x512xf32> to vector<16x128xf32>
    %232 = math.tanh %231 : vector<16x128xf32>
    %233 = vector.extract_strided_slice %214 {offsets = [0, 384], sizes = [16, 128], strides = [1, 1]} : vector<16x512xf32> to vector<16x128xf32>
    %cst_122 = arith.constant 5.000000e-01 : f32
    %234 = vector.broadcast %cst_122 : f32 to vector<16x128xf32>
    %235 = arith.mulf %234, %233 : vector<16x128xf32>
    %236 = math.tanh %235 : vector<16x128xf32>
    %cst_123 = arith.constant 1.000000e+00 : f32
    %237 = vector.broadcast %cst_123 : f32 to vector<16x128xf32>
    %238 = arith.addf %237, %236 : vector<16x128xf32>
    %cst_124 = arith.constant 5.000000e-01 : f32
    %239 = vector.broadcast %cst_124 : f32 to vector<16x128xf32>
    %240 = arith.mulf %239, %238 : vector<16x128xf32>
    %241 = arith.mulf %230, %208 : vector<16x128xf32>
    %242 = arith.mulf %222, %232 : vector<16x128xf32>
    %243 = arith.addf %241, %242 : vector<16x128xf32>
    %244 = math.tanh %243 : vector<16x128xf32>
    %245 = arith.mulf %240, %244 : vector<16x128xf32>
    %246 = arith.truncf %245 : vector<16x128xf32> to vector<16x128xbf16>
    %c0_125 = arith.constant 0 : index
    %c0_126 = arith.constant 0 : index
    %247 = vector.load %arg9[%c0_125, %c0_126] : memref<16x128xbf16, #tpu.memory_space<vmem>>, vector<16x128xbf16>
    tpu.vector_store %arg9[%c0_125, %c0_126], %246 {strides = array<i32>} : memref<16x128xbf16, #tpu.memory_space<vmem>>, vector<16x128xbf16>,
    %c0_127 = arith.constant 0 : index
    %c0_128 = arith.constant 0 : index
    %248 = vector.load %arg10[%c0_127, %c0_128] : memref<16x128xf32, #tpu.memory_space<vmem>>, vector<16x128xf32>
    tpu.vector_store %arg10[%c0_127, %c0_128], %243 {strides = array<i32>} : memref<16x128xf32, #tpu.memory_space<vmem>>, vector<16x128xf32>,
    %249 = arith.index_cast %c4_i32 : i32 to index
    %c0_129 = arith.constant 0 : index
    %c0_130 = arith.constant 0 : index
    %250 = vector.load %arg5[%249, %c0_129, %c0_130] : memref<8x16x128xbf16, #tpu.memory_space<vmem>>, vector<1x16x128xbf16>
    %251 = vector.shape_cast %250 : vector<1x16x128xbf16> to vector<16x128xbf16>
    %252 = vector.shape_cast %246 : vector<16x128xbf16> to vector<1x16x128xbf16>
    tpu.vector_store %arg5[%249, %c0_129, %c0_130], %252 {strides = array<i32>} : memref<8x16x128xbf16, #tpu.memory_space<vmem>>, vector<1x16x128xbf16>,
    %c0_i32_131 = arith.constant 0 : i32
    %253 = arith.cmpi eq, %arg0, %c0_i32_131 : i32
    %c7_i32_132 = arith.constant 7 : i32
    %254 = arith.cmpi eq, %c4_i32, %c7_i32_132 : i32
    %255 = arith.andi %253, %254 : i1
    %256 = arith.extui %255 : i1 to i32
    %c0_i32_133 = arith.constant 0 : i32
    %257 = arith.cmpi ne, %256, %c0_i32_133 : i32
    scf.if %257 {
      %c0_216 = arith.constant 0 : index
      %c0_217 = arith.constant 0 : index
      %411 = vector.load %arg6[%c0_216, %c0_217] : memref<16x128xf32, #tpu.memory_space<vmem>>, vector<16x128xf32>
      tpu.vector_store %arg6[%c0_216, %c0_217], %245 {strides = array<i32>} : memref<16x128xf32, #tpu.memory_space<vmem>>, vector<16x128xf32>,
      %c0_218 = arith.constant 0 : index
      %c0_219 = arith.constant 0 : index
      %412 = vector.load %arg7[%c0_218, %c0_219] : memref<16x128xf32, #tpu.memory_space<vmem>>, vector<16x128xf32>
      tpu.vector_store %arg7[%c0_218, %c0_219], %243 {strides = array<i32>} : memref<16x128xf32, #tpu.memory_space<vmem>>, vector<16x128xf32>,
    } else {
    }
    %c5_i32 = arith.constant 5 : i32
    %c0_134 = arith.constant 0 : index
    %c0_135 = arith.constant 0 : index
    %258 = vector.load %arg9[%c0_134, %c0_135] : memref<16x128xbf16, #tpu.memory_space<vmem>>, vector<16x128xbf16>
    %c0_136 = arith.constant 0 : index
    %c0_137 = arith.constant 0 : index
    %259 = vector.load %arg10[%c0_136, %c0_137] : memref<16x128xf32, #tpu.memory_space<vmem>>, vector<16x128xf32>
    %260 = arith.index_cast %c5_i32 : i32 to index
    %c0_138 = arith.constant 0 : index
    %c0_139 = arith.constant 0 : index
    %261 = vector.load %arg1[%260, %c0_138, %c0_139] : memref<8x16x512xf32, #tpu.memory_space<vmem>>, vector<1x16x512xf32>
    %262 = vector.shape_cast %261 : vector<1x16x512xf32> to vector<16x512xf32>
    %c0_140 = arith.constant 0 : index
    %c0_141 = arith.constant 0 : index
    %263 = vector.load %arg8[%c0_140, %c0_141] : memref<128x512xbf16, #tpu.memory_space<vmem>>, vector<128x512xbf16>
    %cst_142 = arith.constant dense<0.000000e+00> : vector<16x512xf32>
    %264 = tpu.matmul %258, %263, %cst_142 {dimension_numbers = #tpu.dot_dimension_numbers<[1], [0], [0], [1], [0, 0, 1, 1], [], []>} : vector<16x128xbf16>, vector<128x512xbf16>, vector<16x512xf32> -> vector<16x512xf32>
    %265 = arith.addf %262, %264 : vector<16x512xf32>
    %266 = vector.extract_strided_slice %265 {offsets = [0, 0], sizes = [16, 128], strides = [1, 1]} : vector<16x512xf32> to vector<16x128xf32>
    %cst_143 = arith.constant 5.000000e-01 : f32
    %267 = vector.broadcast %cst_143 : f32 to vector<16x128xf32>
    %268 = arith.mulf %267, %266 : vector<16x128xf32>
    %269 = math.tanh %268 : vector<16x128xf32>
    %cst_144 = arith.constant 1.000000e+00 : f32
    %270 = vector.broadcast %cst_144 : f32 to vector<16x128xf32>
    %271 = arith.addf %270, %269 : vector<16x128xf32>
    %cst_145 = arith.constant 5.000000e-01 : f32
    %272 = vector.broadcast %cst_145 : f32 to vector<16x128xf32>
    %273 = arith.mulf %272, %271 : vector<16x128xf32>
    %274 = vector.extract_strided_slice %265 {offsets = [0, 128], sizes = [16, 128], strides = [1, 1]} : vector<16x512xf32> to vector<16x128xf32>
    %cst_146 = arith.constant 5.000000e-01 : f32
    %275 = vector.broadcast %cst_146 : f32 to vector<16x128xf32>
    %276 = arith.mulf %275, %274 : vector<16x128xf32>
    %277 = math.tanh %276 : vector<16x128xf32>
    %cst_147 = arith.constant 1.000000e+00 : f32
    %278 = vector.broadcast %cst_147 : f32 to vector<16x128xf32>
    %279 = arith.addf %278, %277 : vector<16x128xf32>
    %cst_148 = arith.constant 5.000000e-01 : f32
    %280 = vector.broadcast %cst_148 : f32 to vector<16x128xf32>
    %281 = arith.mulf %280, %279 : vector<16x128xf32>
    %282 = vector.extract_strided_slice %265 {offsets = [0, 256], sizes = [16, 128], strides = [1, 1]} : vector<16x512xf32> to vector<16x128xf32>
    %283 = math.tanh %282 : vector<16x128xf32>
    %284 = vector.extract_strided_slice %265 {offsets = [0, 384], sizes = [16, 128], strides = [1, 1]} : vector<16x512xf32> to vector<16x128xf32>
    %cst_149 = arith.constant 5.000000e-01 : f32
    %285 = vector.broadcast %cst_149 : f32 to vector<16x128xf32>
    %286 = arith.mulf %285, %284 : vector<16x128xf32>
    %287 = math.tanh %286 : vector<16x128xf32>
    %cst_150 = arith.constant 1.000000e+00 : f32
    %288 = vector.broadcast %cst_150 : f32 to vector<16x128xf32>
    %289 = arith.addf %288, %287 : vector<16x128xf32>
    %cst_151 = arith.constant 5.000000e-01 : f32
    %290 = vector.broadcast %cst_151 : f32 to vector<16x128xf32>
    %291 = arith.mulf %290, %289 : vector<16x128xf32>
    %292 = arith.mulf %281, %259 : vector<16x128xf32>
    %293 = arith.mulf %273, %283 : vector<16x128xf32>
    %294 = arith.addf %292, %293 : vector<16x128xf32>
    %295 = math.tanh %294 : vector<16x128xf32>
    %296 = arith.mulf %291, %295 : vector<16x128xf32>
    %297 = arith.truncf %296 : vector<16x128xf32> to vector<16x128xbf16>
    %c0_152 = arith.constant 0 : index
    %c0_153 = arith.constant 0 : index
    %298 = vector.load %arg9[%c0_152, %c0_153] : memref<16x128xbf16, #tpu.memory_space<vmem>>, vector<16x128xbf16>
    tpu.vector_store %arg9[%c0_152, %c0_153], %297 {strides = array<i32>} : memref<16x128xbf16, #tpu.memory_space<vmem>>, vector<16x128xbf16>,
    %c0_154 = arith.constant 0 : index
    %c0_155 = arith.constant 0 : index
    %299 = vector.load %arg10[%c0_154, %c0_155] : memref<16x128xf32, #tpu.memory_space<vmem>>, vector<16x128xf32>
    tpu.vector_store %arg10[%c0_154, %c0_155], %294 {strides = array<i32>} : memref<16x128xf32, #tpu.memory_space<vmem>>, vector<16x128xf32>,
    %300 = arith.index_cast %c5_i32 : i32 to index
    %c0_156 = arith.constant 0 : index
    %c0_157 = arith.constant 0 : index
    %301 = vector.load %arg5[%300, %c0_156, %c0_157] : memref<8x16x128xbf16, #tpu.memory_space<vmem>>, vector<1x16x128xbf16>
    %302 = vector.shape_cast %301 : vector<1x16x128xbf16> to vector<16x128xbf16>
    %303 = vector.shape_cast %297 : vector<16x128xbf16> to vector<1x16x128xbf16>
    tpu.vector_store %arg5[%300, %c0_156, %c0_157], %303 {strides = array<i32>} : memref<8x16x128xbf16, #tpu.memory_space<vmem>>, vector<1x16x128xbf16>,
    %c0_i32_158 = arith.constant 0 : i32
    %304 = arith.cmpi eq, %arg0, %c0_i32_158 : i32
    %c7_i32_159 = arith.constant 7 : i32
    %305 = arith.cmpi eq, %c5_i32, %c7_i32_159 : i32
    %306 = arith.andi %304, %305 : i1
    %307 = arith.extui %306 : i1 to i32
    %c0_i32_160 = arith.constant 0 : i32
    %308 = arith.cmpi ne, %307, %c0_i32_160 : i32
    scf.if %308 {
      %c0_216 = arith.constant 0 : index
      %c0_217 = arith.constant 0 : index
      %411 = vector.load %arg6[%c0_216, %c0_217] : memref<16x128xf32, #tpu.memory_space<vmem>>, vector<16x128xf32>
      tpu.vector_store %arg6[%c0_216, %c0_217], %296 {strides = array<i32>} : memref<16x128xf32, #tpu.memory_space<vmem>>, vector<16x128xf32>,
      %c0_218 = arith.constant 0 : index
      %c0_219 = arith.constant 0 : index
      %412 = vector.load %arg7[%c0_218, %c0_219] : memref<16x128xf32, #tpu.memory_space<vmem>>, vector<16x128xf32>
      tpu.vector_store %arg7[%c0_218, %c0_219], %294 {strides = array<i32>} : memref<16x128xf32, #tpu.memory_space<vmem>>, vector<16x128xf32>,
    } else {
    }
    %c6_i32 = arith.constant 6 : i32
    %c0_161 = arith.constant 0 : index
    %c0_162 = arith.constant 0 : index
    %309 = vector.load %arg9[%c0_161, %c0_162] : memref<16x128xbf16, #tpu.memory_space<vmem>>, vector<16x128xbf16>
    %c0_163 = arith.constant 0 : index
    %c0_164 = arith.constant 0 : index
    %310 = vector.load %arg10[%c0_163, %c0_164] : memref<16x128xf32, #tpu.memory_space<vmem>>, vector<16x128xf32>
    %311 = arith.index_cast %c6_i32 : i32 to index
    %c0_165 = arith.constant 0 : index
    %c0_166 = arith.constant 0 : index
    %312 = vector.load %arg1[%311, %c0_165, %c0_166] : memref<8x16x512xf32, #tpu.memory_space<vmem>>, vector<1x16x512xf32>
    %313 = vector.shape_cast %312 : vector<1x16x512xf32> to vector<16x512xf32>
    %c0_167 = arith.constant 0 : index
    %c0_168 = arith.constant 0 : index
    %314 = vector.load %arg8[%c0_167, %c0_168] : memref<128x512xbf16, #tpu.memory_space<vmem>>, vector<128x512xbf16>
    %cst_169 = arith.constant dense<0.000000e+00> : vector<16x512xf32>
    %315 = tpu.matmul %309, %314, %cst_169 {dimension_numbers = #tpu.dot_dimension_numbers<[1], [0], [0], [1], [0, 0, 1, 1], [], []>} : vector<16x128xbf16>, vector<128x512xbf16>, vector<16x512xf32> -> vector<16x512xf32>
    %316 = arith.addf %313, %315 : vector<16x512xf32>
    %317 = vector.extract_strided_slice %316 {offsets = [0, 0], sizes = [16, 128], strides = [1, 1]} : vector<16x512xf32> to vector<16x128xf32>
    %cst_170 = arith.constant 5.000000e-01 : f32
    %318 = vector.broadcast %cst_170 : f32 to vector<16x128xf32>
    %319 = arith.mulf %318, %317 : vector<16x128xf32>
    %320 = math.tanh %319 : vector<16x128xf32>
    %cst_171 = arith.constant 1.000000e+00 : f32
    %321 = vector.broadcast %cst_171 : f32 to vector<16x128xf32>
    %322 = arith.addf %321, %320 : vector<16x128xf32>
    %cst_172 = arith.constant 5.000000e-01 : f32
    %323 = vector.broadcast %cst_172 : f32 to vector<16x128xf32>
    %324 = arith.mulf %323, %322 : vector<16x128xf32>
    %325 = vector.extract_strided_slice %316 {offsets = [0, 128], sizes = [16, 128], strides = [1, 1]} : vector<16x512xf32> to vector<16x128xf32>
    %cst_173 = arith.constant 5.000000e-01 : f32
    %326 = vector.broadcast %cst_173 : f32 to vector<16x128xf32>
    %327 = arith.mulf %326, %325 : vector<16x128xf32>
    %328 = math.tanh %327 : vector<16x128xf32>
    %cst_174 = arith.constant 1.000000e+00 : f32
    %329 = vector.broadcast %cst_174 : f32 to vector<16x128xf32>
    %330 = arith.addf %329, %328 : vector<16x128xf32>
    %cst_175 = arith.constant 5.000000e-01 : f32
    %331 = vector.broadcast %cst_175 : f32 to vector<16x128xf32>
    %332 = arith.mulf %331, %330 : vector<16x128xf32>
    %333 = vector.extract_strided_slice %316 {offsets = [0, 256], sizes = [16, 128], strides = [1, 1]} : vector<16x512xf32> to vector<16x128xf32>
    %334 = math.tanh %333 : vector<16x128xf32>
    %335 = vector.extract_strided_slice %316 {offsets = [0, 384], sizes = [16, 128], strides = [1, 1]} : vector<16x512xf32> to vector<16x128xf32>
    %cst_176 = arith.constant 5.000000e-01 : f32
    %336 = vector.broadcast %cst_176 : f32 to vector<16x128xf32>
    %337 = arith.mulf %336, %335 : vector<16x128xf32>
    %338 = math.tanh %337 : vector<16x128xf32>
    %cst_177 = arith.constant 1.000000e+00 : f32
    %339 = vector.broadcast %cst_177 : f32 to vector<16x128xf32>
    %340 = arith.addf %339, %338 : vector<16x128xf32>
    %cst_178 = arith.constant 5.000000e-01 : f32
    %341 = vector.broadcast %cst_178 : f32 to vector<16x128xf32>
    %342 = arith.mulf %341, %340 : vector<16x128xf32>
    %343 = arith.mulf %332, %310 : vector<16x128xf32>
    %344 = arith.mulf %324, %334 : vector<16x128xf32>
    %345 = arith.addf %343, %344 : vector<16x128xf32>
    %346 = math.tanh %345 : vector<16x128xf32>
    %347 = arith.mulf %342, %346 : vector<16x128xf32>
    %348 = arith.truncf %347 : vector<16x128xf32> to vector<16x128xbf16>
    %c0_179 = arith.constant 0 : index
    %c0_180 = arith.constant 0 : index
    %349 = vector.load %arg9[%c0_179, %c0_180] : memref<16x128xbf16, #tpu.memory_space<vmem>>, vector<16x128xbf16>
    tpu.vector_store %arg9[%c0_179, %c0_180], %348 {strides = array<i32>} : memref<16x128xbf16, #tpu.memory_space<vmem>>, vector<16x128xbf16>,
    %c0_181 = arith.constant 0 : index
    %c0_182 = arith.constant 0 : index
    %350 = vector.load %arg10[%c0_181, %c0_182] : memref<16x128xf32, #tpu.memory_space<vmem>>, vector<16x128xf32>
    tpu.vector_store %arg10[%c0_181, %c0_182], %345 {strides = array<i32>} : memref<16x128xf32, #tpu.memory_space<vmem>>, vector<16x128xf32>,
    %351 = arith.index_cast %c6_i32 : i32 to index
    %c0_183 = arith.constant 0 : index
    %c0_184 = arith.constant 0 : index
    %352 = vector.load %arg5[%351, %c0_183, %c0_184] : memref<8x16x128xbf16, #tpu.memory_space<vmem>>, vector<1x16x128xbf16>
    %353 = vector.shape_cast %352 : vector<1x16x128xbf16> to vector<16x128xbf16>
    %354 = vector.shape_cast %348 : vector<16x128xbf16> to vector<1x16x128xbf16>
    tpu.vector_store %arg5[%351, %c0_183, %c0_184], %354 {strides = array<i32>} : memref<8x16x128xbf16, #tpu.memory_space<vmem>>, vector<1x16x128xbf16>,
    %c0_i32_185 = arith.constant 0 : i32
    %355 = arith.cmpi eq, %arg0, %c0_i32_185 : i32
    %c7_i32_186 = arith.constant 7 : i32
    %356 = arith.cmpi eq, %c6_i32, %c7_i32_186 : i32
    %357 = arith.andi %355, %356 : i1
    %358 = arith.extui %357 : i1 to i32
    %c0_i32_187 = arith.constant 0 : i32
    %359 = arith.cmpi ne, %358, %c0_i32_187 : i32
    scf.if %359 {
      %c0_216 = arith.constant 0 : index
      %c0_217 = arith.constant 0 : index
      %411 = vector.load %arg6[%c0_216, %c0_217] : memref<16x128xf32, #tpu.memory_space<vmem>>, vector<16x128xf32>
      tpu.vector_store %arg6[%c0_216, %c0_217], %347 {strides = array<i32>} : memref<16x128xf32, #tpu.memory_space<vmem>>, vector<16x128xf32>,
      %c0_218 = arith.constant 0 : index
      %c0_219 = arith.constant 0 : index
      %412 = vector.load %arg7[%c0_218, %c0_219] : memref<16x128xf32, #tpu.memory_space<vmem>>, vector<16x128xf32>
      tpu.vector_store %arg7[%c0_218, %c0_219], %345 {strides = array<i32>} : memref<16x128xf32, #tpu.memory_space<vmem>>, vector<16x128xf32>,
    } else {
    }
    %c7_i32_188 = arith.constant 7 : i32
    %c0_189 = arith.constant 0 : index
    %c0_190 = arith.constant 0 : index
    %360 = vector.load %arg9[%c0_189, %c0_190] : memref<16x128xbf16, #tpu.memory_space<vmem>>, vector<16x128xbf16>
    %c0_191 = arith.constant 0 : index
    %c0_192 = arith.constant 0 : index
    %361 = vector.load %arg10[%c0_191, %c0_192] : memref<16x128xf32, #tpu.memory_space<vmem>>, vector<16x128xf32>
    %362 = arith.index_cast %c7_i32_188 : i32 to index
    %c0_193 = arith.constant 0 : index
    %c0_194 = arith.constant 0 : index
    %363 = vector.load %arg1[%362, %c0_193, %c0_194] : memref<8x16x512xf32, #tpu.memory_space<vmem>>, vector<1x16x512xf32>
    %364 = vector.shape_cast %363 : vector<1x16x512xf32> to vector<16x512xf32>
    %c0_195 = arith.constant 0 : index
    %c0_196 = arith.constant 0 : index
    %365 = vector.load %arg8[%c0_195, %c0_196] : memref<128x512xbf16, #tpu.memory_space<vmem>>, vector<128x512xbf16>
    %cst_197 = arith.constant dense<0.000000e+00> : vector<16x512xf32>
    %366 = tpu.matmul %360, %365, %cst_197 {dimension_numbers = #tpu.dot_dimension_numbers<[1], [0], [0], [1], [0, 0, 1, 1], [], []>} : vector<16x128xbf16>, vector<128x512xbf16>, vector<16x512xf32> -> vector<16x512xf32>
    %367 = arith.addf %364, %366 : vector<16x512xf32>
    %368 = vector.extract_strided_slice %367 {offsets = [0, 0], sizes = [16, 128], strides = [1, 1]} : vector<16x512xf32> to vector<16x128xf32>
    %cst_198 = arith.constant 5.000000e-01 : f32
    %369 = vector.broadcast %cst_198 : f32 to vector<16x128xf32>
    %370 = arith.mulf %369, %368 : vector<16x128xf32>
    %371 = math.tanh %370 : vector<16x128xf32>
    %cst_199 = arith.constant 1.000000e+00 : f32
    %372 = vector.broadcast %cst_199 : f32 to vector<16x128xf32>
    %373 = arith.addf %372, %371 : vector<16x128xf32>
    %cst_200 = arith.constant 5.000000e-01 : f32
    %374 = vector.broadcast %cst_200 : f32 to vector<16x128xf32>
    %375 = arith.mulf %374, %373 : vector<16x128xf32>
    %376 = vector.extract_strided_slice %367 {offsets = [0, 128], sizes = [16, 128], strides = [1, 1]} : vector<16x512xf32> to vector<16x128xf32>
    %cst_201 = arith.constant 5.000000e-01 : f32
    %377 = vector.broadcast %cst_201 : f32 to vector<16x128xf32>
    %378 = arith.mulf %377, %376 : vector<16x128xf32>
    %379 = math.tanh %378 : vector<16x128xf32>
    %cst_202 = arith.constant 1.000000e+00 : f32
    %380 = vector.broadcast %cst_202 : f32 to vector<16x128xf32>
    %381 = arith.addf %380, %379 : vector<16x128xf32>
    %cst_203 = arith.constant 5.000000e-01 : f32
    %382 = vector.broadcast %cst_203 : f32 to vector<16x128xf32>
    %383 = arith.mulf %382, %381 : vector<16x128xf32>
    %384 = vector.extract_strided_slice %367 {offsets = [0, 256], sizes = [16, 128], strides = [1, 1]} : vector<16x512xf32> to vector<16x128xf32>
    %385 = math.tanh %384 : vector<16x128xf32>
    %386 = vector.extract_strided_slice %367 {offsets = [0, 384], sizes = [16, 128], strides = [1, 1]} : vector<16x512xf32> to vector<16x128xf32>
    %cst_204 = arith.constant 5.000000e-01 : f32
    %387 = vector.broadcast %cst_204 : f32 to vector<16x128xf32>
    %388 = arith.mulf %387, %386 : vector<16x128xf32>
    %389 = math.tanh %388 : vector<16x128xf32>
    %cst_205 = arith.constant 1.000000e+00 : f32
    %390 = vector.broadcast %cst_205 : f32 to vector<16x128xf32>
    %391 = arith.addf %390, %389 : vector<16x128xf32>
    %cst_206 = arith.constant 5.000000e-01 : f32
    %392 = vector.broadcast %cst_206 : f32 to vector<16x128xf32>
    %393 = arith.mulf %392, %391 : vector<16x128xf32>
    %394 = arith.mulf %383, %361 : vector<16x128xf32>
    %395 = arith.mulf %375, %385 : vector<16x128xf32>
    %396 = arith.addf %394, %395 : vector<16x128xf32>
    %397 = math.tanh %396 : vector<16x128xf32>
    %398 = arith.mulf %393, %397 : vector<16x128xf32>
    %399 = arith.truncf %398 : vector<16x128xf32> to vector<16x128xbf16>
    %c0_207 = arith.constant 0 : index
    %c0_208 = arith.constant 0 : index
    %400 = vector.load %arg9[%c0_207, %c0_208] : memref<16x128xbf16, #tpu.memory_space<vmem>>, vector<16x128xbf16>
    tpu.vector_store %arg9[%c0_207, %c0_208], %399 {strides = array<i32>} : memref<16x128xbf16, #tpu.memory_space<vmem>>, vector<16x128xbf16>,
    %c0_209 = arith.constant 0 : index
    %c0_210 = arith.constant 0 : index
    %401 = vector.load %arg10[%c0_209, %c0_210] : memref<16x128xf32, #tpu.memory_space<vmem>>, vector<16x128xf32>
    tpu.vector_store %arg10[%c0_209, %c0_210], %396 {strides = array<i32>} : memref<16x128xf32, #tpu.memory_space<vmem>>, vector<16x128xf32>,
    %402 = arith.index_cast %c7_i32_188 : i32 to index
    %c0_211 = arith.constant 0 : index
    %c0_212 = arith.constant 0 : index
    %403 = vector.load %arg5[%402, %c0_211, %c0_212] : memref<8x16x128xbf16, #tpu.memory_space<vmem>>, vector<1x16x128xbf16>
    %404 = vector.shape_cast %403 : vector<1x16x128xbf16> to vector<16x128xbf16>
    %405 = vector.shape_cast %399 : vector<16x128xbf16> to vector<1x16x128xbf16>
    tpu.vector_store %arg5[%402, %c0_211, %c0_212], %405 {strides = array<i32>} : memref<8x16x128xbf16, #tpu.memory_space<vmem>>, vector<1x16x128xbf16>,
    %c0_i32_213 = arith.constant 0 : i32
    %406 = arith.cmpi eq, %arg0, %c0_i32_213 : i32
    %c7_i32_214 = arith.constant 7 : i32
    %407 = arith.cmpi eq, %c7_i32_188, %c7_i32_214 : i32
    %408 = arith.andi %406, %407 : i1
    %409 = arith.extui %408 : i1 to i32
    %c0_i32_215 = arith.constant 0 : i32
    %410 = arith.cmpi ne, %409, %c0_i32_215 : i32
    scf.if %410 {
      %c0_216 = arith.constant 0 : index
      %c0_217 = arith.constant 0 : index
      %411 = vector.load %arg6[%c0_216, %c0_217] : memref<16x128xf32, #tpu.memory_space<vmem>>, vector<16x128xf32>
      tpu.vector_store %arg6[%c0_216, %c0_217], %398 {strides = array<i32>} : memref<16x128xf32, #tpu.memory_space<vmem>>, vector<16x128xf32>,
      %c0_218 = arith.constant 0 : index
      %c0_219 = arith.constant 0 : index
      %412 = vector.load %arg7[%c0_218, %c0_219] : memref<16x128xf32, #tpu.memory_space<vmem>>, vector<16x128xf32>
      tpu.vector_store %arg7[%c0_218, %c0_219], %396 {strides = array<i32>} : memref<16x128xf32, #tpu.memory_space<vmem>>, vector<16x128xf32>,
    } else {
    }
    %c8_i32 = arith.constant 8 : i32
    return
  }
  func.func @transform_0(%arg0: i32) -> (i32, i32, i32) {
    %c0_i32 = arith.constant 0 : i32
    %c0_i32_0 = arith.constant 0 : i32
    %c0_i32_1 = arith.constant 0 : i32
    return %arg0, %c0_i32, %c0_i32_0 : i32, i32, i32
  }
  func.func @transform_1(%arg0: i32) -> (i32, i32) {
    %c0_i32 = arith.constant 0 : i32
    %c0_i32_0 = arith.constant 0 : i32
    %c0_i32_1 = arith.constant 0 : i32
    return %c0_i32, %c0_i32_0 : i32, i32
  }
  func.func @transform_2(%arg0: i32) -> (i32, i32) {
    %c0_i32 = arith.constant 0 : i32
    %c0_i32_0 = arith.constant 0 : i32
    %c0_i32_1 = arith.constant 0 : i32
    return %c0_i32, %c0_i32_0 : i32, i32
  }
  func.func @transform_4(%arg0: i32) -> (i32, i32, i32) {
    %c0_i32 = arith.constant 0 : i32
    %c0_i32_0 = arith.constant 0 : i32
    %c0_i32_1 = arith.constant 0 : i32
    return %arg0, %c0_i32, %c0_i32_0 : i32, i32, i32
  }
  func.func @transform_5(%arg0: i32) -> (i32, i32) {
    %c0_i32 = arith.constant 0 : i32
    %c0_i32_0 = arith.constant 0 : i32
    %c0_i32_1 = arith.constant 0 : i32
    return %c0_i32, %c0_i32_0 : i32, i32
  }
  func.func @transform_6(%arg0: i32) -> (i32, i32) {
    %c0_i32 = arith.constant 0 : i32
    %c0_i32_0 = arith.constant 0 : i32
    %c0_i32_1 = arith.constant 0 : i32
    return %c0_i32, %c0_i32_0 : i32, i32
  }
}

</mosaic_0001>

<llo_original>
// kernel: _decode_fused.1
$region0: #{_decode_fused.1}
  #allocation0 [shape = 'u32[]', space=smem, size = 0x4, offset = 0x4, fixed_abs, tag = 'smem constant byte address 0x4 - core index']
  #allocation1 [shape = 'u32[144,128]{1,0:T(1,128)}', space=vmem, size = 0x12000, scoped, tag = 'internal scratch']
  #allocation2 [shape = 'bf16[128,512]{1,0:T(16,128)(2,1)}', space=vmem, size = 0x20000, scoped, tag = 'scratch operand']
  #allocation3 [shape = 'bf16[16,128]{1,0:T(16,128)(2,1)}', space=vmem, size = 0x1000, scoped, tag = 'scratch operand']
  #allocation4 [shape = 'f32[16,128]{1,0:T(8,128)}', space=vmem, size = 0x2000, scoped, tag = 'scratch operand']
  #allocation5 [shape = 's32[1]{0}', space=sflag, size = 0x4, scoped, tag = 'scratch operand']
  #allocation15 [shape = 's32[]', space=sflag, size = 0x4, offset = 0, fixed_abs, tag = 'sflag constant byte address 0x0 - dummy sync flag']
  %s0 = inlined_call_operand.vmem [shape: f32[8,16,512], index: 0, kind: input, shape index: {}]
  %s1 = inlined_call_operand.hbm [shape: f32[16,128], index: 1, kind: input, shape index: {}, may-alias: {1,5}]
  %s2 = inlined_call_operand.hbm [shape: f32[16,128], index: 2, kind: input, shape index: {}, may-alias: {2,6}]
  %s3 = inlined_call_operand.vmem [shape: bf16[128,512], index: 3, kind: input, shape index: {}]
  %s4 = inlined_call_operand.hbm [shape: bf16[8,16,128], index: 4, kind: output, shape index: {0}]
  %s5 = inlined_call_operand.hbm [shape: f32[16,128], index: 5, kind: output, shape index: {1}, may-alias: {1,5}]
  %s6 = inlined_call_operand.hbm [shape: f32[16,128], index: 6, kind: output, shape index: {2}, may-alias: {2,6}]
  %7 = xla_tuple %s4, %s5, %s6
  %s8 = sld [smem:[#allocation0]]
  $region91: #{_decode_fused.1} parent=0
    _
  %s10 = ssub.s32 1, %s8
  %s11 = scalar_select 0, %s10, %s8
  $region1: #{_decode_fused.1} parent=0
    #allocation6 [shape = 'u8[8192]{0}', space=vmem, size = 0x2000, scoped, tag = 'input window, operand 1, single buffered']
    #allocation7 [shape = 's32[1]{0}', space=sflag, size = 0x4, scoped, tag = 'scoped memory for _decode_fused.1']
    #allocation8 [shape = 's32[1]{0}', space=sflag, size = 0x4, scoped, tag = 'scoped memory for _decode_fused.1']
    #allocation9 [shape = 'u8[8192]{0}', space=vmem, size = 0x2000, scoped, tag = 'input window, operand 2, single buffered']
    #allocation10 [shape = 's32[1]{0}', space=sflag, size = 0x4, scoped, tag = 'scoped memory for _decode_fused.1']
    #allocation11 [shape = 'u8[32768]{0}', space=vmem, size = 0x8000, scoped, tag = 'output window, operand 0, single buffered']
    #allocation12 [shape = 'u8[8192]{0}', space=vmem, size = 0x2000, scoped, tag = 'output window, operand 1, single buffered']
    #allocation13 [shape = 's32[1]{0}', space=sflag, size = 0x4, scoped, tag = 'scoped memory for _decode_fused.1']
    #allocation14 [shape = 'u8[8192]{0}', space=vmem, size = 0x2000, scoped, tag = 'output window, operand 2, single buffered']
    %12 = vsyncpa [#allocation7], 0
    %13 = vsyncpa [#allocation10], 0
    %14 = vsyncpa [#allocation8], 0
    %15 = vsyncpa [#allocation13], 0
    // Predicated region
    $region2: #{_decode_fused.1} parent=1 // pred_check
      _
    $region3: #{_decode_fused.1} parent=1 // pred_check_branch
      %17 = sbr.rel (0) target = $region5
    $region4: #{_decode_fused.1} parent=1 // pred_region
      _
    $region5: #{_decode_fused.1} parent=1 // pred_fallthru
      _
    // Predicated region
    $region6: #{_decode_fused.1} parent=1 // pred_check
      _
    $region7: #{_decode_fused.1} parent=1 // pred_check_branch
      %19 = sbr.rel (0) target = $region9
    $region8: #{_decode_fused.1} parent=1 // pred_region
      %s21 = ssub.s32 256, 256
      %22 = vsyncadd [#allocation7], %s21
      %s23 = sshll.u32 [#allocation6], 4
      %s24 = int_to_ptr.vmem [resolvable:$true] %s23
      %29 = dma.hbm_to_vmem [thread:$0]  %s1, 256, %s24, [#allocation7], 128, 128, 8
    $region9: #{_decode_fused.1} parent=1 // pred_fallthru
      _
    // Predicated region
    $region10: #{_decode_fused.1} parent=1 // pred_check
      _
    $region11: #{_decode_fused.1} parent=1 // pred_check_branch
      %31 = sbr.rel (0) target = $region13
    $region12: #{_decode_fused.1} parent=1 // pred_region
      %s33 = ssub.s32 256, 256
      %34 = vsyncadd [#allocation10], %s33
      %s35 = sshll.u32 [#allocation9], 4
      %s36 = int_to_ptr.vmem [resolvable:$true] %s35
      %41 = dma.hbm_to_vmem [thread:$0]  %s2, 256, %s36, [#allocation10], 128, 128, 8
    $region13: #{_decode_fused.1} parent=1 // pred_fallthru
      _
    // Predicated region
    $region14: #{_decode_fused.1} parent=1 // pred_check
      _
    $region15: #{_decode_fused.1} parent=1 // pred_check_branch
      %43 = sbr.rel (0) target = $region17
    $region16: #{_decode_fused.1} parent=1 // pred_region
      %44 = dma.done [#allocation7], 256
    $region17: #{_decode_fused.1} parent=1 // pred_fallthru
      _
    // Predicated region
    $region18: #{_decode_fused.1} parent=1 // pred_check
      _
    $region19: #{_decode_fused.1} parent=1 // pred_check_branch
      %46 = sbr.rel (0) target = $region21
    $region20: #{_decode_fused.1} parent=1 // pred_region
      %47 = dma.done [#allocation10], 256
    $region21: #{_decode_fused.1} parent=1 // pred_fallthru
      _
    %p49 = scmp.eq.s32.totalorder 0, 0
    // Predicated region
    $region22: #{_decode_fused.1} parent=1 // pred_check
      %p50 = pneg %p49
    $region23: #{_decode_fused.1} parent=1 // pred_check_branch
      %52 = sbr.rel (%p50) target = $region25
    $region24: #{_decode_fused.1} parent=1 // pred_region
      %p54 = scmp.lt.u32.totalorder 4, 8
      %p55 = pneg %p54
      // Predicated region
      $region26: #{_decode_fused.1} parent=24 // pred_check
        _
      $region27: #{_decode_fused.1} parent=24 // pred_check_branch
        %57 = sbr.rel (%p54) target = $region29
      $region28: #{_decode_fused.1} parent=24 // pred_region
        %s198 = sand.u32 4, 7
        %p199 = scmp.eq.s32.totalorder %s198, 0
        %p200 = pneg %p199
        // Predicated region
        $region41: #{_decode_fused.1} parent=28 // pred_check
          _
        $region42: #{_decode_fused.1} parent=28 // pred_check_branch
          %202 = sbr.rel (%p199) target = $region44
        $region43: #{_decode_fused.1} parent=28 // pred_region
          %s203 = sand.u32 4, 7
          %s204 = ssub.s32 4, %s203
          %s205 = scalar_lea.vmem %s3, %s204
          %s206 = ssub.s32 4, %s203
          %s207 = scalar_lea.vmem [#allocation2], %s206
          loop: start=0, step=1, limit=1
          $region45: #{_decode_fused.1} parent=43 // loop_pre_header
            _
          $region46: #{_decode_fused.1} parent=43 // loop_header
            %s209 = sphi 0, %s213
            %p210 = scmp.ge.s32.totalorder %s209, 1
            %s214 = sphi %s3, %s3
            %s215 = sphi [#allocation2], [#allocation2]
          $region47: #{_decode_fused.1} parent=43 // loop_header_branch
            %212 = sbr.rel (%p210) target = $region51
          $region48: #{_decode_fused.1} parent=43 // loop_body
            _
          $region49: #{_decode_fused.1} parent=43 // loop_footer
            %s213 = sadd.s32 1, %s209
          $region50: #{_decode_fused.1} parent=43 // loop_footer_branch
            %208 = sbr.rel target = $region46
          $region51: #{_decode_fused.1} parent=43 // loop_exit
            _
          %s216 = sshllo.u32 0, %s203
          loop: start=0, step=1, limit=1
          $region52: #{_decode_fused.1} parent=43 // loop_pre_header
            _
          $region53: #{_decode_fused.1} parent=43 // loop_header
            %s218 = sphi 0, %s222
            %p219 = scmp.ge.s32.totalorder %s218, 1
            %s223 = sphi %s205, %s205
            %s224 = sphi %s207, %s207
          $region54: #{_decode_fused.1} parent=43 // loop_header_branch
            %221 = sbr.rel (%p219) target = $region58
          $region55: #{_decode_fused.1} parent=43 // loop_body
            %v225 = vld [vmem:[%s223] sm:%s216]
            %226 = vst [vmem:[%s224] sm:%s216] %v225
            %v227 = vld [vmem:[%s223 + $0x10] sm:%s216]
            %228 = vst [vmem:[%s224 + $0x4] sm:%s216] %v227
            %v229 = vld [vmem:[%s223 + $0x4] sm:%s216]
            %230 = vst [vmem:[%s224 + $0x8] sm:%s216] %v229
            %v231 = vld [vmem:[%s223 + $0x14] sm:%s216]
            %232 = vst [vmem:[%s224 + $0xc] sm:%s216] %v231
            %v233 = vld [vmem:[%s223 + $0x8] sm:%s216]
            %234 = vst [vmem:[%s224 + $0x10] sm:%s216] %v233
            %v235 = vld [vmem:[%s223 + $0x18] sm:%s216]
            %236 = vst [vmem:[%s224 + $0x14] sm:%s216] %v235
            %v237 = vld [vmem:[%s223 + $0xc] sm:%s216]
            %238 = vst [vmem:[%s224 + $0x18] sm:%s216] %v237
            %v239 = vld [vmem:[%s223 + $0x1c] sm:%s216]
            %240 = vst [vmem:[%s224 + $0x1c] sm:%s216] %v239
            %v241 = vld [vmem:[%s223 + $0x20] sm:%s216]
            %242 = vst [vmem:[%s224 + $0x20] sm:%s216] %v241
            %v243 = vld [vmem:[%s223 + $0x30] sm:%s216]
            %244 = vst [vmem:[%s224 + $0x24] sm:%s216] %v243
            %v245 = vld [vmem:[%s223 + $0x24] sm:%s216]
            %246 = vst [vmem:[%s224 + $0x28] sm:%s216] %v245
            %v247 = vld [vmem:[%s223 + $0x34] sm:%s216]
            %248 = vst [vmem:[%s224 + $0x2c] sm:%s216] %v247
            %v249 = vld [vmem:[%s223 + $0x28] sm:%s216]
            %250 = vst [vmem:[%s224 + $0x30] sm:%s216] %v249
            %v251 = vld [vmem:[%s223 + $0x38] sm:%s216]
            %252 = vst [vmem:[%s224 + $0x34] sm:%s216] %v251
            %v253 = vld [vmem:[%s223 + $0x2c] sm:%s216]
            %254 = vst [vmem:[%s224 + $0x38] sm:%s216] %v253
            %v255 = vld [vmem:[%s223 + $0x3c] sm:%s216]
            %256 = vst [vmem:[%s224 + $0x3c] sm:%s216] %v255
            %v257 = vld [vmem:[%s223 + $0x40] sm:%s216]
            %258 = vst [vmem:[%s224 + $0x40] sm:%s216] %v257
            %v259 = vld [vmem:[%s223 + $0x50] sm:%s216]
            %260 = vst [vmem:[%s224 + $0x44] sm:%s216] %v259
            %v261 = vld [vmem:[%s223 + $0x44] sm:%s216]
            %262 = vst [vmem:[%s224 + $0x48] sm:%s216] %v261
            %v263 = vld [vmem:[%s223 + $0x54] sm:%s216]
            %264 = vst [vmem:[%s224 + $0x4c] sm:%s216] %v263
            %v265 = vld [vmem:[%s223 + $0x48] sm:%s216]
            %266 = vst [vmem:[%s224 + $0x50] sm:%s216] %v265
            %v267 = vld [vmem:[%s223 + $0x58] sm:%s216]
            %268 = vst [vmem:[%s224 + $0x54] sm:%s216] %v267
            %v269 = vld [vmem:[%s223 + $0x4c] sm:%s216]
            %270 = vst [vmem:[%s224 + $0x58] sm:%s216] %v269
            %v271 = vld [vmem:[%s223 + $0x5c] sm:%s216]
            %272 = vst [vmem:[%s224 + $0x5c] sm:%s216] %v271
            %v273 = vld [vmem:[%s223 + $0x60] sm:%s216]
            %274 = vst [vmem:[%s224 + $0x60] sm:%s216] %v273
            %v275 = vld [vmem:[%s223 + $0x70] sm:%s216]
            %276 = vst [vmem:[%s224 + $0x64] sm:%s216] %v275
            %v277 = vld [vmem:[%s223 + $0x64] sm:%s216]
            %278 = vst [vmem:[%s224 + $0x68] sm:%s216] %v277
            %v279 = vld [vmem:[%s223 + $0x74] sm:%s216]
            %280 = vst [vmem:[%s224 + $0x6c] sm:%s216] %v279
            %v281 = vld [vmem:[%s223 + $0x68] sm:%s216]
            %282 = vst [vmem:[%s224 + $0x70] sm:%s216] %v281
            %v283 = vld [vmem:[%s223 + $0x78] sm:%s216]
            %284 = vst [vmem:[%s224 + $0x74] sm:%s216] %v283
            %v285 = vld [vmem:[%s223 + $0x6c] sm:%s216]
            %286 = vst [vmem:[%s224 + $0x78] sm:%s216] %v285
            %v287 = vld [vmem:[%s223 + $0x7c] sm:%s216]
            %288 = vst [vmem:[%s224 + $0x7c] sm:%s216] %v287
            %v289 = vld [vmem:[%s223 + $0x80] sm:%s216]
            %290 = vst [vmem:[%s224 + $0x80] sm:%s216] %v289
            %v291 = vld [vmem:[%s223 + $0x90] sm:%s216]
            %292 = vst [vmem:[%s224 + $0x84] sm:%s216] %v291
            %v293 = vld [vmem:[%s223 + $0x84] sm:%s216]
            %294 = vst [vmem:[%s224 + $0x88] sm:%s216] %v293
            %v295 = vld [vmem:[%s223 + $0x94] sm:%s216]
            %296 = vst [vmem:[%s224 + $0x8c] sm:%s216] %v295
            %v297 = vld [vmem:[%s223 + $0x88] sm:%s216]
            %298 = vst [vmem:[%s224 + $0x90] sm:%s216] %v297
            %v299 = vld [vmem:[%s223 + $0x98] sm:%s216]
            %300 = vst [vmem:[%s224 + $0x94] sm:%s216] %v299
            %v301 = vld [vmem:[%s223 + $0x8c] sm:%s216]
            %302 = vst [vmem:[%s224 + $0x98] sm:%s216] %v301
            %v303 = vld [vmem:[%s223 + $0x9c] sm:%s216]
            %304 = vst [vmem:[%s224 + $0x9c] sm:%s216] %v303
            %v305 = vld [vmem:[%s223 + $0xa0] sm:%s216]
            %306 = vst [vmem:[%s224 + $0xa0] sm:%s216] %v305
            %v307 = vld [vmem:[%s223 + $0xb0] sm:%s216]
            %308 = vst [vmem:[%s224 + $0xa4] sm:%s216] %v307
            %v309 = vld [vmem:[%s223 + $0xa4] sm:%s216]
            %310 = vst [vmem:[%s224 + $0xa8] sm:%s216] %v309
            %v311 = vld [vmem:[%s223 + $0xb4] sm:%s216]
            %312 = vst [vmem:[%s224 + $0xac] sm:%s216] %v311
            %v313 = vld [vmem:[%s223 + $0xa8] sm:%s216]
            %314 = vst [vmem:[%s224 + $0xb0] sm:%s216] %v313
            %v315 = vld [vmem:[%s223 + $0xb8] sm:%s216]
            %316 = vst [vmem:[%s224 + $0xb4] sm:%s216] %v315
            %v317 = vld [vmem:[%s223 + $0xac] sm:%s216]
            %318 = vst [vmem:[%s224 + $0xb8] sm:%s216] %v317
            %v319 = vld [vmem:[%s223 + $0xbc] sm:%s216]
            %320 = vst [vmem:[%s224 + $0xbc] sm:%s216] %v319
            %v321 = vld [vmem:[%s223 + $0xc0] sm:%s216]
            %322 = vst [vmem:[%s224 + $0xc0] sm:%s216] %v321
            %v323 = vld [vmem:[%s223 + $0xd0] sm:%s216]
            %324 = vst [vmem:[%s224 + $0xc4] sm:%s216] %v323
            %v325 = vld [vmem:[%s223 + $0xc4] sm:%s216]
            %326 = vst [vmem:[%s224 + $0xc8] sm:%s216] %v325
            %v327 = vld [vmem:[%s223 + $0xd4] sm:%s216]
            %328 = vst [vmem:[%s224 + $0xcc] sm:%s216] %v327
            %v329 = vld [vmem:[%s223 + $0xc8] sm:%s216]
            %330 = vst [vmem:[%s224 + $0xd0] sm:%s216] %v329
            %v331 = vld [vmem:[%s223 + $0xd8] sm:%s216]
            %332 = vst [vmem:[%s224 + $0xd4] sm:%s216] %v331
            %v333 = vld [vmem:[%s223 + $0xcc] sm:%s216]
            %334 = vst [vmem:[%s224 + $0xd8] sm:%s216] %v333
            %v335 = vld [vmem:[%s223 + $0xdc] sm:%s216]
            %336 = vst [vmem:[%s224 + $0xdc] sm:%s216] %v335
            %v337 = vld [vmem:[%s223 + $0xe0] sm:%s216]
            %338 = vst [vmem:[%s224 + $0xe0] sm:%s216] %v337
            %v339 = vld [vmem:[%s223 + $0xf0] sm:%s216]
            %340 = vst [vmem:[%s224 + $0xe4] sm:%s216] %v339
            %v341 = vld [vmem:[%s223 + $0xe4] sm:%s216]
            %342 = vst [vmem:[%s224 + $0xe8] sm:%s216] %v341
            %v343 = vld [vmem:[%s223 + $0xf4] sm:%s216]
            %344 = vst [vmem:[%s224 + $0xec] sm:%s216] %v343
            %v345 = vld [vmem:[%s223 + $0xe8] sm:%s216]
            %346 = vst [vmem:[%s224 + $0xf0] sm:%s216] %v345
            %v347 = vld [vmem:[%s223 + $0xf8] sm:%s216]
            %348 = vst [vmem:[%s224 + $0xf4] sm:%s216] %v347
            %v349 = vld [vmem:[%s223 + $0xec] sm:%s216]
            %350 = vst [vmem:[%s224 + $0xf8] sm:%s216] %v349
            %v351 = vld [vmem:[%s223 + $0xfc] sm:%s216]
            %352 = vst [vmem:[%s224 + $0xfc] sm:%s216] %v351
          $region56: #{_decode_fused.1} parent=43 // loop_footer
            %s222 = sadd.s32 1, %s218
          $region57: #{_decode_fused.1} parent=43 // loop_footer_branch
            %217 = sbr.rel target = $region53
          $region58: #{_decode_fused.1} parent=43 // loop_exit
            _
        $region44: #{_decode_fused.1} parent=28 // pred_fallthru
          _
      $region29: #{_decode_fused.1} parent=24 // pred_fallthru
        _
      // Predicated region
      $region30: #{_decode_fused.1} parent=24 // pred_check
        %p58 = pneg %p54
      $region31: #{_decode_fused.1} parent=24 // pred_check_branch
        %60 = sbr.rel (%p58) target = $region33
      $region32: #{_decode_fused.1} parent=24 // pred_region
        %s61 = sshllo.u32 0, 4
        loop: start=0, step=1, limit=1
        $region34: #{_decode_fused.1} parent=32 // loop_pre_header
          _
        $region35: #{_decode_fused.1} parent=32 // loop_header
          %s63 = sphi 0, %s67
          %p64 = scmp.ge.s32.totalorder %s63, 1
          %s68 = sphi %s3, %s3
          %s69 = sphi [#allocation2], [#allocation2]
        $region36: #{_decode_fused.1} parent=32 // loop_header_branch
          %66 = sbr.rel (%p64) target = $region40
        $region37: #{_decode_fused.1} parent=32 // loop_body
          %v70 = vld [vmem:[%s68] sm:%s61]
          %71 = vst [vmem:[%s69] sm:%s61] %v70
          %v72 = vld [vmem:[%s68 + $0x10] sm:%s61]
          %73 = vst [vmem:[%s69 + $0x4] sm:%s61] %v72
          %v74 = vld [vmem:[%s68 + $0x4] sm:%s61]
          %75 = vst [vmem:[%s69 + $0x8] sm:%s61] %v74
          %v76 = vld [vmem:[%s68 + $0x14] sm:%s61]
          %77 = vst [vmem:[%s69 + $0xc] sm:%s61] %v76
          %v78 = vld [vmem:[%s68 + $0x8] sm:%s61]
          %79 = vst [vmem:[%s69 + $0x10] sm:%s61] %v78
          %v80 = vld [vmem:[%s68 + $0x18] sm:%s61]
          %81 = vst [vmem:[%s69 + $0x14] sm:%s61] %v80
          %v82 = vld [vmem:[%s68 + $0xc] sm:%s61]
          %83 = vst [vmem:[%s69 + $0x18] sm:%s61] %v82
          %v84 = vld [vmem:[%s68 + $0x1c] sm:%s61]
          %85 = vst [vmem:[%s69 + $0x1c] sm:%s61] %v84
          %v86 = vld [vmem:[%s68 + $0x20] sm:%s61]
          %87 = vst [vmem:[%s69 + $0x20] sm:%s61] %v86
          %v88 = vld [vmem:[%s68 + $0x30] sm:%s61]
          %89 = vst [vmem:[%s69 + $0x24] sm:%s61] %v88
          %v90 = vld [vmem:[%s68 + $0x24] sm:%s61]
          %91 = vst [vmem:[%s69 + $0x28] sm:%s61] %v90
          %v92 = vld [vmem:[%s68 + $0x34] sm:%s61]
          %93 = vst [vmem:[%s69 + $0x2c] sm:%s61] %v92
          %v94 = vld [vmem:[%s68 + $0x28] sm:%s61]
          %95 = vst [vmem:[%s69 + $0x30] sm:%s61] %v94
          %v96 = vld [vmem:[%s68 + $0x38] sm:%s61]
          %97 = vst [vmem:[%s69 + $0x34] sm:%s61] %v96
          %v98 = vld [vmem:[%s68 + $0x2c] sm:%s61]
          %99 = vst [vmem:[%s69 + $0x38] sm:%s61] %v98
          %v100 = vld [vmem:[%s68 + $0x3c] sm:%s61]
          %101 = vst [vmem:[%s69 + $0x3c] sm:%s61] %v100
          %v102 = vld [vmem:[%s68 + $0x40] sm:%s61]
          %103 = vst [vmem:[%s69 + $0x40] sm:%s61] %v102
          %v104 = vld [vmem:[%s68 + $0x50] sm:%s61]
          %105 = vst [vmem:[%s69 + $0x44] sm:%s61] %v104
          %v106 = vld [vmem:[%s68 + $0x44] sm:%s61]
          %107 = vst [vmem:[%s69 + $0x48] sm:%s61] %v106
          %v108 = vld [vmem:[%s68 + $0x54] sm:%s61]
          %109 = vst [vmem:[%s69 + $0x4c] sm:%s61] %v108
          %v110 = vld [vmem:[%s68 + $0x48] sm:%s61]
          %111 = vst [vmem:[%s69 + $0x50] sm:%s61] %v110
          %v112 = vld [vmem:[%s68 + $0x58] sm:%s61]
          %113 = vst [vmem:[%s69 + $0x54] sm:%s61] %v112
          %v114 = vld [vmem:[%s68 + $0x4c] sm:%s61]
          %115 = vst [vmem:[%s69 + $0x58] sm:%s61] %v114
          %v116 = vld [vmem:[%s68 + $0x5c] sm:%s61]
          %117 = vst [vmem:[%s69 + $0x5c] sm:%s61] %v116
          %v118 = vld [vmem:[%s68 + $0x60] sm:%s61]
          %119 = vst [vmem:[%s69 + $0x60] sm:%s61] %v118
          %v120 = vld [vmem:[%s68 + $0x70] sm:%s61]
          %121 = vst [vmem:[%s69 + $0x64] sm:%s61] %v120
          %v122 = vld [vmem:[%s68 + $0x64] sm:%s61]
          %123 = vst [vmem:[%s69 + $0x68] sm:%s61] %v122
          %v124 = vld [vmem:[%s68 + $0x74] sm:%s61]
          %125 = vst [vmem:[%s69 + $0x6c] sm:%s61] %v124
          %v126 = vld [vmem:[%s68 + $0x68] sm:%s61]
          %127 = vst [vmem:[%s69 + $0x70] sm:%s61] %v126
          %v128 = vld [vmem:[%s68 + $0x78] sm:%s61]
          %129 = vst [vmem:[%s69 + $0x74] sm:%s61] %v128
          %v130 = vld [vmem:[%s68 + $0x6c] sm:%s61]
          %131 = vst [vmem:[%s69 + $0x78] sm:%s61] %v130
          %v132 = vld [vmem:[%s68 + $0x7c] sm:%s61]
          %133 = vst [vmem:[%s69 + $0x7c] sm:%s61] %v132
          %v134 = vld [vmem:[%s68 + $0x80] sm:%s61]
          %135 = vst [vmem:[%s69 + $0x80] sm:%s61] %v134
          %v136 = vld [vmem:[%s68 + $0x90] sm:%s61]
          %137 = vst [vmem:[%s69 + $0x84] sm:%s61] %v136
          %v138 = vld [vmem:[%s68 + $0x84] sm:%s61]
          %139 = vst [vmem:[%s69 + $0x88] sm:%s61] %v138
          %v140 = vld [vmem:[%s68 + $0x94] sm:%s61]
          %141 = vst [vmem:[%s69 + $0x8c] sm:%s61] %v140
          %v142 = vld [vmem:[%s68 + $0x88] sm:%s61]
          %143 = vst [vmem:[%s69 + $0x90] sm:%s61] %v142
          %v144 = vld [vmem:[%s68 + $0x98] sm:%s61]
          %145 = vst [vmem:[%s69 + $0x94] sm:%s61] %v144
          %v146 = vld [vmem:[%s68 + $0x8c] sm:%s61]
          %147 = vst [vmem:[%s69 + $0x98] sm:%s61] %v146
          %v148 = vld [vmem:[%s68 + $0x9c] sm:%s61]
          %149 = vst [vmem:[%s69 + $0x9c] sm:%s61] %v148
          %v150 = vld [vmem:[%s68 + $0xa0] sm:%s61]
          %151 = vst [vmem:[%s69 + $0xa0] sm:%s61] %v150
          %v152 = vld [vmem:[%s68 + $0xb0] sm:%s61]
          %153 = vst [vmem:[%s69 + $0xa4] sm:%s61] %v152
          %v154 = vld [vmem:[%s68 + $0xa4] sm:%s61]
          %155 = vst [vmem:[%s69 + $0xa8] sm:%s61] %v154
          %v156 = vld [vmem:[%s68 + $0xb4] sm:%s61]
          %157 = vst [vmem:[%s69 + $0xac] sm:%s61] %v156
          %v158 = vld [vmem:[%s68 + $0xa8] sm:%s61]
          %159 = vst [vmem:[%s69 + $0xb0] sm:%s61] %v158
          %v160 = vld [vmem:[%s68 + $0xb8] sm:%s61]
          %161 = vst [vmem:[%s69 + $0xb4] sm:%s61] %v160
          %v162 = vld [vmem:[%s68 + $0xac] sm:%s61]
          %163 = vst [vmem:[%s69 + $0xb8] sm:%s61] %v162
          %v164 = vld [vmem:[%s68 + $0xbc] sm:%s61]
          %165 = vst [vmem:[%s69 + $0xbc] sm:%s61] %v164
          %v166 = vld [vmem:[%s68 + $0xc0] sm:%s61]
          %167 = vst [vmem:[%s69 + $0xc0] sm:%s61] %v166
          %v168 = vld [vmem:[%s68 + $0xd0] sm:%s61]
          %169 = vst [vmem:[%s69 + $0xc4] sm:%s61] %v168
          %v170 = vld [vmem:[%s68 + $0xc4] sm:%s61]
          %171 = vst [vmem:[%s69 + $0xc8] sm:%s61] %v170
          %v172 = vld [vmem:[%s68 + $0xd4] sm:%s61]
          %173 = vst [vmem:[%s69 + $0xcc] sm:%s61] %v172
          %v174 = vld [vmem:[%s68 + $0xc8] sm:%s61]
          %175 = vst [vmem:[%s69 + $0xd0] sm:%s61] %v174
          %v176 = vld [vmem:[%s68 + $0xd8] sm:%s61]
          %177 = vst [vmem:[%s69 + $0xd4] sm:%s61] %v176
          %v178 = vld [vmem:[%s68 + $0xcc] sm:%s61]
          %179 = vst [vmem:[%s69 + $0xd8] sm:%s61] %v178
          %v180 = vld [vmem:[%s68 + $0xdc] sm:%s61]
          %181 = vst [vmem:[%s69 + $0xdc] sm:%s61] %v180
          %v182 = vld [vmem:[%s68 + $0xe0] sm:%s61]
          %183 = vst [vmem:[%s69 + $0xe0] sm:%s61] %v182
          %v184 = vld [vmem:[%s68 + $0xf0] sm:%s61]
          %185 = vst [vmem:[%s69 + $0xe4] sm:%s61] %v184
          %v186 = vld [vmem:[%s68 + $0xe4] sm:%s61]
          %187 = vst [vmem:[%s69 + $0xe8] sm:%s61] %v186
          %v188 = vld [vmem:[%s68 + $0xf4] sm:%s61]
          %189 = vst [vmem:[%s69 + $0xec] sm:%s61] %v188
          %v190 = vld [vmem:[%s68 + $0xe8] sm:%s61]
          %191 = vst [vmem:[%s69 + $0xf0] sm:%s61] %v190
          %v192 = vld [vmem:[%s68 + $0xf8] sm:%s61]
          %193 = vst [vmem:[%s69 + $0xf4] sm:%s61] %v192
          %v194 = vld [vmem:[%s68 + $0xec] sm:%s61]
          %195 = vst [vmem:[%s69 + $0xf8] sm:%s61] %v194
          %v196 = vld [vmem:[%s68 + $0xfc] sm:%s61]
          %197 = vst [vmem:[%s69 + $0xfc] sm:%s61] %v196
        $region38: #{_decode_fused.1} parent=32 // loop_footer
          %s67 = sadd.s32 1, %s63
        $region39: #{_decode_fused.1} parent=32 // loop_footer_branch
          %62 = sbr.rel target = $region35
        $region40: #{_decode_fused.1} parent=32 // loop_exit
          _
      $region33: #{_decode_fused.1} parent=24 // pred_fallthru
        _
      // Predicated region
      $region59: #{_decode_fused.1} parent=24 // pred_check
        _
      $region60: #{_decode_fused.1} parent=24 // pred_check_branch
        %355 = sbr.rel (0) target = $region62
      $region61: #{_decode_fused.1} parent=24 // pred_region
        %356 = vsyncadd [#allocation5], 4096
      $region62: #{_decode_fused.1} parent=24 // pred_fallthru
        _
      %s357 = smul.u32 4, 16
      %s358 = smul.u32 %s357, 4
      %s359 = sshll.u32 %s358, 4
      %360 = dma.done [#allocation5], %s359
      %v361 = vld [vmem:[#allocation6] sm:$0xff]
      %v362 = vld [vmem:[#allocation6 + $0x8] sm:$0xff]
      %v363 = vpack.c.bf16 %v362, %v361
      %364 = vst [vmem:[#allocation3] sm:$0xff] %v363
      %v365 = vld [vmem:[#allocation9] sm:$0xff]
      %v366 = vld [vmem:[#allocation9 + $0x8] sm:$0xff]
      %367 = vst [vmem:[#allocation4] sm:$0xff] %v365
      %368 = vst [vmem:[#allocation4 + $0x8] sm:$0xff] %v366
    $region25: #{_decode_fused.1} parent=1 // pred_fallthru
      _
    %v369 = vld [vmem:[#allocation3] sm:$0xff]
    %v370 = vld [vmem:[#allocation4] sm:$0xff]
    %v371 = vld [vmem:[#allocation4 + $0x8] sm:$0xff]
    %v372 = vld [vmem:[%s0] sm:$0xff]
    %v373 = vld [vmem:[%s0 + $0x8] sm:$0xff]
    %v374 = vld [vmem:[%s0 + $0x10] sm:$0xff]
    %v375 = vld [vmem:[%s0 + $0x18] sm:$0xff]
    %v376 = vld [vmem:[%s0 + $0x20] sm:$0xff]
    %v377 = vld [vmem:[%s0 + $0x28] sm:$0xff]
    %v378 = vld [vmem:[%s0 + $0x30] sm:$0xff]
    %v379 = vld [vmem:[%s0 + $0x38] sm:$0xff]
    %v380 = vld [vmem:[#allocation2] sm:$0xff]
    %v381 = vld [vmem:[#allocation2 + $0x8] sm:$0xff]
    %v382 = vld [vmem:[#allocation2 + $0x10] sm:$0xff]
    %v383 = vld [vmem:[#allocation2 + $0x18] sm:$0xff]
    %v384 = vld [vmem:[#allocation2 + $0x20] sm:$0xff]
    %v385 = vld [vmem:[#allocation2 + $0x28] sm:$0xff]
    %v386 = vld [vmem:[#allocation2 + $0x30] sm:$0xff]
    %v387 = vld [vmem:[#allocation2 + $0x38] sm:$0xff]
    %v388 = vld [vmem:[#allocation2 + $0x40] sm:$0xff]
    %v389 = vld [vmem:[#allocation2 + $0x48] sm:$0xff]
    %v390 = vld [vmem:[#allocation2 + $0x50] sm:$0xff]
    %v391 = vld [vmem:[#allocation2 + $0x58] sm:$0xff]
    %v392 = vld [vmem:[#allocation2 + $0x60] sm:$0xff]
    %v393 = vld [vmem:[#allocation2 + $0x68] sm:$0xff]
    %v394 = vld [vmem:[#allocation2 + $0x70] sm:$0xff]
    %v395 = vld [vmem:[#allocation2 + $0x78] sm:$0xff]
    %v396 = vld [vmem:[#allocation2 + $0x80] sm:$0xff]
    %v397 = vld [vmem:[#allocation2 + $0x88] sm:$0xff]
    %v398 = vld [vmem:[#allocation2 + $0x90] sm:$0xff]
    %v399 = vld [vmem:[#allocation2 + $0x98] sm:$0xff]
    %v400 = vld [vmem:[#allocation2 + $0xa0] sm:$0xff]
    %v401 = vld [vmem:[#allocation2 + $0xa8] sm:$0xff]
    %v402 = vld [vmem:[#allocation2 + $0xb0] sm:$0xff]
    %v403 = vld [vmem:[#allocation2 + $0xb8] sm:$0xff]
    %v404 = vld [vmem:[#allocation2 + $0xc0] sm:$0xff]
    %v405 = vld [vmem:[#allocation2 + $0xc8] sm:$0xff]
    %v406 = vld [vmem:[#allocation2 + $0xd0] sm:$0xff]
    %v407 = vld [vmem:[#allocation2 + $0xd8] sm:$0xff]
    %v408 = vld [vmem:[#allocation2 + $0xe0] sm:$0xff]
    %v409 = vld [vmem:[#allocation2 + $0xe8] sm:$0xff]
    %v410 = vld [vmem:[#allocation2 + $0xf0] sm:$0xff]
    %v411 = vld [vmem:[#allocation2 + $0xf8] sm:$0xff]
    %412 = vmatprep.subr.bf16.mxu0 %v381
    %413 = vmatpush1.bf16.msra.mxu0 %v380
    %414 = vmatprep.subr.bf16.mxu0 %v385
    %415 = vmatpush1.bf16.msra.mxu0 %v384
    %416 = vmatprep.subr.bf16.mxu0 %v389
    %417 = vmatpush1.bf16.msra.mxu0 %v388
    %418 = vmatprep.subr.bf16.mxu0 %v393
    %419 = vmatpush1.bf16.msra.mxu0 %v392
    %420 = vmatprep.subr.bf16.mxu0 %v397
    %421 = vmatpush1.bf16.msra.mxu0 %v396
    %422 = vmatprep.subr.bf16.mxu0 %v401
    %423 = vmatpush1.bf16.msra.mxu0 %v400
    %424 = vmatprep.subr.bf16.mxu0 %v405
    %425 = vmatpush1.bf16.msra.mxu0 %v404
    %426 = vmatprep.subr.bf16.mxu0 %v409
    %427 = vmatpush1.bf16.msra.mxu0 %v408
    %428 = vmatprep.subr.bf16.mxu0 0
    %429 = vmatpush1.bf16.msra.mxu0 0
    %430 = vmatprep.subr.bf16.mxu0 0
    %431 = vmatpush1.bf16.msra.mxu0 0
    %432 = vmatprep.subr.bf16.mxu0 0
    %433 = vmatpush1.bf16.msra.mxu0 0
    %434 = vmatprep.subr.bf16.mxu0 0
    %435 = vmatpush1.bf16.msra.mxu0 0
    %436 = vmatprep.subr.bf16.mxu0 0
    %437 = vmatpush1.bf16.msra.mxu0 0
    %438 = vmatprep.subr.bf16.mxu0 0
    %439 = vmatpush1.bf16.msra.mxu0 0
    %440 = vmatprep.subr.bf16.mxu0 0
    %441 = vmatpush1.bf16.msra.mxu0 0
    %442 = vmatprep.subr.bf16.mxu0 0
    %443 = vmatpush1.bf16.msra.mxu0 0
    %444 = vmatprep.mubr.bf16.mxu0 0
    %445 = vmatmul.mubr.bf16.gmra.mrb[0].mxu0 %v369
    %v446 = vpop.f32.mrb[0].mxu0
    %v447 = vadd.f32 0.0, %v446
    %v448 = vpop.f32.mrb[0].mxu0
    %v449 = vadd.f32 0.0, %v448
    %v450 = vpop.f32.mrb[0].mxu0
    %v451 = vadd.f32 0.0, %v450
    %v452 = vpop.f32.mrb[0].mxu0
    %v453 = vadd.f32 0.0, %v452
    %454 = vdwg.mxu0
    %455 = vmatprep.subr.bf16.mxu0 %v383
    %456 = vmatpush1.bf16.msra.mxu0 %v382
    %457 = vmatprep.subr.bf16.mxu0 %v387
    %458 = vmatpush1.bf16.msra.mxu0 %v386
    %459 = vmatprep.subr.bf16.mxu0 %v391
    %460 = vmatpush1.bf16.msra.mxu0 %v390
    %461 = vmatprep.subr.bf16.mxu0 %v395
    %462 = vmatpush1.bf16.msra.mxu0 %v394
    %463 = vmatprep.subr.bf16.mxu0 %v399
    %464 = vmatpush1.bf16.msra.mxu0 %v398
    %465 = vmatprep.subr.bf16.mxu0 %v403
    %466 = vmatpush1.bf16.msra.mxu0 %v402
    %467 = vmatprep.subr.bf16.mxu0 %v407
    %468 = vmatpush1.bf16.msra.mxu0 %v406
    %469 = vmatprep.subr.bf16.mxu0 %v411
    %470 = vmatpush1.bf16.msra.mxu0 %v410
    %471 = vmatprep.subr.bf16.mxu0 0
    %472 = vmatpush1.bf16.msra.mxu0 0
    %473 = vmatprep.subr.bf16.mxu0 0
    %474 = vmatpush1.bf16.msra.mxu0 0
    %475 = vmatprep.subr.bf16.mxu0 0
    %476 = vmatpush1.bf16.msra.mxu0 0
    %477 = vmatprep.subr.bf16.mxu0 0
    %478 = vmatpush1.bf16.msra.mxu0 0
    %479 = vmatprep.subr.bf16.mxu0 0
    %480 = vmatpush1.bf16.msra.mxu0 0
    %481 = vmatprep.subr.bf16.mxu0 0
    %482 = vmatpush1.bf16.msra.mxu0 0
    %483 = vmatprep.subr.bf16.mxu0 0
    %484 = vmatpush1.bf16.msra.mxu0 0
    %485 = vmatprep.subr.bf16.mxu0 0
    %486 = vmatpush1.bf16.msra.mxu0 0
    %487 = vmatprep.mubr.bf16.mxu0 0
    %488 = vmatmul.mubr.bf16.gmra.mrb[0].mxu0 %v369
    %v489 = vpop.f32.mrb[0].mxu0
    %v490 = vadd.f32 0.0, %v489
    %v491 = vpop.f32.mrb[0].mxu0
    %v492 = vadd.f32 0.0, %v491
    %v493 = vpop.f32.mrb[0].mxu0
    %v494 = vadd.f32 0.0, %v493
    %v495 = vpop.f32.mrb[0].mxu0
    %v496 = vadd.f32 0.0, %v495
    %497 = vdwg.mxu0
    %v498 = vadd.f32 %v372, %v447
    %v499 = vadd.f32 %v373, %v449
    %v500 = vadd.f32 %v374, %v490
    %v501 = vadd.f32 %v375, %v492
    %v502 = vadd.f32 %v376, %v451
    %v503 = vadd.f32 %v377, %v453
    %v504 = vadd.f32 %v378, %v494
    %v505 = vadd.f32 %v379, %v496
    %v506 = vmul.f32 %v498, 0.5
    %v507 = vmul.f32 %v502, 0.5
    %v508 = vtanh.pop %v506
    %v509 = vtanh.pop %v507
    %v510 = vadd.f32 %v508, 1.0
    %v511 = vadd.f32 %v509, 1.0
    %v512 = vmul.f32 %v510, 0.5
    %v513 = vmul.f32 %v511, 0.5
    %v514 = vmul.f32 %v499, 0.5
    %v515 = vmul.f32 %v503, 0.5
    %v516 = vtanh.pop %v514
    %v517 = vtanh.pop %v515
    %v518 = vadd.f32 %v516, 1.0
    %v519 = vadd.f32 %v517, 1.0
    %v520 = vmul.f32 %v518, 0.5
    %v521 = vmul.f32 %v519, 0.5
    %v522 = vtanh.pop %v500
    %v523 = vtanh.pop %v504
    %v524 = vmul.f32 %v501, 0.5
    %v525 = vmul.f32 %v505, 0.5
    %v526 = vtanh.pop %v524
    %v527 = vtanh.pop %v525
    %v528 = vadd.f32 %v526, 1.0
    %v529 = vadd.f32 %v527, 1.0
    %v530 = vmul.f32 %v528, 0.5
    %v531 = vmul.f32 %v529, 0.5
    %v532 = vmul.f32 %v520, %v370
    %v533 = vmul.f32 %v521, %v371
    %v534 = vmul.f32 %v512, %v522
    %v535 = vmul.f32 %v513, %v523
    %v536 = vadd.f32 %v532, %v534
    %v537 = vadd.f32 %v533, %v535
    %v538 = vtanh.pop %v536
    %v539 = vtanh.pop %v537
    %v540 = vmul.f32 %v530, %v538
    %v541 = vmul.f32 %v531, %v539
    %v542 = vpack.c.bf16 %v541, %v540
    %543 = vst [vmem:[#allocation3] sm:$0xff] %v542
    %544 = vst [vmem:[#allocation4] sm:$0xff] %v536
    %545 = vst [vmem:[#allocation4 + $0x8] sm:$0xff] %v537
    %v547 = vunpack.c.l.b16 %v542
    %v548 = vunpack.c.h.b16 %v542
    %v549 = vpack.c.b16 %v547, %v547
    %v550 = vpack.c.b16 %v548, %v548
    %553 = vst [vmem:[#allocation11] sm:$0xf] %v549
    %554 = vst [vmem:[#allocation11 + $0x4] sm:$0xf] %v550
    %v555 = vld [vmem:[#allocation3] sm:$0xff]
    %v556 = vld [vmem:[#allocation4] sm:$0xff]
    %v557 = vld [vmem:[#allocation4 + $0x8] sm:$0xff]
    %s558 = scalar_lea.vmem %s0, 64
    %v559 = vld [vmem:[%s558] sm:$0xff]
    %v560 = vld [vmem:[%s558 + $0x8] sm:$0xff]
    %v561 = vld [vmem:[%s558 + $0x10] sm:$0xff]
    %v562 = vld [vmem:[%s558 + $0x18] sm:$0xff]
    %v563 = vld [vmem:[%s558 + $0x20] sm:$0xff]
    %v564 = vld [vmem:[%s558 + $0x28] sm:$0xff]
    %v565 = vld [vmem:[%s558 + $0x30] sm:$0xff]
    %v566 = vld [vmem:[%s558 + $0x38] sm:$0xff]
    %v567 = vld [vmem:[#allocation2] sm:$0xff]
    %v568 = vld [vmem:[#allocation2 + $0x8] sm:$0xff]
    %v569 = vld [vmem:[#allocation2 + $0x10] sm:$0xff]
    %v570 = vld [vmem:[#allocation2 + $0x18] sm:$0xff]
    %v571 = vld [vmem:[#allocation2 + $0x20] sm:$0xff]
    %v572 = vld [vmem:[#allocation2 + $0x28] sm:$0xff]
    %v573 = vld [vmem:[#allocation2 + $0x30] sm:$0xff]
    %v574 = vld [vmem:[#allocation2 + $0x38] sm:$0xff]
    %v575 = vld [vmem:[#allocation2 + $0x40] sm:$0xff]
    %v576 = vld [vmem:[#allocation2 + $0x48] sm:$0xff]
    %v577 = vld [vmem:[#allocation2 + $0x50] sm:$0xff]
    %v578 = vld [vmem:[#allocation2 + $0x58] sm:$0xff]
    %v579 = vld [vmem:[#allocation2 + $0x60] sm:$0xff]
    %v580 = vld [vmem:[#allocation2 + $0x68] sm:$0xff]
    %v581 = vld [vmem:[#allocation2 + $0x70] sm:$0xff]
    %v582 = vld [vmem:[#allocation2 + $0x78] sm:$0xff]
    %v583 = vld [vmem:[#allocation2 + $0x80] sm:$0xff]
    %v584 = vld [vmem:[#allocation2 + $0x88] sm:$0xff]
    %v585 = vld [vmem:[#allocation2 + $0x90] sm:$0xff]
    %v586 = vld [vmem:[#allocation2 + $0x98] sm:$0xff]
    %v587 = vld [vmem:[#allocation2 + $0xa0] sm:$0xff]
    %v588 = vld [vmem:[#allocation2 + $0xa8] sm:$0xff]
    %v589 = vld [vmem:[#allocation2 + $0xb0] sm:$0xff]
    %v590 = vld [vmem:[#allocation2 + $0xb8] sm:$0xff]
    %v591 = vld [vmem:[#allocation2 + $0xc0] sm:$0xff]
    %v592 = vld [vmem:[#allocation2 + $0xc8] sm:$0xff]
    %v593 = vld [vmem:[#allocation2 + $0xd0] sm:$0xff]
    %v594 = vld [vmem:[#allocation2 + $0xd8] sm:$0xff]
    %v595 = vld [vmem:[#allocation2 + $0xe0] sm:$0xff]
    %v596 = vld [vmem:[#allocation2 + $0xe8] sm:$0xff]
    %v597 = vld [vmem:[#allocation2 + $0xf0] sm:$0xff]
    %v598 = vld [vmem:[#allocation2 + $0xf8] sm:$0xff]
    %599 = vmatprep.subr.bf16.mxu0 %v568
    %600 = vmatpush1.bf16.msra.mxu0 %v567
    %601 = vmatprep.subr.bf16.mxu0 %v572
    %602 = vmatpush1.bf16.msra.mxu0 %v571
    %603 = vmatprep.subr.bf16.mxu0 %v576
    %604 = vmatpush1.bf16.msra.mxu0 %v575
    %605 = vmatprep.subr.bf16.mxu0 %v580
    %606 = vmatpush1.bf16.msra.mxu0 %v579
    %607 = vmatprep.subr.bf16.mxu0 %v584
    %608 = vmatpush1.bf16.msra.mxu0 %v583
    %609 = vmatprep.subr.bf16.mxu0 %v588
    %610 = vmatpush1.bf16.msra.mxu0 %v587
    %611 = vmatprep.subr.bf16.mxu0 %v592
    %612 = vmatpush1.bf16.msra.mxu0 %v591
    %613 = vmatprep.subr.bf16.mxu0 %v596
    %614 = vmatpush1.bf16.msra.mxu0 %v595
    %615 = vmatprep.subr.bf16.mxu0 0
    %616 = vmatpush1.bf16.msra.mxu0 0
    %617 = vmatprep.subr.bf16.mxu0 0
    %618 = vmatpush1.bf16.msra.mxu0 0
    %619 = vmatprep.subr.bf16.mxu0 0
    %620 = vmatpush1.bf16.msra.mxu0 0
    %621 = vmatprep.subr.bf16.mxu0 0
    %622 = vmatpush1.bf16.msra.mxu0 0
    %623 = vmatprep.subr.bf16.mxu0 0
    %624 = vmatpush1.bf16.msra.mxu0 0
    %625 = vmatprep.subr.bf16.mxu0 0
    %626 = vmatpush1.bf16.msra.mxu0 0
    %627 = vmatprep.subr.bf16.mxu0 0
    %628 = vmatpush1.bf16.msra.mxu0 0
    %629 = vmatprep.subr.bf16.mxu0 0
    %630 = vmatpush1.bf16.msra.mxu0 0
    %631 = vmatprep.mubr.bf16.mxu0 0
    %632 = vmatmul.mubr.bf16.gmra.mrb[0].mxu0 %v555
    %v633 = vpop.f32.mrb[0].mxu0
    %v634 = vadd.f32 0.0, %v633
    %v635 = vpop.f32.mrb[0].mxu0
    %v636 = vadd.f32 0.0, %v635
    %v637 = vpop.f32.mrb[0].mxu0
    %v638 = vadd.f32 0.0, %v637
    %v639 = vpop.f32.mrb[0].mxu0
    %v640 = vadd.f32 0.0, %v639
    %641 = vdwg.mxu0
    %642 = vmatprep.subr.bf16.mxu0 %v570
    %643 = vmatpush1.bf16.msra.mxu0 %v569
    %644 = vmatprep.subr.bf16.mxu0 %v574
    %645 = vmatpush1.bf16.msra.mxu0 %v573
    %646 = vmatprep.subr.bf16.mxu0 %v578
    %647 = vmatpush1.bf16.msra.mxu0 %v577
    %648 = vmatprep.subr.bf16.mxu0 %v582
    %649 = vmatpush1.bf16.msra.mxu0 %v581
    %650 = vmatprep.subr.bf16.mxu0 %v586
    %651 = vmatpush1.bf16.msra.mxu0 %v585
    %652 = vmatprep.subr.bf16.mxu0 %v590
    %653 = vmatpush1.bf16.msra.mxu0 %v589
    %654 = vmatprep.subr.bf16.mxu0 %v594
    %655 = vmatpush1.bf16.msra.mxu0 %v593
    %656 = vmatprep.subr.bf16.mxu0 %v598
    %657 = vmatpush1.bf16.msra.mxu0 %v597
    %658 = vmatprep.subr.bf16.mxu0 0
    %659 = vmatpush1.bf16.msra.mxu0 0
    %660 = vmatprep.subr.bf16.mxu0 0
    %661 = vmatpush1.bf16.msra.mxu0 0
    %662 = vmatprep.subr.bf16.mxu0 0
    %663 = vmatpush1.bf16.msra.mxu0 0
    %664 = vmatprep.subr.bf16.mxu0 0
    %665 = vmatpush1.bf16.msra.mxu0 0
    %666 = vmatprep.subr.bf16.mxu0 0
    %667 = vmatpush1.bf16.msra.mxu0 0
    %668 = vmatprep.subr.bf16.mxu0 0
    %669 = vmatpush1.bf16.msra.mxu0 0
    %670 = vmatprep.subr.bf16.mxu0 0
    %671 = vmatpush1.bf16.msra.mxu0 0
    %672 = vmatprep.subr.bf16.mxu0 0
    %673 = vmatpush1.bf16.msra.mxu0 0
    %674 = vmatprep.mubr.bf16.mxu0 0
    %675 = vmatmul.mubr.bf16.gmra.mrb[0].mxu0 %v555
    %v676 = vpop.f32.mrb[0].mxu0
    %v677 = vadd.f32 0.0, %v676
    %v678 = vpop.f32.mrb[0].mxu0
    %v679 = vadd.f32 0.0, %v678
    %v680 = vpop.f32.mrb[0].mxu0
    %v681 = vadd.f32 0.0, %v680
    %v682 = vpop.f32.mrb[0].mxu0
    %v683 = vadd.f32 0.0, %v682
    %684 = vdwg.mxu0
    %v685 = vadd.f32 %v559, %v634
    %v686 = vadd.f32 %v560, %v636
    %v687 = vadd.f32 %v561, %v677
    %v688 = vadd.f32 %v562, %v679
    %v689 = vadd.f32 %v563, %v638
    %v690 = vadd.f32 %v564, %v640
    %v691 = vadd.f32 %v565, %v681
    %v692 = vadd.f32 %v566, %v683
    %v693 = vmul.f32 %v685, 0.5
    %v694 = vmul.f32 %v689, 0.5
    %v695 = vtanh.pop %v693
    %v696 = vtanh.pop %v694
    %v697 = vadd.f32 %v695, 1.0
    %v698 = vadd.f32 %v696, 1.0
    %v699 = vmul.f32 %v697, 0.5
    %v700 = vmul.f32 %v698, 0.5
    %v701 = vmul.f32 %v686, 0.5
    %v702 = vmul.f32 %v690, 0.5
    %v703 = vtanh.pop %v701
    %v704 = vtanh.pop %v702
    %v705 = vadd.f32 %v703, 1.0
    %v706 = vadd.f32 %v704, 1.0
    %v707 = vmul.f32 %v705, 0.5
    %v708 = vmul.f32 %v706, 0.5
    %v709 = vtanh.pop %v687
    %v710 = vtanh.pop %v691
    %v711 = vmul.f32 %v688, 0.5
    %v712 = vmul.f32 %v692, 0.5
    %v713 = vtanh.pop %v711
    %v714 = vtanh.pop %v712
    %v715 = vadd.f32 %v713, 1.0
    %v716 = vadd.f32 %v714, 1.0
    %v717 = vmul.f32 %v715, 0.5
    %v718 = vmul.f32 %v716, 0.5
    %v719 = vmul.f32 %v707, %v556
    %v720 = vmul.f32 %v708, %v557
    %v721 = vmul.f32 %v699, %v709
    %v722 = vmul.f32 %v700, %v710
    %v723 = vadd.f32 %v719, %v721
    %v724 = vadd.f32 %v720, %v722
    %v725 = vtanh.pop %v723
    %v726 = vtanh.pop %v724
    %v727 = vmul.f32 %v717, %v725
    %v728 = vmul.f32 %v718, %v726
    %v729 = vpack.c.bf16 %v728, %v727
    %730 = vst [vmem:[#allocation3] sm:$0xff] %v729
    %731 = vst [vmem:[#allocation4] sm:$0xff] %v723
    %732 = vst [vmem:[#allocation4 + $0x8] sm:$0xff] %v724
    %v734 = vunpack.c.l.b16 %v729
    %v735 = vunpack.c.h.b16 %v729
    %v736 = vpack.c.b16 %v734, %v734
    %v737 = vpack.c.b16 %v735, %v735
    %s740 = scalar_lea.vmem [#allocation11], 8
    %741 = vst [vmem:[%s740] sm:$0xf] %v736
    %742 = vst [vmem:[%s740 + $0x4] sm:$0xf] %v737
    %v743 = vld [vmem:[#allocation3] sm:$0xff]
    %v744 = vld [vmem:[#allocation4] sm:$0xff]
    %v745 = vld [vmem:[#allocation4 + $0x8] sm:$0xff]
    %s746 = scalar_lea.vmem %s0, 128
    %v747 = vld [vmem:[%s746] sm:$0xff]
    %v748 = vld [vmem:[%s746 + $0x8] sm:$0xff]
    %v749 = vld [vmem:[%s746 + $0x10] sm:$0xff]
    %v750 = vld [vmem:[%s746 + $0x18] sm:$0xff]
    %v751 = vld [vmem:[%s746 + $0x20] sm:$0xff]
    %v752 = vld [vmem:[%s746 + $0x28] sm:$0xff]
    %v753 = vld [vmem:[%s746 + $0x30] sm:$0xff]
    %v754 = vld [vmem:[%s746 + $0x38] sm:$0xff]
    %v755 = vld [vmem:[#allocation2] sm:$0xff]
    %v756 = vld [vmem:[#allocation2 + $0x8] sm:$0xff]
    %v757 = vld [vmem:[#allocation2 + $0x10] sm:$0xff]
    %v758 = vld [vmem:[#allocation2 + $0x18] sm:$0xff]
    %v759 = vld [vmem:[#allocation2 + $0x20] sm:$0xff]
    %v760 = vld [vmem:[#allocation2 + $0x28] sm:$0xff]
    %v761 = vld [vmem:[#allocation2 + $0x30] sm:$0xff]
    %v762 = vld [vmem:[#allocation2 + $0x38] sm:$0xff]
    %v763 = vld [vmem:[#allocation2 + $0x40] sm:$0xff]
    %v764 = vld [vmem:[#allocation2 + $0x48] sm:$0xff]
    %v765 = vld [vmem:[#allocation2 + $0x50] sm:$0xff]
    %v766 = vld [vmem:[#allocation2 + $0x58] sm:$0xff]
    %v767 = vld [vmem:[#allocation2 + $0x60] sm:$0xff]
    %v768 = vld [vmem:[#allocation2 + $0x68] sm:$0xff]
    %v769 = vld [vmem:[#allocation2 + $0x70] sm:$0xff]
    %v770 = vld [vmem:[#allocation2 + $0x78] sm:$0xff]
    %v771 = vld [vmem:[#allocation2 + $0x80] sm:$0xff]
    %v772 = vld [vmem:[#allocation2 + $0x88] sm:$0xff]
    %v773 = vld [vmem:[#allocation2 + $0x90] sm:$0xff]
    %v774 = vld [vmem:[#allocation2 + $0x98] sm:$0xff]
    %v775 = vld [vmem:[#allocation2 + $0xa0] sm:$0xff]
    %v776 = vld [vmem:[#allocation2 + $0xa8] sm:$0xff]
    %v777 = vld [vmem:[#allocation2 + $0xb0] sm:$0xff]
    %v778 = vld [vmem:[#allocation2 + $0xb8] sm:$0xff]
    %v779 = vld [vmem:[#allocation2 + $0xc0] sm:$0xff]
    %v780 = vld [vmem:[#allocation2 + $0xc8] sm:$0xff]
    %v781 = vld [vmem:[#allocation2 + $0xd0] sm:$0xff]
    %v782 = vld [vmem:[#allocation2 + $0xd8] sm:$0xff]
    %v783 = vld [vmem:[#allocation2 + $0xe0] sm:$0xff]
    %v784 = vld [vmem:[#allocation2 + $0xe8] sm:$0xff]
    %v785 = vld [vmem:[#allocation2 + $0xf0] sm:$0xff]
    %v786 = vld [vmem:[#allocation2 + $0xf8] sm:$0xff]
    %787 = vmatprep.subr.bf16.mxu0 %v756
    %788 = vmatpush1.bf16.msra.mxu0 %v755
    %789 = vmatprep.subr.bf16.mxu0 %v760
    %790 = vmatpush1.bf16.msra.mxu0 %v759
    %791 = vmatprep.subr.bf16.mxu0 %v764
    %792 = vmatpush1.bf16.msra.mxu0 %v763
    %793 = vmatprep.subr.bf16.mxu0 %v768
    %794 = vmatpush1.bf16.msra.mxu0 %v767
    %795 = vmatprep.subr.bf16.mxu0 %v772
    %796 = vmatpush1.bf16.msra.mxu0 %v771
    %797 = vmatprep.subr.bf16.mxu0 %v776
    %798 = vmatpush1.bf16.msra.mxu0 %v775
    %799 = vmatprep.subr.bf16.mxu0 %v780
    %800 = vmatpush1.bf16.msra.mxu0 %v779
    %801 = vmatprep.subr.bf16.mxu0 %v784
    %802 = vmatpush1.bf16.msra.mxu0 %v783
    %803 = vmatprep.subr.bf16.mxu0 0
    %804 = vmatpush1.bf16.msra.mxu0 0
    %805 = vmatprep.subr.bf16.mxu0 0
    %806 = vmatpush1.bf16.msra.mxu0 0
    %807 = vmatprep.subr.bf16.mxu0 0
    %808 = vmatpush1.bf16.msra.mxu0 0
    %809 = vmatprep.subr.bf16.mxu0 0
    %810 = vmatpush1.bf16.msra.mxu0 0
    %811 = vmatprep.subr.bf16.mxu0 0
    %812 = vmatpush1.bf16.msra.mxu0 0
    %813 = vmatprep.subr.bf16.mxu0 0
    %814 = vmatpush1.bf16.msra.mxu0 0
    %815 = vmatprep.subr.bf16.mxu0 0
    %816 = vmatpush1.bf16.msra.mxu0 0
    %817 = vmatprep.subr.bf16.mxu0 0
    %818 = vmatpush1.bf16.msra.mxu0 0
    %819 = vmatprep.mubr.bf16.mxu0 0
    %820 = vmatmul.mubr.bf16.gmra.mrb[0].mxu0 %v743
    %v821 = vpop.f32.mrb[0].mxu0
    %v822 = vadd.f32 0.0, %v821
    %v823 = vpop.f32.mrb[0].mxu0
    %v824 = vadd.f32 0.0, %v823
    %v825 = vpop.f32.mrb[0].mxu0
    %v826 = vadd.f32 0.0, %v825
    %v827 = vpop.f32.mrb[0].mxu0
    %v828 = vadd.f32 0.0, %v827
    %829 = vdwg.mxu0
    %830 = vmatprep.subr.bf16.mxu0 %v758
    %831 = vmatpush1.bf16.msra.mxu0 %v757
    %832 = vmatprep.subr.bf16.mxu0 %v762
    %833 = vmatpush1.bf16.msra.mxu0 %v761
    %834 = vmatprep.subr.bf16.mxu0 %v766
    %835 = vmatpush1.bf16.msra.mxu0 %v765
    %836 = vmatprep.subr.bf16.mxu0 %v770
    %837 = vmatpush1.bf16.msra.mxu0 %v769
    %838 = vmatprep.subr.bf16.mxu0 %v774
    %839 = vmatpush1.bf16.msra.mxu0 %v773
    %840 = vmatprep.subr.bf16.mxu0 %v778
    %841 = vmatpush1.bf16.msra.mxu0 %v777
    %842 = vmatprep.subr.bf16.mxu0 %v782
    %843 = vmatpush1.bf16.msra.mxu0 %v781
    %844 = vmatprep.subr.bf16.mxu0 %v786
    %845 = vmatpush1.bf16.msra.mxu0 %v785
    %846 = vmatprep.subr.bf16.mxu0 0
    %847 = vmatpush1.bf16.msra.mxu0 0
    %848 = vmatprep.subr.bf16.mxu0 0
    %849 = vmatpush1.bf16.msra.mxu0 0
    %850 = vmatprep.subr.bf16.mxu0 0
    %851 = vmatpush1.bf16.msra.mxu0 0
    %852 = vmatprep.subr.bf16.mxu0 0
    %853 = vmatpush1.bf16.msra.mxu0 0
    %854 = vmatprep.subr.bf16.mxu0 0
    %855 = vmatpush1.bf16.msra.mxu0 0
    %856 = vmatprep.subr.bf16.mxu0 0
    %857 = vmatpush1.bf16.msra.mxu0 0
    %858 = vmatprep.subr.bf16.mxu0 0
    %859 = vmatpush1.bf16.msra.mxu0 0
    %860 = vmatprep.subr.bf16.mxu0 0
    %861 = vmatpush1.bf16.msra.mxu0 0
    %862 = vmatprep.mubr.bf16.mxu0 0
    %863 = vmatmul.mubr.bf16.gmra.mrb[0].mxu0 %v743
    %v864 = vpop.f32.mrb[0].mxu0
    %v865 = vadd.f32 0.0, %v864
    %v866 = vpop.f32.mrb[0].mxu0
    %v867 = vadd.f32 0.0, %v866
    %v868 = vpop.f32.mrb[0].mxu0
    %v869 = vadd.f32 0.0, %v868
    %v870 = vpop.f32.mrb[0].mxu0
    %v871 = vadd.f32 0.0, %v870
    %872 = vdwg.mxu0
    %v873 = vadd.f32 %v747, %v822
    %v874 = vadd.f32 %v748, %v824
    %v875 = vadd.f32 %v749, %v865
    %v876 = vadd.f32 %v750, %v867
    %v877 = vadd.f32 %v751, %v826
    %v878 = vadd.f32 %v752, %v828
    %v879 = vadd.f32 %v753, %v869
    %v880 = vadd.f32 %v754, %v871
    %v881 = vmul.f32 %v873, 0.5
    %v882 = vmul.f32 %v877, 0.5
    %v883 = vtanh.pop %v881
    %v884 = vtanh.pop %v882
    %v885 = vadd.f32 %v883, 1.0
    %v886 = vadd.f32 %v884, 1.0
    %v887 = vmul.f32 %v885, 0.5
    %v888 = vmul.f32 %v886, 0.5
    %v889 = vmul.f32 %v874, 0.5
    %v890 = vmul.f32 %v878, 0.5
    %v891 = vtanh.pop %v889
    %v892 = vtanh.pop %v890
    %v893 = vadd.f32 %v891, 1.0
    %v894 = vadd.f32 %v892, 1.0
    %v895 = vmul.f32 %v893, 0.5
    %v896 = vmul.f32 %v894, 0.5
    %v897 = vtanh.pop %v875
    %v898 = vtanh.pop %v879
    %v899 = vmul.f32 %v876, 0.5
    %v900 = vmul.f32 %v880, 0.5
    %v901 = vtanh.pop %v899
    %v902 = vtanh.pop %v900
    %v903 = vadd.f32 %v901, 1.0
    %v904 = vadd.f32 %v902, 1.0
    %v905 = vmul.f32 %v903, 0.5
    %v906 = vmul.f32 %v904, 0.5
    %v907 = vmul.f32 %v895, %v744
    %v908 = vmul.f32 %v896, %v745
    %v909 = vmul.f32 %v887, %v897
    %v910 = vmul.f32 %v888, %v898
    %v911 = vadd.f32 %v907, %v909
    %v912 = vadd.f32 %v908, %v910
    %v913 = vtanh.pop %v911
    %v914 = vtanh.pop %v912
    %v915 = vmul.f32 %v905, %v913
    %v916 = vmul.f32 %v906, %v914
    %v917 = vpack.c.bf16 %v916, %v915
    %918 = vst [vmem:[#allocation3] sm:$0xff] %v917
    %919 = vst [vmem:[#allocation4] sm:$0xff] %v911
    %920 = vst [vmem:[#allocation4 + $0x8] sm:$0xff] %v912
    %v922 = vunpack.c.l.b16 %v917
    %v923 = vunpack.c.h.b16 %v917
    %v924 = vpack.c.b16 %v922, %v922
    %v925 = vpack.c.b16 %v923, %v923
    %s928 = scalar_lea.vmem [#allocation11], 16
    %929 = vst [vmem:[%s928] sm:$0xf] %v924
    %930 = vst [vmem:[%s928 + $0x4] sm:$0xf] %v925
    %v931 = vld [vmem:[#allocation3] sm:$0xff]
    %v932 = vld [vmem:[#allocation4] sm:$0xff]
    %v933 = vld [vmem:[#allocation4 + $0x8] sm:$0xff]
    %s934 = scalar_lea.vmem %s0, 192
    %v935 = vld [vmem:[%s934] sm:$0xff]
    %v936 = vld [vmem:[%s934 + $0x8] sm:$0xff]
    %v937 = vld [vmem:[%s934 + $0x10] sm:$0xff]
    %v938 = vld [vmem:[%s934 + $0x18] sm:$0xff]
    %v939 = vld [vmem:[%s934 + $0x20] sm:$0xff]
    %v940 = vld [vmem:[%s934 + $0x28] sm:$0xff]
    %v941 = vld [vmem:[%s934 + $0x30] sm:$0xff]
    %v942 = vld [vmem:[%s934 + $0x38] sm:$0xff]
    %v943 = vld [vmem:[#allocation2] sm:$0xff]
    %v944 = vld [vmem:[#allocation2 + $0x8] sm:$0xff]
    %v945 = vld [vmem:[#allocation2 + $0x10] sm:$0xff]
    %v946 = vld [vmem:[#allocation2 + $0x18] sm:$0xff]
    %v947 = vld [vmem:[#allocation2 + $0x20] sm:$0xff]
    %v948 = vld [vmem:[#allocation2 + $0x28] sm:$0xff]
    %v949 = vld [vmem:[#allocation2 + $0x30] sm:$0xff]
    %v950 = vld [vmem:[#allocation2 + $0x38] sm:$0xff]
    %v951 = vld [vmem:[#allocation2 + $0x40] sm:$0xff]
    %v952 = vld [vmem:[#allocation2 + $0x48] sm:$0xff]
    %v953 = vld [vmem:[#allocation2 + $0x50] sm:$0xff]
    %v954 = vld [vmem:[#allocation2 + $0x58] sm:$0xff]
    %v955 = vld [vmem:[#allocation2 + $0x60] sm:$0xff]
    %v956 = vld [vmem:[#allocation2 + $0x68] sm:$0xff]
    %v957 = vld [vmem:[#allocation2 + $0x70] sm:$0xff]
    %v958 = vld [vmem:[#allocation2 + $0x78] sm:$0xff]
    %v959 = vld [vmem:[#allocation2 + $0x80] sm:$0xff]
    %v960 = vld [vmem:[#allocation2 + $0x88] sm:$0xff]
    %v961 = vld [vmem:[#allocation2 + $0x90] sm:$0xff]
    %v962 = vld [vmem:[#allocation2 + $0x98] sm:$0xff]
    %v963 = vld [vmem:[#allocation2 + $0xa0] sm:$0xff]
    %v964 = vld [vmem:[#allocation2 + $0xa8] sm:$0xff]
    %v965 = vld [vmem:[#allocation2 + $0xb0] sm:$0xff]
    %v966 = vld [vmem:[#allocation2 + $0xb8] sm:$0xff]
    %v967 = vld [vmem:[#allocation2 + $0xc0] sm:$0xff]
    %v968 = vld [vmem:[#allocation2 + $0xc8] sm:$0xff]
    %v969 = vld [vmem:[#allocation2 + $0xd0] sm:$0xff]
    %v970 = vld [vmem:[#allocation2 + $0xd8] sm:$0xff]
    %v971 = vld [vmem:[#allocation2 + $0xe0] sm:$0xff]
    %v972 = vld [vmem:[#allocation2 + $0xe8] sm:$0xff]
    %v973 = vld [vmem:[#allocation2 + $0xf0] sm:$0xff]
    %v974 = vld [vmem:[#allocation2 + $0xf8] sm:$0xff]
    %975 = vmatprep.subr.bf16.mxu0 %v944
    %976 = vmatpush1.bf16.msra.mxu0 %v943
    %977 = vmatprep.subr.bf16.mxu0 %v948
    %978 = vmatpush1.bf16.msra.mxu0 %v947
    %979 = vmatprep.subr.bf16.mxu0 %v952
    %980 = vmatpush1.bf16.msra.mxu0 %v951
    %981 = vmatprep.subr.bf16.mxu0 %v956
    %982 = vmatpush1.bf16.msra.mxu0 %v955
    %983 = vmatprep.subr.bf16.mxu0 %v960
    %984 = vmatpush1.bf16.msra.mxu0 %v959
    %985 = vmatprep.subr.bf16.mxu0 %v964
    %986 = vmatpush1.bf16.msra.mxu0 %v963
    %987 = vmatprep.subr.bf16.mxu0 %v968
    %988 = vmatpush1.bf16.msra.mxu0 %v967
    %989 = vmatprep.subr.bf16.mxu0 %v972
    %990 = vmatpush1.bf16.msra.mxu0 %v971
    %991 = vmatprep.subr.bf16.mxu0 0
    %992 = vmatpush1.bf16.msra.mxu0 0
    %993 = vmatprep.subr.bf16.mxu0 0
    %994 = vmatpush1.bf16.msra.mxu0 0
    %995 = vmatprep.subr.bf16.mxu0 0
    %996 = vmatpush1.bf16.msra.mxu0 0
    %997 = vmatprep.subr.bf16.mxu0 0
    %998 = vmatpush1.bf16.msra.mxu0 0
    %999 = vmatprep.subr.bf16.mxu0 0
    %1000 = vmatpush1.bf16.msra.mxu0 0
    %1001 = vmatprep.subr.bf16.mxu0 0
    %1002 = vmatpush1.bf16.msra.mxu0 0
    %1003 = vmatprep.subr.bf16.mxu0 0
    %1004 = vmatpush1.bf16.msra.mxu0 0
    %1005 = vmatprep.subr.bf16.mxu0 0
    %1006 = vmatpush1.bf16.msra.mxu0 0
    %1007 = vmatprep.mubr.bf16.mxu0 0
    %1008 = vmatmul.mubr.bf16.gmra.mrb[0].mxu0 %v931
    %v1009 = vpop.f32.mrb[0].mxu0
    %v1010 = vadd.f32 0.0, %v1009
    %v1011 = vpop.f32.mrb[0].mxu0
    %v1012 = vadd.f32 0.0, %v1011
    %v1013 = vpop.f32.mrb[0].mxu0
    %v1014 = vadd.f32 0.0, %v1013
    %v1015 = vpop.f32.mrb[0].mxu0
    %v1016 = vadd.f32 0.0, %v1015
    %1017 = vdwg.mxu0
    %1018 = vmatprep.subr.bf16.mxu0 %v946
    %1019 = vmatpush1.bf16.msra.mxu0 %v945
    %1020 = vmatprep.subr.bf16.mxu0 %v950
    %1021 = vmatpush1.bf16.msra.mxu0 %v949
    %1022 = vmatprep.subr.bf16.mxu0 %v954
    %1023 = vmatpush1.bf16.msra.mxu0 %v953
    %1024 = vmatprep.subr.bf16.mxu0 %v958
    %1025 = vmatpush1.bf16.msra.mxu0 %v957
    %1026 = vmatprep.subr.bf16.mxu0 %v962
    %1027 = vmatpush1.bf16.msra.mxu0 %v961
    %1028 = vmatprep.subr.bf16.mxu0 %v966
    %1029 = vmatpush1.bf16.msra.mxu0 %v965
    %1030 = vmatprep.subr.bf16.mxu0 %v970
    %1031 = vmatpush1.bf16.msra.mxu0 %v969
    %1032 = vmatprep.subr.bf16.mxu0 %v974
    %1033 = vmatpush1.bf16.msra.mxu0 %v973
    %1034 = vmatprep.subr.bf16.mxu0 0
    %1035 = vmatpush1.bf16.msra.mxu0 0
    %1036 = vmatprep.subr.bf16.mxu0 0
    %1037 = vmatpush1.bf16.msra.mxu0 0
    %1038 = vmatprep.subr.bf16.mxu0 0
    %1039 = vmatpush1.bf16.msra.mxu0 0
    %1040 = vmatprep.subr.bf16.mxu0 0
    %1041 = vmatpush1.bf16.msra.mxu0 0
    %1042 = vmatprep.subr.bf16.mxu0 0
    %1043 = vmatpush1.bf16.msra.mxu0 0
    %1044 = vmatprep.subr.bf16.mxu0 0
    %1045 = vmatpush1.bf16.msra.mxu0 0
    %1046 = vmatprep.subr.bf16.mxu0 0
    %1047 = vmatpush1.bf16.msra.mxu0 0
    %1048 = vmatprep.subr.bf16.mxu0 0
    %1049 = vmatpush1.bf16.msra.mxu0 0
    %1050 = vmatprep.mubr.bf16.mxu0 0
    %1051 = vmatmul.mubr.bf16.gmra.mrb[0].mxu0 %v931
    %v1052 = vpop.f32.mrb[0].mxu0
    %v1053 = vadd.f32 0.0, %v1052
    %v1054 = vpop.f32.mrb[0].mxu0
    %v1055 = vadd.f32 0.0, %v1054
    %v1056 = vpop.f32.mrb[0].mxu0
    %v1057 = vadd.f32 0.0, %v1056
    %v1058 = vpop.f32.mrb[0].mxu0
    %v1059 = vadd.f32 0.0, %v1058
    %1060 = vdwg.mxu0
    %v1061 = vadd.f32 %v935, %v1010
    %v1062 = vadd.f32 %v936, %v1012
    %v1063 = vadd.f32 %v937, %v1053
    %v1064 = vadd.f32 %v938, %v1055
    %v1065 = vadd.f32 %v939, %v1014
    %v1066 = vadd.f32 %v940, %v1016
    %v1067 = vadd.f32 %v941, %v1057
    %v1068 = vadd.f32 %v942, %v1059
    %v1069 = vmul.f32 %v1061, 0.5
    %v1070 = vmul.f32 %v1065, 0.5
    %v1071 = vtanh.pop %v1069
    %v1072 = vtanh.pop %v1070
    %v1073 = vadd.f32 %v1071, 1.0
    %v1074 = vadd.f32 %v1072, 1.0
    %v1075 = vmul.f32 %v1073, 0.5
    %v1076 = vmul.f32 %v1074, 0.5
    %v1077 = vmul.f32 %v1062, 0.5
    %v1078 = vmul.f32 %v1066, 0.5
    %v1079 = vtanh.pop %v1077
    %v1080 = vtanh.pop %v1078
    %v1081 = vadd.f32 %v1079, 1.0
    %v1082 = vadd.f32 %v1080, 1.0
    %v1083 = vmul.f32 %v1081, 0.5
    %v1084 = vmul.f32 %v1082, 0.5
    %v1085 = vtanh.pop %v1063
    %v1086 = vtanh.pop %v1067
    %v1087 = vmul.f32 %v1064, 0.5
    %v1088 = vmul.f32 %v1068, 0.5
    %v1089 = vtanh.pop %v1087
    %v1090 = vtanh.pop %v1088
    %v1091 = vadd.f32 %v1089, 1.0
    %v1092 = vadd.f32 %v1090, 1.0
    %v1093 = vmul.f32 %v1091, 0.5
    %v1094 = vmul.f32 %v1092, 0.5
    %v1095 = vmul.f32 %v1083, %v932
    %v1096 = vmul.f32 %v1084, %v933
    %v1097 = vmul.f32 %v1075, %v1085
    %v1098 = vmul.f32 %v1076, %v1086
    %v1099 = vadd.f32 %v1095, %v1097
    %v1100 = vadd.f32 %v1096, %v1098
    %v1101 = vtanh.pop %v1099
    %v1102 = vtanh.pop %v1100
    %v1103 = vmul.f32 %v1093, %v1101
    %v1104 = vmul.f32 %v1094, %v1102
    %v1105 = vpack.c.bf16 %v1104, %v1103
    %1106 = vst [vmem:[#allocation3] sm:$0xff] %v1105
    %1107 = vst [vmem:[#allocation4] sm:$0xff] %v1099
    %1108 = vst [vmem:[#allocation4 + $0x8] sm:$0xff] %v1100
    %v1110 = vunpack.c.l.b16 %v1105
    %v1111 = vunpack.c.h.b16 %v1105
    %v1112 = vpack.c.b16 %v1110, %v1110
    %v1113 = vpack.c.b16 %v1111, %v1111
    %s1116 = scalar_lea.vmem [#allocation11], 24
    %1117 = vst [vmem:[%s1116] sm:$0xf] %v1112
    %1118 = vst [vmem:[%s1116 + $0x4] sm:$0xf] %v1113
    %v1119 = vld [vmem:[#allocation3] sm:$0xff]
    %v1120 = vld [vmem:[#allocation4] sm:$0xff]
    %v1121 = vld [vmem:[#allocation4 + $0x8] sm:$0xff]
    %s1122 = scalar_lea.vmem %s0, 256
    %v1123 = vld [vmem:[%s1122] sm:$0xff]
    %v1124 = vld [vmem:[%s1122 + $0x8] sm:$0xff]
    %v1125 = vld [vmem:[%s1122 + $0x10] sm:$0xff]
    %v1126 = vld [vmem:[%s1122 + $0x18] sm:$0xff]
    %v1127 = vld [vmem:[%s1122 + $0x20] sm:$0xff]
    %v1128 = vld [vmem:[%s1122 + $0x28] sm:$0xff]
    %v1129 = vld [vmem:[%s1122 + $0x30] sm:$0xff]
    %v1130 = vld [vmem:[%s1122 + $0x38] sm:$0xff]
    %v1131 = vld [vmem:[#allocation2] sm:$0xff]
    %v1132 = vld [vmem:[#allocation2 + $0x8] sm:$0xff]
    %v1133 = vld [vmem:[#allocation2 + $0x10] sm:$0xff]
    %v1134 = vld [vmem:[#allocation2 + $0x18] sm:$0xff]
    %v1135 = vld [vmem:[#allocation2 + $0x20] sm:$0xff]
    %v1136 = vld [vmem:[#allocation2 + $0x28] sm:$0xff]
    %v1137 = vld [vmem:[#allocation2 + $0x30] sm:$0xff]
    %v1138 = vld [vmem:[#allocation2 + $0x38] sm:$0xff]
    %v1139 = vld [vmem:[#allocation2 + $0x40] sm:$0xff]
    %v1140 = vld [vmem:[#allocation2 + $0x48] sm:$0xff]
    %v1141 = vld [vmem:[#allocation2 + $0x50] sm:$0xff]
    %v1142 = vld [vmem:[#allocation2 + $0x58] sm:$0xff]
    %v1143 = vld [vmem:[#allocation2 + $0x60] sm:$0xff]
    %v1144 = vld [vmem:[#allocation2 + $0x68] sm:$0xff]
    %v1145 = vld [vmem:[#allocation2 + $0x70] sm:$0xff]
    %v1146 = vld [vmem:[#allocation2 + $0x78] sm:$0xff]
    %v1147 = vld [vmem:[#allocation2 + $0x80] sm:$0xff]
    %v1148 = vld [vmem:[#allocation2 + $0x88] sm:$0xff]
    %v1149 = vld [vmem:[#allocation2 + $0x90] sm:$0xff]
    %v1150 = vld [vmem:[#allocation2 + $0x98] sm:$0xff]
    %v1151 = vld [vmem:[#allocation2 + $0xa0] sm:$0xff]
    %v1152 = vld [vmem:[#allocation2 + $0xa8] sm:$0xff]
    %v1153 = vld [vmem:[#allocation2 + $0xb0] sm:$0xff]
    %v1154 = vld [vmem:[#allocation2 + $0xb8] sm:$0xff]
    %v1155 = vld [vmem:[#allocation2 + $0xc0] sm:$0xff]
    %v1156 = vld [vmem:[#allocation2 + $0xc8] sm:$0xff]
    %v1157 = vld [vmem:[#allocation2 + $0xd0] sm:$0xff]
    %v1158 = vld [vmem:[#allocation2 + $0xd8] sm:$0xff]
    %v1159 = vld [vmem:[#allocation2 + $0xe0] sm:$0xff]
    %v1160 = vld [vmem:[#allocation2 + $0xe8] sm:$0xff]
    %v1161 = vld [vmem:[#allocation2 + $0xf0] sm:$0xff]
    %v1162 = vld [vmem:[#allocation2 + $0xf8] sm:$0xff]
    %1163 = vmatprep.subr.bf16.mxu0 %v1132
    %1164 = vmatpush1.bf16.msra.mxu0 %v1131
    %1165 = vmatprep.subr.bf16.mxu0 %v1136
    %1166 = vmatpush1.bf16.msra.mxu0 %v1135
    %1167 = vmatprep.subr.bf16.mxu0 %v1140
    %1168 = vmatpush1.bf16.msra.mxu0 %v1139
    %1169 = vmatprep.subr.bf16.mxu0 %v1144
    %1170 = vmatpush1.bf16.msra.mxu0 %v1143
    %1171 = vmatprep.subr.bf16.mxu0 %v1148
    %1172 = vmatpush1.bf16.msra.mxu0 %v1147
    %1173 = vmatprep.subr.bf16.mxu0 %v1152
    %1174 = vmatpush1.bf16.msra.mxu0 %v1151
    %1175 = vmatprep.subr.bf16.mxu0 %v1156
    %1176 = vmatpush1.bf16.msra.mxu0 %v1155
    %1177 = vmatprep.subr.bf16.mxu0 %v1160
    %1178 = vmatpush1.bf16.msra.mxu0 %v1159
    %1179 = vmatprep.subr.bf16.mxu0 0
    %1180 = vmatpush1.bf16.msra.mxu0 0
    %1181 = vmatprep.subr.bf16.mxu0 0
    %1182 = vmatpush1.bf16.msra.mxu0 0
    %1183 = vmatprep.subr.bf16.mxu0 0
    %1184 = vmatpush1.bf16.msra.mxu0 0
    %1185 = vmatprep.subr.bf16.mxu0 0
    %1186 = vmatpush1.bf16.msra.mxu0 0
    %1187 = vmatprep.subr.bf16.mxu0 0
    %1188 = vmatpush1.bf16.msra.mxu0 0
    %1189 = vmatprep.subr.bf16.mxu0 0
    %1190 = vmatpush1.bf16.msra.mxu0 0
    %1191 = vmatprep.subr.bf16.mxu0 0
    %1192 = vmatpush1.bf16.msra.mxu0 0
    %1193 = vmatprep.subr.bf16.mxu0 0
    %1194 = vmatpush1.bf16.msra.mxu0 0
    %1195 = vmatprep.mubr.bf16.mxu0 0
    %1196 = vmatmul.mubr.bf16.gmra.mrb[0].mxu0 %v1119
    %v1197 = vpop.f32.mrb[0].mxu0
    %v1198 = vadd.f32 0.0, %v1197
    %v1199 = vpop.f32.mrb[0].mxu0
    %v1200 = vadd.f32 0.0, %v1199
    %v1201 = vpop.f32.mrb[0].mxu0
    %v1202 = vadd.f32 0.0, %v1201
    %v1203 = vpop.f32.mrb[0].mxu0
    %v1204 = vadd.f32 0.0, %v1203
    %1205 = vdwg.mxu0
    %1206 = vmatprep.subr.bf16.mxu0 %v1134
    %1207 = vmatpush1.bf16.msra.mxu0 %v1133
    %1208 = vmatprep.subr.bf16.mxu0 %v1138
    %1209 = vmatpush1.bf16.msra.mxu0 %v1137
    %1210 = vmatprep.subr.bf16.mxu0 %v1142
    %1211 = vmatpush1.bf16.msra.mxu0 %v1141
    %1212 = vmatprep.subr.bf16.mxu0 %v1146
    %1213 = vmatpush1.bf16.msra.mxu0 %v1145
    %1214 = vmatprep.subr.bf16.mxu0 %v1150
    %1215 = vmatpush1.bf16.msra.mxu0 %v1149
    %1216 = vmatprep.subr.bf16.mxu0 %v1154
    %1217 = vmatpush1.bf16.msra.mxu0 %v1153
    %1218 = vmatprep.subr.bf16.mxu0 %v1158
    %1219 = vmatpush1.bf16.msra.mxu0 %v1157
    %1220 = vmatprep.subr.bf16.mxu0 %v1162
    %1221 = vmatpush1.bf16.msra.mxu0 %v1161
    %1222 = vmatprep.subr.bf16.mxu0 0
    %1223 = vmatpush1.bf16.msra.mxu0 0
    %1224 = vmatprep.subr.bf16.mxu0 0
    %1225 = vmatpush1.bf16.msra.mxu0 0
    %1226 = vmatprep.subr.bf16.mxu0 0
    %1227 = vmatpush1.bf16.msra.mxu0 0
    %1228 = vmatprep.subr.bf16.mxu0 0
    %1229 = vmatpush1.bf16.msra.mxu0 0
    %1230 = vmatprep.subr.bf16.mxu0 0
    %1231 = vmatpush1.bf16.msra.mxu0 0
    %1232 = vmatprep.subr.bf16.mxu0 0
    %1233 = vmatpush1.bf16.msra.mxu0 0
    %1234 = vmatprep.subr.bf16.mxu0 0
    %1235 = vmatpush1.bf16.msra.mxu0 0
    %1236 = vmatprep.subr.bf16.mxu0 0
    %1237 = vmatpush1.bf16.msra.mxu0 0
    %1238 = vmatprep.mubr.bf16.mxu0 0
    %1239 = vmatmul.mubr.bf16.gmra.mrb[0].mxu0 %v1119
    %v1240 = vpop.f32.mrb[0].mxu0
    %v1241 = vadd.f32 0.0, %v1240
    %v1242 = vpop.f32.mrb[0].mxu0
    %v1243 = vadd.f32 0.0, %v1242
    %v1244 = vpop.f32.mrb[0].mxu0
    %v1245 = vadd.f32 0.0, %v1244
    %v1246 = vpop.f32.mrb[0].mxu0
    %v1247 = vadd.f32 0.0, %v1246
    %1248 = vdwg.mxu0
    %v1249 = vadd.f32 %v1123, %v1198
    %v1250 = vadd.f32 %v1124, %v1200
    %v1251 = vadd.f32 %v1125, %v1241
    %v1252 = vadd.f32 %v1126, %v1243
    %v1253 = vadd.f32 %v1127, %v1202
    %v1254 = vadd.f32 %v1128, %v1204
    %v1255 = vadd.f32 %v1129, %v1245
    %v1256 = vadd.f32 %v1130, %v1247
    %v1257 = vmul.f32 %v1249, 0.5
    %v1258 = vmul.f32 %v1253, 0.5
    %v1259 = vtanh.pop %v1257
    %v1260 = vtanh.pop %v1258
    %v1261 = vadd.f32 %v1259, 1.0
    %v1262 = vadd.f32 %v1260, 1.0
    %v1263 = vmul.f32 %v1261, 0.5
    %v1264 = vmul.f32 %v1262, 0.5
    %v1265 = vmul.f32 %v1250, 0.5
    %v1266 = vmul.f32 %v1254, 0.5
    %v1267 = vtanh.pop %v1265
    %v1268 = vtanh.pop %v1266
    %v1269 = vadd.f32 %v1267, 1.0
    %v1270 = vadd.f32 %v1268, 1.0
    %v1271 = vmul.f32 %v1269, 0.5
    %v1272 = vmul.f32 %v1270, 0.5
    %v1273 = vtanh.pop %v1251
    %v1274 = vtanh.pop %v1255
    %v1275 = vmul.f32 %v1252, 0.5
    %v1276 = vmul.f32 %v1256, 0.5
    %v1277 = vtanh.pop %v1275
    %v1278 = vtanh.pop %v1276
    %v1279 = vadd.f32 %v1277, 1.0
    %v1280 = vadd.f32 %v1278, 1.0
    %v1281 = vmul.f32 %v1279, 0.5
    %v1282 = vmul.f32 %v1280, 0.5
    %v1283 = vmul.f32 %v1271, %v1120
    %v1284 = vmul.f32 %v1272, %v1121
    %v1285 = vmul.f32 %v1263, %v1273
    %v1286 = vmul.f32 %v1264, %v1274
    %v1287 = vadd.f32 %v1283, %v1285
    %v1288 = vadd.f32 %v1284, %v1286
    %v1289 = vtanh.pop %v1287
    %v1290 = vtanh.pop %v1288
    %v1291 = vmul.f32 %v1281, %v1289
    %v1292 = vmul.f32 %v1282, %v1290
    %v1293 = vpack.c.bf16 %v1292, %v1291
    %1294 = vst [vmem:[#allocation3] sm:$0xff] %v1293
    %1295 = vst [vmem:[#allocation4] sm:$0xff] %v1287
    %1296 = vst [vmem:[#allocation4 + $0x8] sm:$0xff] %v1288
    %v1298 = vunpack.c.l.b16 %v1293
    %v1299 = vunpack.c.h.b16 %v1293
    %v1300 = vpack.c.b16 %v1298, %v1298
    %v1301 = vpack.c.b16 %v1299, %v1299
    %s1304 = scalar_lea.vmem [#allocation11], 32
    %1305 = vst [vmem:[%s1304] sm:$0xf] %v1300
    %1306 = vst [vmem:[%s1304 + $0x4] sm:$0xf] %v1301
    %v1307 = vld [vmem:[#allocation3] sm:$0xff]
    %v1308 = vld [vmem:[#allocation4] sm:$0xff]
    %v1309 = vld [vmem:[#allocation4 + $0x8] sm:$0xff]
    %s1310 = scalar_lea.vmem %s0, 320
    %v1311 = vld [vmem:[%s1310] sm:$0xff]
    %v1312 = vld [vmem:[%s1310 + $0x8] sm:$0xff]
    %v1313 = vld [vmem:[%s1310 + $0x10] sm:$0xff]
    %v1314 = vld [vmem:[%s1310 + $0x18] sm:$0xff]
    %v1315 = vld [vmem:[%s1310 + $0x20] sm:$0xff]
    %v1316 = vld [vmem:[%s1310 + $0x28] sm:$0xff]
    %v1317 = vld [vmem:[%s1310 + $0x30] sm:$0xff]
    %v1318 = vld [vmem:[%s1310 + $0x38] sm:$0xff]
    %v1319 = vld [vmem:[#allocation2] sm:$0xff]
    %v1320 = vld [vmem:[#allocation2 + $0x8] sm:$0xff]
    %v1321 = vld [vmem:[#allocation2 + $0x10] sm:$0xff]
    %v1322 = vld [vmem:[#allocation2 + $0x18] sm:$0xff]
    %v1323 = vld [vmem:[#allocation2 + $0x20] sm:$0xff]
    %v1324 = vld [vmem:[#allocation2 + $0x28] sm:$0xff]
    %v1325 = vld [vmem:[#allocation2 + $0x30] sm:$0xff]
    %v1326 = vld [vmem:[#allocation2 + $0x38] sm:$0xff]
    %v1327 = vld [vmem:[#allocation2 + $0x40] sm:$0xff]
    %v1328 = vld [vmem:[#allocation2 + $0x48] sm:$0xff]
    %v1329 = vld [vmem:[#allocation2 + $0x50] sm:$0xff]
    %v1330 = vld [vmem:[#allocation2 + $0x58] sm:$0xff]
    %v1331 = vld [vmem:[#allocation2 + $0x60] sm:$0xff]
    %v1332 = vld [vmem:[#allocation2 + $0x68] sm:$0xff]
    %v1333 = vld [vmem:[#allocation2 + $0x70] sm:$0xff]
    %v1334 = vld [vmem:[#allocation2 + $0x78] sm:$0xff]
    %v1335 = vld [vmem:[#allocation2 + $0x80] sm:$0xff]
    %v1336 = vld [vmem:[#allocation2 + $0x88] sm:$0xff]
    %v1337 = vld [vmem:[#allocation2 + $0x90] sm:$0xff]
    %v1338 = vld [vmem:[#allocation2 + $0x98] sm:$0xff]
    %v1339 = vld [vmem:[#allocation2 + $0xa0] sm:$0xff]
    %v1340 = vld [vmem:[#allocation2 + $0xa8] sm:$0xff]
    %v1341 = vld [vmem:[#allocation2 + $0xb0] sm:$0xff]
    %v1342 = vld [vmem:[#allocation2 + $0xb8] sm:$0xff]
    %v1343 = vld [vmem:[#allocation2 + $0xc0] sm:$0xff]
    %v1344 = vld [vmem:[#allocation2 + $0xc8] sm:$0xff]
    %v1345 = vld [vmem:[#allocation2 + $0xd0] sm:$0xff]
    %v1346 = vld [vmem:[#allocation2 + $0xd8] sm:$0xff]
    %v1347 = vld [vmem:[#allocation2 + $0xe0] sm:$0xff]
    %v1348 = vld [vmem:[#allocation2 + $0xe8] sm:$0xff]
    %v1349 = vld [vmem:[#allocation2 + $0xf0] sm:$0xff]
    %v1350 = vld [vmem:[#allocation2 + $0xf8] sm:$0xff]
    %1351 = vmatprep.subr.bf16.mxu0 %v1320
    %1352 = vmatpush1.bf16.msra.mxu0 %v1319
    %1353 = vmatprep.subr.bf16.mxu0 %v1324
    %1354 = vmatpush1.bf16.msra.mxu0 %v1323
    %1355 = vmatprep.subr.bf16.mxu0 %v1328
    %1356 = vmatpush1.bf16.msra.mxu0 %v1327
    %1357 = vmatprep.subr.bf16.mxu0 %v1332
    %1358 = vmatpush1.bf16.msra.mxu0 %v1331
    %1359 = vmatprep.subr.bf16.mxu0 %v1336
    %1360 = vmatpush1.bf16.msra.mxu0 %v1335
    %1361 = vmatprep.subr.bf16.mxu0 %v1340
    %1362 = vmatpush1.bf16.msra.mxu0 %v1339
    %1363 = vmatprep.subr.bf16.mxu0 %v1344
    %1364 = vmatpush1.bf16.msra.mxu0 %v1343
    %1365 = vmatprep.subr.bf16.mxu0 %v1348
    %1366 = vmatpush1.bf16.msra.mxu0 %v1347
    %1367 = vmatprep.subr.bf16.mxu0 0
    %1368 = vmatpush1.bf16.msra.mxu0 0
    %1369 = vmatprep.subr.bf16.mxu0 0
    %1370 = vmatpush1.bf16.msra.mxu0 0
    %1371 = vmatprep.subr.bf16.mxu0 0
    %1372 = vmatpush1.bf16.msra.mxu0 0
    %1373 = vmatprep.subr.bf16.mxu0 0
    %1374 = vmatpush1.bf16.msra.mxu0 0
    %1375 = vmatprep.subr.bf16.mxu0 0
    %1376 = vmatpush1.bf16.msra.mxu0 0
    %1377 = vmatprep.subr.bf16.mxu0 0
    %1378 = vmatpush1.bf16.msra.mxu0 0
    %1379 = vmatprep.subr.bf16.mxu0 0
    %1380 = vmatpush1.bf16.msra.mxu0 0
    %1381 = vmatprep.subr.bf16.mxu0 0
    %1382 = vmatpush1.bf16.msra.mxu0 0
    %1383 = vmatprep.mubr.bf16.mxu0 0
    %1384 = vmatmul.mubr.bf16.gmra.mrb[0].mxu0 %v1307
    %v1385 = vpop.f32.mrb[0].mxu0
    %v1386 = vadd.f32 0.0, %v1385
    %v1387 = vpop.f32.mrb[0].mxu0
    %v1388 = vadd.f32 0.0, %v1387
    %v1389 = vpop.f32.mrb[0].mxu0
    %v1390 = vadd.f32 0.0, %v1389
    %v1391 = vpop.f32.mrb[0].mxu0
    %v1392 = vadd.f32 0.0, %v1391
    %1393 = vdwg.mxu0
    %1394 = vmatprep.subr.bf16.mxu0 %v1322
    %1395 = vmatpush1.bf16.msra.mxu0 %v1321
    %1396 = vmatprep.subr.bf16.mxu0 %v1326
    %1397 = vmatpush1.bf16.msra.mxu0 %v1325
    %1398 = vmatprep.subr.bf16.mxu0 %v1330
    %1399 = vmatpush1.bf16.msra.mxu0 %v1329
    %1400 = vmatprep.subr.bf16.mxu0 %v1334
    %1401 = vmatpush1.bf16.msra.mxu0 %v1333
    %1402 = vmatprep.subr.bf16.mxu0 %v1338
    %1403 = vmatpush1.bf16.msra.mxu0 %v1337
    %1404 = vmatprep.subr.bf16.mxu0 %v1342
    %1405 = vmatpush1.bf16.msra.mxu0 %v1341
    %1406 = vmatprep.subr.bf16.mxu0 %v1346
    %1407 = vmatpush1.bf16.msra.mxu0 %v1345
    %1408 = vmatprep.subr.bf16.mxu0 %v1350
    %1409 = vmatpush1.bf16.msra.mxu0 %v1349
    %1410 = vmatprep.subr.bf16.mxu0 0
    %1411 = vmatpush1.bf16.msra.mxu0 0
    %1412 = vmatprep.subr.bf16.mxu0 0
    %1413 = vmatpush1.bf16.msra.mxu0 0
    %1414 = vmatprep.subr.bf16.mxu0 0
    %1415 = vmatpush1.bf16.msra.mxu0 0
    %1416 = vmatprep.subr.bf16.mxu0 0
    %1417 = vmatpush1.bf16.msra.mxu0 0
    %1418 = vmatprep.subr.bf16.mxu0 0
    %1419 = vmatpush1.bf16.msra.mxu0 0
    %1420 = vmatprep.subr.bf16.mxu0 0
    %1421 = vmatpush1.bf16.msra.mxu0 0
    %1422 = vmatprep.subr.bf16.mxu0 0
    %1423 = vmatpush1.bf16.msra.mxu0 0
    %1424 = vmatprep.subr.bf16.mxu0 0
    %1425 = vmatpush1.bf16.msra.mxu0 0
    %1426 = vmatprep.mubr.bf16.mxu0 0
    %1427 = vmatmul.mubr.bf16.gmra.mrb[0].mxu0 %v1307
    %v1428 = vpop.f32.mrb[0].mxu0
    %v1429 = vadd.f32 0.0, %v1428
    %v1430 = vpop.f32.mrb[0].mxu0
    %v1431 = vadd.f32 0.0, %v1430
    %v1432 = vpop.f32.mrb[0].mxu0
    %v1433 = vadd.f32 0.0, %v1432
    %v1434 = vpop.f32.mrb[0].mxu0
    %v1435 = vadd.f32 0.0, %v1434
    %1436 = vdwg.mxu0
    %v1437 = vadd.f32 %v1311, %v1386
    %v1438 = vadd.f32 %v1312, %v1388
    %v1439 = vadd.f32 %v1313, %v1429
    %v1440 = vadd.f32 %v1314, %v1431
    %v1441 = vadd.f32 %v1315, %v1390
    %v1442 = vadd.f32 %v1316, %v1392
    %v1443 = vadd.f32 %v1317, %v1433
    %v1444 = vadd.f32 %v1318, %v1435
    %v1445 = vmul.f32 %v1437, 0.5
    %v1446 = vmul.f32 %v1441, 0.5
    %v1447 = vtanh.pop %v1445
    %v1448 = vtanh.pop %v1446
    %v1449 = vadd.f32 %v1447, 1.0
    %v1450 = vadd.f32 %v1448, 1.0
    %v1451 = vmul.f32 %v1449, 0.5
    %v1452 = vmul.f32 %v1450, 0.5
    %v1453 = vmul.f32 %v1438, 0.5
    %v1454 = vmul.f32 %v1442, 0.5
    %v1455 = vtanh.pop %v1453
    %v1456 = vtanh.pop %v1454
    %v1457 = vadd.f32 %v1455, 1.0
    %v1458 = vadd.f32 %v1456, 1.0
    %v1459 = vmul.f32 %v1457, 0.5
    %v1460 = vmul.f32 %v1458, 0.5
    %v1461 = vtanh.pop %v1439
    %v1462 = vtanh.pop %v1443
    %v1463 = vmul.f32 %v1440, 0.5
    %v1464 = vmul.f32 %v1444, 0.5
    %v1465 = vtanh.pop %v1463
    %v1466 = vtanh.pop %v1464
    %v1467 = vadd.f32 %v1465, 1.0
    %v1468 = vadd.f32 %v1466, 1.0
    %v1469 = vmul.f32 %v1467, 0.5
    %v1470 = vmul.f32 %v1468, 0.5
    %v1471 = vmul.f32 %v1459, %v1308
    %v1472 = vmul.f32 %v1460, %v1309
    %v1473 = vmul.f32 %v1451, %v1461
    %v1474 = vmul.f32 %v1452, %v1462
    %v1475 = vadd.f32 %v1471, %v1473
    %v1476 = vadd.f32 %v1472, %v1474
    %v1477 = vtanh.pop %v1475
    %v1478 = vtanh.pop %v1476
    %v1479 = vmul.f32 %v1469, %v1477
    %v1480 = vmul.f32 %v1470, %v1478
    %v1481 = vpack.c.bf16 %v1480, %v1479
    %1482 = vst [vmem:[#allocation3] sm:$0xff] %v1481
    %1483 = vst [vmem:[#allocation4] sm:$0xff] %v1475
    %1484 = vst [vmem:[#allocation4 + $0x8] sm:$0xff] %v1476
    %v1486 = vunpack.c.l.b16 %v1481
    %v1487 = vunpack.c.h.b16 %v1481
    %v1488 = vpack.c.b16 %v1486, %v1486
    %v1489 = vpack.c.b16 %v1487, %v1487
    %s1492 = scalar_lea.vmem [#allocation11], 40
    %1493 = vst [vmem:[%s1492] sm:$0xf] %v1488
    %1494 = vst [vmem:[%s1492 + $0x4] sm:$0xf] %v1489
    %v1495 = vld [vmem:[#allocation3] sm:$0xff]
    %v1496 = vld [vmem:[#allocation4] sm:$0xff]
    %v1497 = vld [vmem:[#allocation4 + $0x8] sm:$0xff]
    %s1498 = scalar_lea.vmem %s0, 384
    %v1499 = vld [vmem:[%s1498] sm:$0xff]
    %v1500 = vld [vmem:[%s1498 + $0x8] sm:$0xff]
    %v1501 = vld [vmem:[%s1498 + $0x10] sm:$0xff]
    %v1502 = vld [vmem:[%s1498 + $0x18] sm:$0xff]
    %v1503 = vld [vmem:[%s1498 + $0x20] sm:$0xff]
    %v1504 = vld [vmem:[%s1498 + $0x28] sm:$0xff]
    %v1505 = vld [vmem:[%s1498 + $0x30] sm:$0xff]
    %v1506 = vld [vmem:[%s1498 + $0x38] sm:$0xff]
    %v1507 = vld [vmem:[#allocation2] sm:$0xff]
    %v1508 = vld [vmem:[#allocation2 + $0x8] sm:$0xff]
    %v1509 = vld [vmem:[#allocation2 + $0x10] sm:$0xff]
    %v1510 = vld [vmem:[#allocation2 + $0x18] sm:$0xff]
    %v1511 = vld [vmem:[#allocation2 + $0x20] sm:$0xff]
    %v1512 = vld [vmem:[#allocation2 + $0x28] sm:$0xff]
    %v1513 = vld [vmem:[#allocation2 + $0x30] sm:$0xff]
    %v1514 = vld [vmem:[#allocation2 + $0x38] sm:$0xff]
    %v1515 = vld [vmem:[#allocation2 + $0x40] sm:$0xff]
    %v1516 = vld [vmem:[#allocation2 + $0x48] sm:$0xff]
    %v1517 = vld [vmem:[#allocation2 + $0x50] sm:$0xff]
    %v1518 = vld [vmem:[#allocation2 + $0x58] sm:$0xff]
    %v1519 = vld [vmem:[#allocation2 + $0x60] sm:$0xff]
    %v1520 = vld [vmem:[#allocation2 + $0x68] sm:$0xff]
    %v1521 = vld [vmem:[#allocation2 + $0x70] sm:$0xff]
    %v1522 = vld [vmem:[#allocation2 + $0x78] sm:$0xff]
    %v1523 = vld [vmem:[#allocation2 + $0x80] sm:$0xff]
    %v1524 = vld [vmem:[#allocation2 + $0x88] sm:$0xff]
    %v1525 = vld [vmem:[#allocation2 + $0x90] sm:$0xff]
    %v1526 = vld [vmem:[#allocation2 + $0x98] sm:$0xff]
    %v1527 = vld [vmem:[#allocation2 + $0xa0] sm:$0xff]
    %v1528 = vld [vmem:[#allocation2 + $0xa8] sm:$0xff]
    %v1529 = vld [vmem:[#allocation2 + $0xb0] sm:$0xff]
    %v1530 = vld [vmem:[#allocation2 + $0xb8] sm:$0xff]
    %v1531 = vld [vmem:[#allocation2 + $0xc0] sm:$0xff]
    %v1532 = vld [vmem:[#allocation2 + $0xc8] sm:$0xff]
    %v1533 = vld [vmem:[#allocation2 + $0xd0] sm:$0xff]
    %v1534 = vld [vmem:[#allocation2 + $0xd8] sm:$0xff]
    %v1535 = vld [vmem:[#allocation2 + $0xe0] sm:$0xff]
    %v1536 = vld [vmem:[#allocation2 + $0xe8] sm:$0xff]
    %v1537 = vld [vmem:[#allocation2 + $0xf0] sm:$0xff]
    %v1538 = vld [vmem:[#allocation2 + $0xf8] sm:$0xff]
    %1539 = vmatprep.subr.bf16.mxu0 %v1508
    %1540 = vmatpush1.bf16.msra.mxu0 %v1507
    %1541 = vmatprep.subr.bf16.mxu0 %v1512
    %1542 = vmatpush1.bf16.msra.mxu0 %v1511
    %1543 = vmatprep.subr.bf16.mxu0 %v1516
    %1544 = vmatpush1.bf16.msra.mxu0 %v1515
    %1545 = vmatprep.subr.bf16.mxu0 %v1520
    %1546 = vmatpush1.bf16.msra.mxu0 %v1519
    %1547 = vmatprep.subr.bf16.mxu0 %v1524
    %1548 = vmatpush1.bf16.msra.mxu0 %v1523
    %1549 = vmatprep.subr.bf16.mxu0 %v1528
    %1550 = vmatpush1.bf16.msra.mxu0 %v1527
    %1551 = vmatprep.subr.bf16.mxu0 %v1532
    %1552 = vmatpush1.bf16.msra.mxu0 %v1531
    %1553 = vmatprep.subr.bf16.mxu0 %v1536
    %1554 = vmatpush1.bf16.msra.mxu0 %v1535
    %1555 = vmatprep.subr.bf16.mxu0 0
    %1556 = vmatpush1.bf16.msra.mxu0 0
    %1557 = vmatprep.subr.bf16.mxu0 0
    %1558 = vmatpush1.bf16.msra.mxu0 0
    %1559 = vmatprep.subr.bf16.mxu0 0
    %1560 = vmatpush1.bf16.msra.mxu0 0
    %1561 = vmatprep.subr.bf16.mxu0 0
    %1562 = vmatpush1.bf16.msra.mxu0 0
    %1563 = vmatprep.subr.bf16.mxu0 0
    %1564 = vmatpush1.bf16.msra.mxu0 0
    %1565 = vmatprep.subr.bf16.mxu0 0
    %1566 = vmatpush1.bf16.msra.mxu0 0
    %1567 = vmatprep.subr.bf16.mxu0 0
    %1568 = vmatpush1.bf16.msra.mxu0 0
    %1569 = vmatprep.subr.bf16.mxu0 0
    %1570 = vmatpush1.bf16.msra.mxu0 0
    %1571 = vmatprep.mubr.bf16.mxu0 0
    %1572 = vmatmul.mubr.bf16.gmra.mrb[0].mxu0 %v1495
    %v1573 = vpop.f32.mrb[0].mxu0
    %v1574 = vadd.f32 0.0, %v1573
    %v1575 = vpop.f32.mrb[0].mxu0
    %v1576 = vadd.f32 0.0, %v1575
    %v1577 = vpop.f32.mrb[0].mxu0
    %v1578 = vadd.f32 0.0, %v1577
    %v1579 = vpop.f32.mrb[0].mxu0
    %v1580 = vadd.f32 0.0, %v1579
    %1581 = vdwg.mxu0
    %1582 = vmatprep.subr.bf16.mxu0 %v1510
    %1583 = vmatpush1.bf16.msra.mxu0 %v1509
    %1584 = vmatprep.subr.bf16.mxu0 %v1514
    %1585 = vmatpush1.bf16.msra.mxu0 %v1513
    %1586 = vmatprep.subr.bf16.mxu0 %v1518
    %1587 = vmatpush1.bf16.msra.mxu0 %v1517
    %1588 = vmatprep.subr.bf16.mxu0 %v1522
    %1589 = vmatpush1.bf16.msra.mxu0 %v1521
    %1590 = vmatprep.subr.bf16.mxu0 %v1526
    %1591 = vmatpush1.bf16.msra.mxu0 %v1525
    %1592 = vmatprep.subr.bf16.mxu0 %v1530
    %1593 = vmatpush1.bf16.msra.mxu0 %v1529
    %1594 = vmatprep.subr.bf16.mxu0 %v1534
    %1595 = vmatpush1.bf16.msra.mxu0 %v1533
    %1596 = vmatprep.subr.bf16.mxu0 %v1538
    %1597 = vmatpush1.bf16.msra.mxu0 %v1537
    %1598 = vmatprep.subr.bf16.mxu0 0
    %1599 = vmatpush1.bf16.msra.mxu0 0
    %1600 = vmatprep.subr.bf16.mxu0 0
    %1601 = vmatpush1.bf16.msra.mxu0 0
    %1602 = vmatprep.subr.bf16.mxu0 0
    %1603 = vmatpush1.bf16.msra.mxu0 0
    %1604 = vmatprep.subr.bf16.mxu0 0
    %1605 = vmatpush1.bf16.msra.mxu0 0
    %1606 = vmatprep.subr.bf16.mxu0 0
    %1607 = vmatpush1.bf16.msra.mxu0 0
    %1608 = vmatprep.subr.bf16.mxu0 0
    %1609 = vmatpush1.bf16.msra.mxu0 0
    %1610 = vmatprep.subr.bf16.mxu0 0
    %1611 = vmatpush1.bf16.msra.mxu0 0
    %1612 = vmatprep.subr.bf16.mxu0 0
    %1613 = vmatpush1.bf16.msra.mxu0 0
    %1614 = vmatprep.mubr.bf16.mxu0 0
    %1615 = vmatmul.mubr.bf16.gmra.mrb[0].mxu0 %v1495
    %v1616 = vpop.f32.mrb[0].mxu0
    %v1617 = vadd.f32 0.0, %v1616
    %v1618 = vpop.f32.mrb[0].mxu0
    %v1619 = vadd.f32 0.0, %v1618
    %v1620 = vpop.f32.mrb[0].mxu0
    %v1621 = vadd.f32 0.0, %v1620
    %v1622 = vpop.f32.mrb[0].mxu0
    %v1623 = vadd.f32 0.0, %v1622
    %1624 = vdwg.mxu0
    %v1625 = vadd.f32 %v1499, %v1574
    %v1626 = vadd.f32 %v1500, %v1576
    %v1627 = vadd.f32 %v1501, %v1617
    %v1628 = vadd.f32 %v1502, %v1619
    %v1629 = vadd.f32 %v1503, %v1578
    %v1630 = vadd.f32 %v1504, %v1580
    %v1631 = vadd.f32 %v1505, %v1621
    %v1632 = vadd.f32 %v1506, %v1623
    %v1633 = vmul.f32 %v1625, 0.5
    %v1634 = vmul.f32 %v1629, 0.5
    %v1635 = vtanh.pop %v1633
    %v1636 = vtanh.pop %v1634
    %v1637 = vadd.f32 %v1635, 1.0
    %v1638 = vadd.f32 %v1636, 1.0
    %v1639 = vmul.f32 %v1637, 0.5
    %v1640 = vmul.f32 %v1638, 0.5
    %v1641 = vmul.f32 %v1626, 0.5
    %v1642 = vmul.f32 %v1630, 0.5
    %v1643 = vtanh.pop %v1641
    %v1644 = vtanh.pop %v1642
    %v1645 = vadd.f32 %v1643, 1.0
    %v1646 = vadd.f32 %v1644, 1.0
    %v1647 = vmul.f32 %v1645, 0.5
    %v1648 = vmul.f32 %v1646, 0.5
    %v1649 = vtanh.pop %v1627
    %v1650 = vtanh.pop %v1631
    %v1651 = vmul.f32 %v1628, 0.5
    %v1652 = vmul.f32 %v1632, 0.5
    %v1653 = vtanh.pop %v1651
    %v1654 = vtanh.pop %v1652
    %v1655 = vadd.f32 %v1653, 1.0
    %v1656 = vadd.f32 %v1654, 1.0
    %v1657 = vmul.f32 %v1655, 0.5
    %v1658 = vmul.f32 %v1656, 0.5
    %v1659 = vmul.f32 %v1647, %v1496
    %v1660 = vmul.f32 %v1648, %v1497
    %v1661 = vmul.f32 %v1639, %v1649
    %v1662 = vmul.f32 %v1640, %v1650
    %v1663 = vadd.f32 %v1659, %v1661
    %v1664 = vadd.f32 %v1660, %v1662
    %v1665 = vtanh.pop %v1663
    %v1666 = vtanh.pop %v1664
    %v1667 = vmul.f32 %v1657, %v1665
    %v1668 = vmul.f32 %v1658, %v1666
    %v1669 = vpack.c.bf16 %v1668, %v1667
    %1670 = vst [vmem:[#allocation3] sm:$0xff] %v1669
    %1671 = vst [vmem:[#allocation4] sm:$0xff] %v1663
    %1672 = vst [vmem:[#allocation4 + $0x8] sm:$0xff] %v1664
    %v1674 = vunpack.c.l.b16 %v1669
    %v1675 = vunpack.c.h.b16 %v1669
    %v1676 = vpack.c.b16 %v1674, %v1674
    %v1677 = vpack.c.b16 %v1675, %v1675
    %s1680 = scalar_lea.vmem [#allocation11], 48
    %1681 = vst [vmem:[%s1680] sm:$0xf] %v1676
    %1682 = vst [vmem:[%s1680 + $0x4] sm:$0xf] %v1677
    %v1683 = vld [vmem:[#allocation3] sm:$0xff]
    %v1684 = vld [vmem:[#allocation4] sm:$0xff]
    %v1685 = vld [vmem:[#allocation4 + $0x8] sm:$0xff]
    %s1686 = scalar_lea.vmem %s0, 448
    %v1687 = vld [vmem:[%s1686] sm:$0xff]
    %v1688 = vld [vmem:[%s1686 + $0x8] sm:$0xff]
    %v1689 = vld [vmem:[%s1686 + $0x10] sm:$0xff]
    %v1690 = vld [vmem:[%s1686 + $0x18] sm:$0xff]
    %v1691 = vld [vmem:[%s1686 + $0x20] sm:$0xff]
    %v1692 = vld [vmem:[%s1686 + $0x28] sm:$0xff]
    %v1693 = vld [vmem:[%s1686 + $0x30] sm:$0xff]
    %v1694 = vld [vmem:[%s1686 + $0x38] sm:$0xff]
    %v1695 = vld [vmem:[#allocation2] sm:$0xff]
    %v1696 = vld [vmem:[#allocation2 + $0x8] sm:$0xff]
    %v1697 = vld [vmem:[#allocation2 + $0x10] sm:$0xff]
    %v1698 = vld [vmem:[#allocation2 + $0x18] sm:$0xff]
    %v1699 = vld [vmem:[#allocation2 + $0x20] sm:$0xff]
    %v1700 = vld [vmem:[#allocation2 + $0x28] sm:$0xff]
    %v1701 = vld [vmem:[#allocation2 + $0x30] sm:$0xff]
    %v1702 = vld [vmem:[#allocation2 + $0x38] sm:$0xff]
    %v1703 = vld [vmem:[#allocation2 + $0x40] sm:$0xff]
    %v1704 = vld [vmem:[#allocation2 + $0x48] sm:$0xff]
    %v1705 = vld [vmem:[#allocation2 + $0x50] sm:$0xff]
    %v1706 = vld [vmem:[#allocation2 + $0x58] sm:$0xff]
    %v1707 = vld [vmem:[#allocation2 + $0x60] sm:$0xff]
    %v1708 = vld [vmem:[#allocation2 + $0x68] sm:$0xff]
    %v1709 = vld [vmem:[#allocation2 + $0x70] sm:$0xff]
    %v1710 = vld [vmem:[#allocation2 + $0x78] sm:$0xff]
    %v1711 = vld [vmem:[#allocation2 + $0x80] sm:$0xff]
    %v1712 = vld [vmem:[#allocation2 + $0x88] sm:$0xff]
    %v1713 = vld [vmem:[#allocation2 + $0x90] sm:$0xff]
    %v1714 = vld [vmem:[#allocation2 + $0x98] sm:$0xff]
    %v1715 = vld [vmem:[#allocation2 + $0xa0] sm:$0xff]
    %v1716 = vld [vmem:[#allocation2 + $0xa8] sm:$0xff]
    %v1717 = vld [vmem:[#allocation2 + $0xb0] sm:$0xff]
    %v1718 = vld [vmem:[#allocation2 + $0xb8] sm:$0xff]
    %v1719 = vld [vmem:[#allocation2 + $0xc0] sm:$0xff]
    %v1720 = vld [vmem:[#allocation2 + $0xc8] sm:$0xff]
    %v1721 = vld [vmem:[#allocation2 + $0xd0] sm:$0xff]
    %v1722 = vld [vmem:[#allocation2 + $0xd8] sm:$0xff]
    %v1723 = vld [vmem:[#allocation2 + $0xe0] sm:$0xff]
    %v1724 = vld [vmem:[#allocation2 + $0xe8] sm:$0xff]
    %v1725 = vld [vmem:[#allocation2 + $0xf0] sm:$0xff]
    %v1726 = vld [vmem:[#allocation2 + $0xf8] sm:$0xff]
    %1727 = vmatprep.subr.bf16.mxu0 %v1696
    %1728 = vmatpush1.bf16.msra.mxu0 %v1695
    %1729 = vmatprep.subr.bf16.mxu0 %v1700
    %1730 = vmatpush1.bf16.msra.mxu0 %v1699
    %1731 = vmatprep.subr.bf16.mxu0 %v1704
    %1732 = vmatpush1.bf16.msra.mxu0 %v1703
    %1733 = vmatprep.subr.bf16.mxu0 %v1708
    %1734 = vmatpush1.bf16.msra.mxu0 %v1707
    %1735 = vmatprep.subr.bf16.mxu0 %v1712
    %1736 = vmatpush1.bf16.msra.mxu0 %v1711
    %1737 = vmatprep.subr.bf16.mxu0 %v1716
    %1738 = vmatpush1.bf16.msra.mxu0 %v1715
    %1739 = vmatprep.subr.bf16.mxu0 %v1720
    %1740 = vmatpush1.bf16.msra.mxu0 %v1719
    %1741 = vmatprep.subr.bf16.mxu0 %v1724
    %1742 = vmatpush1.bf16.msra.mxu0 %v1723
    %1743 = vmatprep.subr.bf16.mxu0 0
    %1744 = vmatpush1.bf16.msra.mxu0 0
    %1745 = vmatprep.subr.bf16.mxu0 0
    %1746 = vmatpush1.bf16.msra.mxu0 0
    %1747 = vmatprep.subr.bf16.mxu0 0
    %1748 = vmatpush1.bf16.msra.mxu0 0
    %1749 = vmatprep.subr.bf16.mxu0 0
    %1750 = vmatpush1.bf16.msra.mxu0 0
    %1751 = vmatprep.subr.bf16.mxu0 0
    %1752 = vmatpush1.bf16.msra.mxu0 0
    %1753 = vmatprep.subr.bf16.mxu0 0
    %1754 = vmatpush1.bf16.msra.mxu0 0
    %1755 = vmatprep.subr.bf16.mxu0 0
    %1756 = vmatpush1.bf16.msra.mxu0 0
    %1757 = vmatprep.subr.bf16.mxu0 0
    %1758 = vmatpush1.bf16.msra.mxu0 0
    %1759 = vmatprep.mubr.bf16.mxu0 0
    %1760 = vmatmul.mubr.bf16.gmra.mrb[0].mxu0 %v1683
    %v1761 = vpop.f32.mrb[0].mxu0
    %v1762 = vadd.f32 0.0, %v1761
    %v1763 = vpop.f32.mrb[0].mxu0
    %v1764 = vadd.f32 0.0, %v1763
    %v1765 = vpop.f32.mrb[0].mxu0
    %v1766 = vadd.f32 0.0, %v1765
    %v1767 = vpop.f32.mrb[0].mxu0
    %v1768 = vadd.f32 0.0, %v1767
    %1769 = vdwg.mxu0
    %1770 = vmatprep.subr.bf16.mxu0 %v1698
    %1771 = vmatpush1.bf16.msra.mxu0 %v1697
    %1772 = vmatprep.subr.bf16.mxu0 %v1702
    %1773 = vmatpush1.bf16.msra.mxu0 %v1701
    %1774 = vmatprep.subr.bf16.mxu0 %v1706
    %1775 = vmatpush1.bf16.msra.mxu0 %v1705
    %1776 = vmatprep.subr.bf16.mxu0 %v1710
    %1777 = vmatpush1.bf16.msra.mxu0 %v1709
    %1778 = vmatprep.subr.bf16.mxu0 %v1714
    %1779 = vmatpush1.bf16.msra.mxu0 %v1713
    %1780 = vmatprep.subr.bf16.mxu0 %v1718
    %1781 = vmatpush1.bf16.msra.mxu0 %v1717
    %1782 = vmatprep.subr.bf16.mxu0 %v1722
    %1783 = vmatpush1.bf16.msra.mxu0 %v1721
    %1784 = vmatprep.subr.bf16.mxu0 %v1726
    %1785 = vmatpush1.bf16.msra.mxu0 %v1725
    %1786 = vmatprep.subr.bf16.mxu0 0
    %1787 = vmatpush1.bf16.msra.mxu0 0
    %1788 = vmatprep.subr.bf16.mxu0 0
    %1789 = vmatpush1.bf16.msra.mxu0 0
    %1790 = vmatprep.subr.bf16.mxu0 0
    %1791 = vmatpush1.bf16.msra.mxu0 0
    %1792 = vmatprep.subr.bf16.mxu0 0
    %1793 = vmatpush1.bf16.msra.mxu0 0
    %1794 = vmatprep.subr.bf16.mxu0 0
    %1795 = vmatpush1.bf16.msra.mxu0 0
    %1796 = vmatprep.subr.bf16.mxu0 0
    %1797 = vmatpush1.bf16.msra.mxu0 0
    %1798 = vmatprep.subr.bf16.mxu0 0
    %1799 = vmatpush1.bf16.msra.mxu0 0
    %1800 = vmatprep.subr.bf16.mxu0 0
    %1801 = vmatpush1.bf16.msra.mxu0 0
    %1802 = vmatprep.mubr.bf16.mxu0 0
    %1803 = vmatmul.mubr.bf16.gmra.mrb[0].mxu0 %v1683
    %v1804 = vpop.f32.mrb[0].mxu0
    %v1805 = vadd.f32 0.0, %v1804
    %v1806 = vpop.f32.mrb[0].mxu0
    %v1807 = vadd.f32 0.0, %v1806
    %v1808 = vpop.f32.mrb[0].mxu0
    %v1809 = vadd.f32 0.0, %v1808
    %v1810 = vpop.f32.mrb[0].mxu0
    %v1811 = vadd.f32 0.0, %v1810
    %1812 = vdwg.mxu0
    %v1813 = vadd.f32 %v1687, %v1762
    %v1814 = vadd.f32 %v1688, %v1764
    %v1815 = vadd.f32 %v1689, %v1805
    %v1816 = vadd.f32 %v1690, %v1807
    %v1817 = vadd.f32 %v1691, %v1766
    %v1818 = vadd.f32 %v1692, %v1768
    %v1819 = vadd.f32 %v1693, %v1809
    %v1820 = vadd.f32 %v1694, %v1811
    %v1821 = vmul.f32 %v1813, 0.5
    %v1822 = vmul.f32 %v1817, 0.5
    %v1823 = vtanh.pop %v1821
    %v1824 = vtanh.pop %v1822
    %v1825 = vadd.f32 %v1823, 1.0
    %v1826 = vadd.f32 %v1824, 1.0
    %v1827 = vmul.f32 %v1825, 0.5
    %v1828 = vmul.f32 %v1826, 0.5
    %v1829 = vmul.f32 %v1814, 0.5
    %v1830 = vmul.f32 %v1818, 0.5
    %v1831 = vtanh.pop %v1829
    %v1832 = vtanh.pop %v1830
    %v1833 = vadd.f32 %v1831, 1.0
    %v1834 = vadd.f32 %v1832, 1.0
    %v1835 = vmul.f32 %v1833, 0.5
    %v1836 = vmul.f32 %v1834, 0.5
    %v1837 = vtanh.pop %v1815
    %v1838 = vtanh.pop %v1819
    %v1839 = vmul.f32 %v1816, 0.5
    %v1840 = vmul.f32 %v1820, 0.5
    %v1841 = vtanh.pop %v1839
    %v1842 = vtanh.pop %v1840
    %v1843 = vadd.f32 %v1841, 1.0
    %v1844 = vadd.f32 %v1842, 1.0
    %v1845 = vmul.f32 %v1843, 0.5
    %v1846 = vmul.f32 %v1844, 0.5
    %v1847 = vmul.f32 %v1835, %v1684
    %v1848 = vmul.f32 %v1836, %v1685
    %v1849 = vmul.f32 %v1827, %v1837
    %v1850 = vmul.f32 %v1828, %v1838
    %v1851 = vadd.f32 %v1847, %v1849
    %v1852 = vadd.f32 %v1848, %v1850
    %v1853 = vtanh.pop %v1851
    %v1854 = vtanh.pop %v1852
    %v1855 = vmul.f32 %v1845, %v1853
    %v1856 = vmul.f32 %v1846, %v1854
    %v1857 = vpack.c.bf16 %v1856, %v1855
    %1858 = vst [vmem:[#allocation3] sm:$0xff] %v1857
    %1859 = vst [vmem:[#allocation4] sm:$0xff] %v1851
    %1860 = vst [vmem:[#allocation4 + $0x8] sm:$0xff] %v1852
    %v1862 = vunpack.c.l.b16 %v1857
    %v1863 = vunpack.c.h.b16 %v1857
    %v1864 = vpack.c.b16 %v1862, %v1862
    %v1865 = vpack.c.b16 %v1863, %v1863
    %s1868 = scalar_lea.vmem [#allocation11], 56
    %1869 = vst [vmem:[%s1868] sm:$0xf] %v1864
    %1870 = vst [vmem:[%s1868 + $0x4] sm:$0xf] %v1865
    // Predicated region
    $region63: #{_decode_fused.1} parent=1 // pred_check
      %p1871 = pneg %p49
    $region64: #{_decode_fused.1} parent=1 // pred_check_branch
      %1873 = sbr.rel (%p1871) target = $region66
    $region65: #{_decode_fused.1} parent=1 // pred_region
      %1874 = vst [vmem:[#allocation12] sm:$0xff] %v1855
      %1875 = vst [vmem:[#allocation12 + $0x8] sm:$0xff] %v1856
      %1876 = vst [vmem:[#allocation14] sm:$0xff] %v1851
      %1877 = vst [vmem:[#allocation14 + $0x8] sm:$0xff] %v1852
    $region66: #{_decode_fused.1} parent=1 // pred_fallthru
      _
    // Predicated region
    $region67: #{_decode_fused.1} parent=1 // pred_check
      _
    $region68: #{_decode_fused.1} parent=1 // pred_check_branch
      %1879 = sbr.rel (0) target = $region70
    $region69: #{_decode_fused.1} parent=1 // pred_region
      %s1881 = ssub.s32 1024, 1024
      %1882 = vsyncadd [#allocation8], %s1881
      %s1883 = sshll.u32 [#allocation11], 4
      %s1884 = int_to_ptr.vmem [resolvable:$true] %s1883
      %1889 = dma.vmem_to_hbm [thread:$0]  %s1884, 1024, %s4, [#allocation8], 64, 64, 4
    $region70: #{_decode_fused.1} parent=1 // pred_fallthru
      _
    // Predicated region
    $region71: #{_decode_fused.1} parent=1 // pred_check
      _
    $region72: #{_decode_fused.1} parent=1 // pred_check_branch
      %1891 = sbr.rel (0) target = $region74
    $region73: #{_decode_fused.1} parent=1 // pred_region
      %s1893 = ssub.s32 256, 256
      %1894 = vsyncadd [#allocation13], %s1893
      %s1895 = sshll.u32 [#allocation12], 4
      %s1896 = int_to_ptr.vmem [resolvable:$true] %s1895
      %1901 = dma.vmem_to_hbm [thread:$0]  %s1896, 256, %s5, [#allocation13], 128, 128, 8
    $region74: #{_decode_fused.1} parent=1 // pred_fallthru
      _
    // Predicated region
    $region75: #{_decode_fused.1} parent=1 // pred_check
      _
    $region76: #{_decode_fused.1} parent=1 // pred_check_branch
      %1903 = sbr.rel (0) target = $region78
    $region77: #{_decode_fused.1} parent=1 // pred_region
      %s1905 = ssub.s32 256, 256
      %1906 = vsyncadd [#allocation13], %s1905
      %s1907 = sshll.u32 [#allocation14], 4
      %s1908 = int_to_ptr.vmem [resolvable:$true] %s1907
      %1913 = dma.vmem_to_hbm [thread:$0]  %s1908, 256, %s6, [#allocation13], 128, 128, 8
    $region78: #{_decode_fused.1} parent=1 // pred_fallthru
      _
    // Predicated region
    $region79: #{_decode_fused.1} parent=1 // pred_check
      _
    $region80: #{_decode_fused.1} parent=1 // pred_check_branch
      %1915 = sbr.rel (0) target = $region82
    $region81: #{_decode_fused.1} parent=1 // pred_region
      %1916 = dma.done [#allocation8], 1024
    $region82: #{_decode_fused.1} parent=1 // pred_fallthru
      _
    // Predicated region
    $region83: #{_decode_fused.1} parent=1 // pred_check
      _
    $region84: #{_decode_fused.1} parent=1 // pred_check_branch
      %1918 = sbr.rel (0) target = $region86
    $region85: #{_decode_fused.1} parent=1 // pred_region
      %1919 = dma.done [#allocation13], 256
    $region86: #{_decode_fused.1} parent=1 // pred_fallthru
      _
    // Predicated region
    $region87: #{_decode_fused.1} parent=1 // pred_check
      _
    $region88: #{_decode_fused.1} parent=1 // pred_check_branch
      %1921 = sbr.rel (0) target = $region90
    $region89: #{_decode_fused.1} parent=1 // pred_region
      %1922 = dma.done [#allocation13], 256
    $region90: #{_decode_fused.1} parent=1 // pred_fallthru
      _
    %1923 = vsyncpa [#allocation7], 1
    %1924 = vsyncpa [#allocation10], 1
    %1925 = vsyncpa [#allocation8], 1
    %1926 = vsyncpa [#allocation13], 1
  %1927 = vsyncmov [#allocation5]
  %s1928 = vpop.sfrf %1927
  %p1929 = scmp.eq.s32.totalorder %s1928, 0
  %p1930 = pneg %p1929
  %1932 = shalt.err (%p1930)

</llo_original>
